<compile_context>
chip_gen: v7x
topology: tpu7x:2x2x1
jax: 0.10.0
libtpu: 0.0.40
codegen_flags: <defaults>
</compile_context>

<pallas_src>
import functools
import numpy as np

import jax
import jax.numpy as jnp
from jax import lax
from jax.experimental import pallas as pl
from jax.experimental.pallas import tpu as pltpu


def encoder_layer_kernel(x_ref, bias_ref,
                         w_in_ref, b_in_ref, w_out_ref, b_out_ref,
                         g1_ref, be1_ref,
                         w1_ref, bf1_ref, w2_ref, bf2_ref,
                         g2_ref, be2_ref,
                         o_ref, *, nhead, eps):
    """One grid step = one tile of `bt` batch elements.

    x block is (bt, S, E) bf16.  Dense matmuls (QKV, out-proj, FFN) run on the
    flattened (bt*S, E) rows (MXU M-dim filled); attention loops over the bt
    batch elements with head-batched rank-3 einsums.  Softmax / LayerNorm /
    residual math stays in f32.
    """
    f32 = jnp.float32
    bf16 = jnp.bfloat16
    bt, S, E = x_ref.shape
    hd = E // nhead
    M = bt * S

    xb = x_ref[...].reshape(M, E)                        # bf16 rows, (b, s) order
    xf = xb.astype(f32)                                  # residual path in f32

    # ---- fused QKV projection (q pre-scaled in wrapper): bf16 MXU, f32 acc --
    qkv = jnp.dot(xb, w_in_ref[...],
                  preferred_element_type=f32) + b_in_ref[...]         # (M, 3E)
    qkv_bf = qkv.astype(bf16)

    # ---- head split -> (H, M, hd), done ONCE per grid step ------------------
    # (lane-dim slices + leading-axis stack; proven lowering path for hd < 128.)
    q_h = jnp.stack([qkv_bf[:, h * hd:(h + 1) * hd] for h in range(nhead)], 0)
    k_h = jnp.stack([qkv_bf[:, E + h * hd:E + (h + 1) * hd] for h in range(nhead)], 0)
    v_h = jnp.stack([qkv_bf[:, 2 * E + h * hd:2 * E + (h + 1) * hd] for h in range(nhead)], 0)

    bias = bias_ref[...].astype(f32)                     # (H, S, S), shared per b

    # ---- attention per batch element (static unrolled loop, bt is small) ----
    # TODO(synk): for long sequences, tile the KV axis (flash-style online
    # softmax) instead of materializing the full (H, S, S) score block.
    attn_parts = []
    for b in range(bt):
        r0 = b * S
        qb = q_h[:, r0:r0 + S, :]
        kb = k_h[:, r0:r0 + S, :]
        vb = v_h[:, r0:r0 + S, :]
        s = jnp.einsum('hqd,hkd->hqk', qb, kb,
                       preferred_element_type=f32)       # (H, S, S)
        s = s + bias
        s = s - jnp.max(s, axis=-1, keepdims=True)
        p = jnp.exp(s)
        p = p * pl.reciprocal(jnp.sum(p, axis=-1, keepdims=True), approx=True)
        ctx = jnp.einsum('hqk,hkd->hqd', p.astype(bf16), vb,
                         preferred_element_type=f32).astype(bf16)     # (H, S, hd)

        # out-projection: stream per-head partial matmuls into one f32 (S, E)
        # accumulator -- no (H, S, E) intermediate and no post-hoc head sum.
        a = jnp.dot(ctx[0], w_out_ref[0], preferred_element_type=f32)
        for h in range(1, nhead):
            a = a + jnp.dot(ctx[h], w_out_ref[h], preferred_element_type=f32)
        attn_parts.append(a)

    attn = attn_parts[0] if bt == 1 else jnp.concatenate(attn_parts, axis=0)
    attn = attn + b_out_ref[...]                         # (M, E) f32

    # ---- residual + LayerNorm1 (post-norm, f32) ------------------------------
    y = xf + attn
    mu = jnp.mean(y, axis=-1, keepdims=True)
    yc = y - mu
    var = jnp.mean(yc * yc, axis=-1, keepdims=True)
    y = yc * lax.rsqrt(var + eps) * g1_ref[...] + be1_ref[...]

    # ---- feed-forward (bf16 MXU, f32 accumulate, relu in f32) ----------------
    hmid = jnp.dot(y.astype(bf16), w1_ref[...],
                   preferred_element_type=f32) + bf1_ref[...]
    hmid = jnp.maximum(hmid, 0.0)
    ff = jnp.dot(hmid.astype(bf16), w2_ref[...],
                 preferred_element_type=f32) + bf2_ref[...]

    # ---- residual + LayerNorm2 ------------------------------------------------
    z = y + ff
    mu2 = jnp.mean(z, axis=-1, keepdims=True)
    zc = z - mu2
    var2 = jnp.mean(zc * zc, axis=-1, keepdims=True)
    z = zc * lax.rsqrt(var2 + eps) * g2_ref[...] + be2_ref[...]

    o_ref[...] = z.reshape(bt, S, E).astype(o_ref.dtype)


def _vmem_limit_bytes(default=64 * 1024 * 1024):
    """Generation-aware VMEM budget: ~80% of capacity, capped at 110 MiB.
    v7x (64 MiB physical) -> ~51 MiB (headroom for compiler scratch);
    v5e / v6e (128 MiB)   -> ~102 MiB."""
    try:
        info = pltpu.get_tpu_info()
        cap = None
        for name in ("vmem_capacity_bytes", "vmem_bytes", "vmem_size_bytes"):
            cap = getattr(info, name, None)
            if cap:
                break
        if not cap:
            return default
        return int(min(cap * 0.8, 110 * 1024 * 1024))
    except Exception:
        return default


def _pick_batch_tile(batch, seq, target_rows=256):
    """Batch elements per grid step: aim for ~target_rows MXU rows per step."""
    bt = max(1, min(batch, -(-target_rows // max(seq, 1))))
    while batch % bt:
        bt -= 1
    return bt


def t5_encoder_layer(src_sbe, attn_mask, params, *, nhead, eps=1e-5):
    """src_sbe: (S, B, E) like PyTorch batch_first=False.  attn_mask: (S, S) float."""
    S, B, E = src_sbe.shape
    hd = E // nhead
    dff = params['w1'].shape[0]          # linear1.weight is (dff, E)
    f32, bf16 = jnp.float32, jnp.bfloat16

    # Activations cross HBM in bf16 (halves per-step DMA); f32 math in-kernel.
    x = jnp.transpose(src_sbe, (1, 0, 2)).astype(bf16)            # (B, S, E)

    # ---- relative position bias: bucket = max(i - j, 0).  Requires
    #      S <= num_buckets (same constraint as the PyTorch Embedding).
    ctx_pos = jnp.arange(S, dtype=jnp.int32)[:, None]
    mem_pos = jnp.arange(S, dtype=jnp.int32)[None, :]
    bucket = -jnp.minimum(mem_pos - ctx_pos, 0)
    values = params['rel_emb'][bucket]                            # (S, S, H)
    bias = jnp.transpose(values, (2, 0, 1))                       # (H, S, S)
    mask_bias = (attn_mask[None, :, :] + bias).astype(bf16)       # identical per b

    # ---- parameter plumbing: pre-transpose, fold 1/sqrt(hd) into q weights,
    #      cast matmul weights to bf16 (biases / LN params stay f32).
    scale = 1.0 / float(np.sqrt(hd))
    w_in_t = params['in_proj_w'].T                                # (E, 3E)
    w_in_t = w_in_t.at[:, :E].multiply(scale)
    b_in = params['in_proj_b'].at[:E].multiply(scale)[None, :]    # (1, 3E)

    w_out_r = params['out_proj_w'].T.reshape(nhead, hd, E)        # (H, hd, E)
    b_out = params['out_proj_b'][None, :]

    g1, be1 = params['ln1_g'][None, :], params['ln1_b'][None, :]
    g2, be2 = params['ln2_g'][None, :], params['ln2_b'][None, :]
    w1_t, bf1 = params['w1'].T, params['b1'][None, :]
    w2_t, bf2 = params['w2'].T, params['b2'][None, :]

    bt = _pick_batch_tile(B, S)
    vmem_limit = _vmem_limit_bytes()
    kernel = functools.partial(encoder_layer_kernel, nhead=nhead, eps=eps)

    operands = (x, mask_bias,
                w_in_t.astype(bf16), b_in.astype(f32),
                w_out_r.astype(bf16), b_out.astype(f32),
                g1.astype(f32), be1.astype(f32),
                w1_t.astype(bf16), bf1.astype(f32),
                w2_t.astype(bf16), bf2.astype(f32),
                g2.astype(f32), be2.astype(f32))

    def call(single_buffer):
        def const_spec(shape):
            nd = len(shape)

            def imap(b):
                return (0,) * nd

            if single_buffer:
                # Constant-index operands never change block -> one pipeline
                # buffer halves their VMEM footprint (matters most on v7x).
                return pl.BlockSpec(shape, imap, pipeline_mode=pl.Buffered(1))
            return pl.BlockSpec(shape, imap)

        in_specs = [
            pl.BlockSpec((bt, S, E), lambda b: (b, 0, 0)),        # x (bf16)
            const_spec((nhead, S, S)),                            # rel bias + mask (bf16)
            const_spec((E, 3 * E)),                               # in_proj W^T (bf16, q scaled)
            const_spec((1, 3 * E)),                               # in_proj b (f32)
            const_spec((nhead, hd, E)),                           # out_proj W^T, head-split (bf16)
            const_spec((1, E)),                                   # out_proj b
            const_spec((1, E)), const_spec((1, E)),               # LN1 gamma / beta
            const_spec((E, dff)), const_spec((1, dff)),           # linear1 W^T / b
            const_spec((dff, E)), const_spec((1, E)),             # linear2 W^T / b
            const_spec((1, E)), const_spec((1, E)),               # LN2 gamma / beta
        ]
        return pl.pallas_call(
            kernel,
            out_shape=jax.ShapeDtypeStruct((B, S, E), bf16),
            grid=(B // bt,),
            in_specs=in_specs,
            out_specs=pl.BlockSpec((bt, S, E), lambda b: (b, 0, 0)),
            compiler_params=pltpu.CompilerParams(
                dimension_semantics=("parallel",),
                vmem_limit_bytes=vmem_limit,
            ),
        )(*operands)

    out = None
    for single_buffer in (True, False):
        try:
            out = jax.block_until_ready(call(single_buffer))
            break
        except Exception:
            if not single_buffer:
                raise                      # real failure, surface it
            # pl.Buffered(1) not supported by this Pallas build -> default buffering.
            continue

    return jnp.transpose(out.astype(f32), (1, 0, 2))              # back to (S, B, E)


def reference_layer(src_sbe, attn_mask, params, *, nhead, eps=1e-5):
    """Pure-JAX f32 reference replicating the PyTorch forward (eval mode)."""
    S, B, E = src_sbe.shape
    hd = E // nhead
    x = jnp.transpose(src_sbe, (1, 0, 2))                         # (B, S, E)

    ctx_pos = jnp.arange(S)[:, None]
    mem_pos = jnp.arange(S)[None, :]
    bucket = -jnp.minimum(mem_pos - ctx_pos, 0)
    bias = jnp.transpose(params['rel_emb'][bucket], (2, 0, 1))    # (H, S, S)
    mask_bias = attn_mask[None] + bias

    qkv = x @ params['in_proj_w'].T + params['in_proj_b']
    q, k, v = qkv[..., :E], qkv[..., E:2 * E], qkv[..., 2 * E:]
    q = q.reshape(B, S, nhead, hd).transpose(0, 2, 1, 3) / np.sqrt(hd)
    k = k.reshape(B, S, nhead, hd).transpose(0, 2, 1, 3)
    v = v.reshape(B, S, nhead, hd).transpose(0, 2, 1, 3)
    s = jnp.einsum('bhqd,bhkd->bhqk', q, k) + mask_bias[None]
    p = jax.nn.softmax(s, axis=-1)
    ctx = jnp.einsum('bhqk,bhkd->bhqd', p, v).transpose(0, 2, 1, 3).reshape(B, S, E)
    attn = ctx @ params['out_proj_w'].T + params['out_proj_b']

    def ln(t, g, b):
        mu = jnp.mean(t, -1, keepdims=True)
        var = jnp.mean((t - mu) ** 2, -1, keepdims=True)
        return (t - mu) / jnp.sqrt(var + eps) * g + b

    y = ln(x + attn, params['ln1_g'], params['ln1_b'])
    ff = jnp.maximum(y @ params['w1'].T + params['b1'], 0.0) @ params['w2'].T + params['b2']
    z = ln(y + ff, params['ln2_g'], params['ln2_b'])
    return jnp.transpose(z, (1, 0, 2))


if __name__ == "__main__":
    # Small shapes consistent with the module.
    S, B, E = 8, 2, 32           # seq, batch, d_model
    nhead = 4
    dff = 64                     # dim_feedforward
    num_buckets = 16             # must be >= S (un-clipped relative-position buckets)

    key = jax.random.PRNGKey(0)
    ks = jax.random.split(key, 10)
    f32 = jnp.float32

    params = {
        'in_proj_w': 0.1 * jax.random.normal(ks[0], (3 * E, E), f32),
        'in_proj_b': 0.1 * jax.random.normal(ks[1], (3 * E,), f32),
        'out_proj_w': 0.1 * jax.random.normal(ks[2], (E, E), f32),
        'out_proj_b': 0.1 * jax.random.normal(ks[3], (E,), f32),
        'ln1_g': jnp.ones((E,), f32),
        'ln1_b': jnp.zeros((E,), f32),
        'ln2_g': jnp.ones((E,), f32),
        'ln2_b': jnp.zeros((E,), f32),
        'w1': 0.1 * jax.random.normal(ks[4], (dff, E), f32),   # linear1.weight
        'b1': 0.1 * jax.random.normal(ks[5], (dff,), f32),
        'w2': 0.1 * jax.random.normal(ks[6], (E, dff), f32),   # linear2.weight
        'b2': 0.1 * jax.random.normal(ks[7], (E,), f32),
        'rel_emb': 0.1 * jax.random.normal(ks[8], (num_buckets, nhead), f32),
    }

    src = jax.random.normal(ks[9], (S, B, E), f32)             # (seq, batch, feature)
    attn_mask = jnp.zeros((S, S), f32)   # forward requires a float src_mask (added to rel. bias)

    out = t5_encoder_layer(src, attn_mask, params, nhead=nhead)
    out = jax.block_until_ready(out)

    ref = jax.block_until_ready(reference_layer(src, attn_mask, params, nhead=nhead))
    # bf16 MXU matmuls + bf16 HBM activations vs an f32 reference -> loose tolerance.
    np.testing.assert_allclose(np.asarray(out), np.asarray(ref), rtol=4e-2, atol=4e-2)

    print("KERNEL_OK")
</pallas_src>

<mosaic_0001>
module attributes {stable_mosaic.version = 11 : i64} {
  func.func @encoder_layer_kernel(%arg0: i32, %arg1: memref<2x8x32xbf16, #tpu.memory_space<vmem>>, %arg2: memref<4x8x8xbf16, #tpu.memory_space<vmem>>, %arg3: memref<32x96xbf16, #tpu.memory_space<vmem>>, %arg4: memref<1x96xf32, #tpu.memory_space<vmem>>, %arg5: memref<4x8x32xbf16, #tpu.memory_space<vmem>>, %arg6: memref<1x32xf32, #tpu.memory_space<vmem>>, %arg7: memref<1x32xf32, #tpu.memory_space<vmem>>, %arg8: memref<1x32xf32, #tpu.memory_space<vmem>>, %arg9: memref<32x64xbf16, #tpu.memory_space<vmem>>, %arg10: memref<1x64xf32, #tpu.memory_space<vmem>>, %arg11: memref<64x32xbf16, #tpu.memory_space<vmem>>, %arg12: memref<1x32xf32, #tpu.memory_space<vmem>>, %arg13: memref<1x32xf32, #tpu.memory_space<vmem>>, %arg14: memref<1x32xf32, #tpu.memory_space<vmem>>, %arg15: memref<2x8x32xbf16, #tpu.memory_space<vmem>>) attributes {dimension_semantics = [#tpu.dimension_semantics<parallel>], iteration_bounds = array<i64: 1>, scalar_prefetch = 0 : i64, scratch_operands = 0 : i64, tpu.core_type = #tpu.core_type<tc>, window_params = [{transform_indices = @transform_0, window_bounds = array<i64: 2, 8, 32>}, {pipeline_mode = #tpu.pipeline_mode<synchronous>, transform_indices = @transform_1, window_bounds = array<i64: 4, 8, 8>}, {pipeline_mode = #tpu.pipeline_mode<synchronous>, transform_indices = @transform_2, window_bounds = array<i64: 32, 96>}, {pipeline_mode = #tpu.pipeline_mode<synchronous>, transform_indices = @transform_3, window_bounds = array<i64: 1, 96>}, {pipeline_mode = #tpu.pipeline_mode<synchronous>, transform_indices = @transform_4, window_bounds = array<i64: 4, 8, 32>}, {pipeline_mode = #tpu.pipeline_mode<synchronous>, transform_indices = @transform_5, window_bounds = array<i64: 1, 32>}, {pipeline_mode = #tpu.pipeline_mode<synchronous>, transform_indices = @transform_6, window_bounds = array<i64: 1, 32>}, {pipeline_mode = #tpu.pipeline_mode<synchronous>, transform_indices = @transform_7, window_bounds = array<i64: 1, 32>}, {pipeline_mode = #tpu.pipeline_mode<synchronous>, transform_indices = @transform_8, window_bounds = array<i64: 32, 64>}, {pipeline_mode = #tpu.pipeline_mode<synchronous>, transform_indices = @transform_9, window_bounds = array<i64: 1, 64>}, {pipeline_mode = #tpu.pipeline_mode<synchronous>, transform_indices = @transform_10, window_bounds = array<i64: 64, 32>}, {pipeline_mode = #tpu.pipeline_mode<synchronous>, transform_indices = @transform_11, window_bounds = array<i64: 1, 32>}, {pipeline_mode = #tpu.pipeline_mode<synchronous>, transform_indices = @transform_12, window_bounds = array<i64: 1, 32>}, {pipeline_mode = #tpu.pipeline_mode<synchronous>, transform_indices = @transform_13, window_bounds = array<i64: 1, 32>}, {transform_indices = @transform_14, window_bounds = array<i64: 2, 8, 32>}]} {
    %c0 = arith.constant 0 : index
    %c0_0 = arith.constant 0 : index
    %c0_1 = arith.constant 0 : index
    %0 = vector.load %arg1[%c0, %c0_0, %c0_1] : memref<2x8x32xbf16, #tpu.memory_space<vmem>>, vector<2x8x32xbf16>
    %1 = vector.shape_cast %0 : vector<2x8x32xbf16> to vector<16x32xbf16>
    %2 = arith.extf %1 : vector<16x32xbf16> to vector<16x32xf32>
    %c0_2 = arith.constant 0 : index
    %c0_3 = arith.constant 0 : index
    %3 = vector.load %arg3[%c0_2, %c0_3] : memref<32x96xbf16, #tpu.memory_space<vmem>>, vector<32x96xbf16>
    %cst = arith.constant dense<0.000000e+00> : vector<16x96xf32>
    %4 = tpu.matmul %1, %3, %cst {dimension_numbers = #tpu.dot_dimension_numbers<[1], [0], [0], [1], [0, 0, 1, 1], [], []>} : vector<16x32xbf16>, vector<32x96xbf16>, vector<16x96xf32> -> vector<16x96xf32>
    %c0_4 = arith.constant 0 : index
    %c0_5 = arith.constant 0 : index
    %5 = vector.load %arg4[%c0_4, %c0_5] : memref<1x96xf32, #tpu.memory_space<vmem>>, vector<1x96xf32>
    %6 = vector.broadcast %5 : vector<1x96xf32> to vector<16x96xf32>
    %7 = arith.addf %4, %6 : vector<16x96xf32>
    %8 = arith.truncf %7 : vector<16x96xf32> to vector<16x96xbf16>
    %9 = vector.extract_strided_slice %8 {offsets = [0, 0], sizes = [16, 8], strides = [1, 1]} : vector<16x96xbf16> to vector<16x8xbf16>
    %10 = vector.extract_strided_slice %8 {offsets = [0, 8], sizes = [16, 8], strides = [1, 1]} : vector<16x96xbf16> to vector<16x8xbf16>
    %11 = vector.extract_strided_slice %8 {offsets = [0, 16], sizes = [16, 8], strides = [1, 1]} : vector<16x96xbf16> to vector<16x8xbf16>
    %12 = vector.extract_strided_slice %8 {offsets = [0, 24], sizes = [16, 8], strides = [1, 1]} : vector<16x96xbf16> to vector<16x8xbf16>
    %13 = vector.shape_cast %9 : vector<16x8xbf16> to vector<1x16x8xbf16>
    %14 = vector.shape_cast %10 : vector<16x8xbf16> to vector<1x16x8xbf16>
    %15 = vector.shape_cast %11 : vector<16x8xbf16> to vector<1x16x8xbf16>
    %16 = vector.shape_cast %12 : vector<16x8xbf16> to vector<1x16x8xbf16>
    %17 = tpu.concatenate %13, %14, %15, %16 in 0 : vector<1x16x8xbf16>, vector<1x16x8xbf16>, vector<1x16x8xbf16>, vector<1x16x8xbf16> -> vector<4x16x8xbf16>
    %18 = vector.extract_strided_slice %8 {offsets = [0, 32], sizes = [16, 8], strides = [1, 1]} : vector<16x96xbf16> to vector<16x8xbf16>
    %19 = vector.extract_strided_slice %8 {offsets = [0, 40], sizes = [16, 8], strides = [1, 1]} : vector<16x96xbf16> to vector<16x8xbf16>
    %20 = vector.extract_strided_slice %8 {offsets = [0, 48], sizes = [16, 8], strides = [1, 1]} : vector<16x96xbf16> to vector<16x8xbf16>
    %21 = vector.extract_strided_slice %8 {offsets = [0, 56], sizes = [16, 8], strides = [1, 1]} : vector<16x96xbf16> to vector<16x8xbf16>
    %22 = vector.shape_cast %18 : vector<16x8xbf16> to vector<1x16x8xbf16>
    %23 = vector.shape_cast %19 : vector<16x8xbf16> to vector<1x16x8xbf16>
    %24 = vector.shape_cast %20 : vector<16x8xbf16> to vector<1x16x8xbf16>
    %25 = vector.shape_cast %21 : vector<16x8xbf16> to vector<1x16x8xbf16>
    %26 = tpu.concatenate %22, %23, %24, %25 in 0 : vector<1x16x8xbf16>, vector<1x16x8xbf16>, vector<1x16x8xbf16>, vector<1x16x8xbf16> -> vector<4x16x8xbf16>
    %27 = vector.extract_strided_slice %8 {offsets = [0, 64], sizes = [16, 8], strides = [1, 1]} : vector<16x96xbf16> to vector<16x8xbf16>
    %28 = vector.extract_strided_slice %8 {offsets = [0, 72], sizes = [16, 8], strides = [1, 1]} : vector<16x96xbf16> to vector<16x8xbf16>
    %29 = vector.extract_strided_slice %8 {offsets = [0, 80], sizes = [16, 8], strides = [1, 1]} : vector<16x96xbf16> to vector<16x8xbf16>
    %30 = vector.extract_strided_slice %8 {offsets = [0, 88], sizes = [16, 8], strides = [1, 1]} : vector<16x96xbf16> to vector<16x8xbf16>
    %31 = vector.shape_cast %27 : vector<16x8xbf16> to vector<1x16x8xbf16>
    %32 = vector.shape_cast %28 : vector<16x8xbf16> to vector<1x16x8xbf16>
    %33 = vector.shape_cast %29 : vector<16x8xbf16> to vector<1x16x8xbf16>
    %34 = vector.shape_cast %30 : vector<16x8xbf16> to vector<1x16x8xbf16>
    %35 = tpu.concatenate %31, %32, %33, %34 in 0 : vector<1x16x8xbf16>, vector<1x16x8xbf16>, vector<1x16x8xbf16>, vector<1x16x8xbf16> -> vector<4x16x8xbf16>
    %c0_6 = arith.constant 0 : index
    %c0_7 = arith.constant 0 : index
    %c0_8 = arith.constant 0 : index
    %36 = vector.load %arg2[%c0_6, %c0_7, %c0_8] : memref<4x8x8xbf16, #tpu.memory_space<vmem>>, vector<4x8x8xbf16>
    %37 = arith.extf %36 : vector<4x8x8xbf16> to vector<4x8x8xf32>
    %38 = vector.extract_strided_slice %17 {offsets = [0, 0, 0], sizes = [4, 8, 8], strides = [1, 1, 1]} : vector<4x16x8xbf16> to vector<4x8x8xbf16>
    %39 = vector.extract_strided_slice %26 {offsets = [0, 0, 0], sizes = [4, 8, 8], strides = [1, 1, 1]} : vector<4x16x8xbf16> to vector<4x8x8xbf16>
    %40 = vector.extract_strided_slice %35 {offsets = [0, 0, 0], sizes = [4, 8, 8], strides = [1, 1, 1]} : vector<4x16x8xbf16> to vector<4x8x8xbf16>
    "tpu.trace_start"() <{level = 10 : i32, message = "hqd,hkd->hqk"}> : () -> ()
    %cst_9 = arith.constant dense<0.000000e+00> : vector<4x8x8xf32>
    %41 = tpu.matmul %38, %39, %cst_9 {dimension_numbers = #tpu.dot_dimension_numbers<[2], [2], [1], [1], [0, 0, 0, 1, 1, 1], [0], [0]>} : vector<4x8x8xbf16>, vector<4x8x8xbf16>, vector<4x8x8xf32> -> vector<4x8x8xf32>
    "tpu.trace_stop"() : () -> ()
    %42 = arith.addf %41, %37 : vector<4x8x8xf32>
    %cst_10 = arith.constant dense<0xFF800000> : vector<4x8xf32>
    %43 = vector.multi_reduction <maximumf>, %42, %cst_10 [2] : vector<4x8x8xf32> to vector<4x8xf32>
    %44 = vector.shape_cast %43 : vector<4x8xf32> to vector<4x8x1xf32>
    %45 = vector.broadcast %44 : vector<4x8x1xf32> to vector<4x8x8xf32>
    %46 = arith.subf %42, %45 : vector<4x8x8xf32>
    %47 = math.exp %46 : vector<4x8x8xf32>
    %cst_11 = arith.constant dense<0.000000e+00> : vector<4x8xf32>
    %48 = vector.multi_reduction <add>, %47, %cst_11 [2] : vector<4x8x8xf32> to vector<4x8xf32>
    %49 = vector.shape_cast %48 : vector<4x8xf32> to vector<4x8x1xf32>
    %50 = tpu.reciprocal %49 {approx = true} : vector<4x8x1xf32> -> vector<4x8x1xf32>
    %51 = vector.broadcast %50 : vector<4x8x1xf32> to vector<4x8x8xf32>
    %52 = arith.mulf %47, %51 : vector<4x8x8xf32>
    %53 = arith.truncf %52 : vector<4x8x8xf32> to vector<4x8x8xbf16>
    "tpu.trace_start"() <{level = 10 : i32, message = "hqk,hkd->hqd"}> : () -> ()
    %cst_12 = arith.constant dense<0.000000e+00> : vector<4x8x8xf32>
    %54 = tpu.matmul %53, %40, %cst_12 {dimension_numbers = #tpu.dot_dimension_numbers<[2], [1], [1], [2], [0, 0, 0, 1, 1, 2], [0], [0]>} : vector<4x8x8xbf16>, vector<4x8x8xbf16>, vector<4x8x8xf32> -> vector<4x8x8xf32>
    "tpu.trace_stop"() : () -> ()
    %55 = arith.truncf %54 : vector<4x8x8xf32> to vector<4x8x8xbf16>
    %56 = vector.extract_strided_slice %55 {offsets = [0, 0, 0], sizes = [1, 8, 8], strides = [1, 1, 1]} : vector<4x8x8xbf16> to vector<1x8x8xbf16>
    %57 = vector.shape_cast %56 : vector<1x8x8xbf16> to vector<8x8xbf16>
    %c0_13 = arith.constant 0 : index
    %c0_14 = arith.constant 0 : index
    %c0_15 = arith.constant 0 : index
    %58 = vector.load %arg5[%c0_13, %c0_14, %c0_15] : memref<4x8x32xbf16, #tpu.memory_space<vmem>>, vector<1x8x32xbf16>
    %59 = vector.shape_cast %58 : vector<1x8x32xbf16> to vector<8x32xbf16>
    %cst_16 = arith.constant dense<0.000000e+00> : vector<8x32xf32>
    %60 = tpu.matmul %57, %59, %cst_16 {dimension_numbers = #tpu.dot_dimension_numbers<[1], [0], [0], [1], [0, 0, 1, 1], [], []>} : vector<8x8xbf16>, vector<8x32xbf16>, vector<8x32xf32> -> vector<8x32xf32>
    %61 = vector.extract_strided_slice %55 {offsets = [1, 0, 0], sizes = [1, 8, 8], strides = [1, 1, 1]} : vector<4x8x8xbf16> to vector<1x8x8xbf16>
    %62 = vector.shape_cast %61 : vector<1x8x8xbf16> to vector<8x8xbf16>
    %c1 = arith.constant 1 : index
    %c0_17 = arith.constant 0 : index
    %c0_18 = arith.constant 0 : index
    %63 = vector.load %arg5[%c1, %c0_17, %c0_18] : memref<4x8x32xbf16, #tpu.memory_space<vmem>>, vector<1x8x32xbf16>
    %64 = vector.shape_cast %63 : vector<1x8x32xbf16> to vector<8x32xbf16>
    %cst_19 = arith.constant dense<0.000000e+00> : vector<8x32xf32>
    %65 = tpu.matmul %62, %64, %cst_19 {dimension_numbers = #tpu.dot_dimension_numbers<[1], [0], [0], [1], [0, 0, 1, 1], [], []>} : vector<8x8xbf16>, vector<8x32xbf16>, vector<8x32xf32> -> vector<8x32xf32>
    %66 = arith.addf %60, %65 : vector<8x32xf32>
    %67 = vector.extract_strided_slice %55 {offsets = [2, 0, 0], sizes = [1, 8, 8], strides = [1, 1, 1]} : vector<4x8x8xbf16> to vector<1x8x8xbf16>
    %68 = vector.shape_cast %67 : vector<1x8x8xbf16> to vector<8x8xbf16>
    %c2 = arith.constant 2 : index
    %c0_20 = arith.constant 0 : index
    %c0_21 = arith.constant 0 : index
    %69 = vector.load %arg5[%c2, %c0_20, %c0_21] : memref<4x8x32xbf16, #tpu.memory_space<vmem>>, vector<1x8x32xbf16>
    %70 = vector.shape_cast %69 : vector<1x8x32xbf16> to vector<8x32xbf16>
    %cst_22 = arith.constant dense<0.000000e+00> : vector<8x32xf32>
    %71 = tpu.matmul %68, %70, %cst_22 {dimension_numbers = #tpu.dot_dimension_numbers<[1], [0], [0], [1], [0, 0, 1, 1], [], []>} : vector<8x8xbf16>, vector<8x32xbf16>, vector<8x32xf32> -> vector<8x32xf32>
    %72 = arith.addf %66, %71 : vector<8x32xf32>
    %73 = vector.extract_strided_slice %55 {offsets = [3, 0, 0], sizes = [1, 8, 8], strides = [1, 1, 1]} : vector<4x8x8xbf16> to vector<1x8x8xbf16>
    %74 = vector.shape_cast %73 : vector<1x8x8xbf16> to vector<8x8xbf16>
    %c3 = arith.constant 3 : index
    %c0_23 = arith.constant 0 : index
    %c0_24 = arith.constant 0 : index
    %75 = vector.load %arg5[%c3, %c0_23, %c0_24] : memref<4x8x32xbf16, #tpu.memory_space<vmem>>, vector<1x8x32xbf16>
    %76 = vector.shape_cast %75 : vector<1x8x32xbf16> to vector<8x32xbf16>
    %cst_25 = arith.constant dense<0.000000e+00> : vector<8x32xf32>
    %77 = tpu.matmul %74, %76, %cst_25 {dimension_numbers = #tpu.dot_dimension_numbers<[1], [0], [0], [1], [0, 0, 1, 1], [], []>} : vector<8x8xbf16>, vector<8x32xbf16>, vector<8x32xf32> -> vector<8x32xf32>
    %78 = arith.addf %72, %77 : vector<8x32xf32>
    %79 = vector.extract_strided_slice %17 {offsets = [0, 8, 0], sizes = [4, 8, 8], strides = [1, 1, 1]} : vector<4x16x8xbf16> to vector<4x8x8xbf16>
    %80 = vector.extract_strided_slice %26 {offsets = [0, 8, 0], sizes = [4, 8, 8], strides = [1, 1, 1]} : vector<4x16x8xbf16> to vector<4x8x8xbf16>
    %81 = vector.extract_strided_slice %35 {offsets = [0, 8, 0], sizes = [4, 8, 8], strides = [1, 1, 1]} : vector<4x16x8xbf16> to vector<4x8x8xbf16>
    "tpu.trace_start"() <{level = 10 : i32, message = "hqd,hkd->hqk"}> : () -> ()
    %cst_26 = arith.constant dense<0.000000e+00> : vector<4x8x8xf32>
    %82 = tpu.matmul %79, %80, %cst_26 {dimension_numbers = #tpu.dot_dimension_numbers<[2], [2], [1], [1], [0, 0, 0, 1, 1, 1], [0], [0]>} : vector<4x8x8xbf16>, vector<4x8x8xbf16>, vector<4x8x8xf32> -> vector<4x8x8xf32>
    "tpu.trace_stop"() : () -> ()
    %83 = arith.addf %82, %37 : vector<4x8x8xf32>
    %cst_27 = arith.constant dense<0xFF800000> : vector<4x8xf32>
    %84 = vector.multi_reduction <maximumf>, %83, %cst_27 [2] : vector<4x8x8xf32> to vector<4x8xf32>
    %85 = vector.shape_cast %84 : vector<4x8xf32> to vector<4x8x1xf32>
    %86 = vector.broadcast %85 : vector<4x8x1xf32> to vector<4x8x8xf32>
    %87 = arith.subf %83, %86 : vector<4x8x8xf32>
    %88 = math.exp %87 : vector<4x8x8xf32>
    %cst_28 = arith.constant dense<0.000000e+00> : vector<4x8xf32>
    %89 = vector.multi_reduction <add>, %88, %cst_28 [2] : vector<4x8x8xf32> to vector<4x8xf32>
    %90 = vector.shape_cast %89 : vector<4x8xf32> to vector<4x8x1xf32>
    %91 = tpu.reciprocal %90 {approx = true} : vector<4x8x1xf32> -> vector<4x8x1xf32>
    %92 = vector.broadcast %91 : vector<4x8x1xf32> to vector<4x8x8xf32>
    %93 = arith.mulf %88, %92 : vector<4x8x8xf32>
    %94 = arith.truncf %93 : vector<4x8x8xf32> to vector<4x8x8xbf16>
    "tpu.trace_start"() <{level = 10 : i32, message = "hqk,hkd->hqd"}> : () -> ()
    %cst_29 = arith.constant dense<0.000000e+00> : vector<4x8x8xf32>
    %95 = tpu.matmul %94, %81, %cst_29 {dimension_numbers = #tpu.dot_dimension_numbers<[2], [1], [1], [2], [0, 0, 0, 1, 1, 2], [0], [0]>} : vector<4x8x8xbf16>, vector<4x8x8xbf16>, vector<4x8x8xf32> -> vector<4x8x8xf32>
    "tpu.trace_stop"() : () -> ()
    %96 = arith.truncf %95 : vector<4x8x8xf32> to vector<4x8x8xbf16>
    %97 = vector.extract_strided_slice %96 {offsets = [0, 0, 0], sizes = [1, 8, 8], strides = [1, 1, 1]} : vector<4x8x8xbf16> to vector<1x8x8xbf16>
    %98 = vector.shape_cast %97 : vector<1x8x8xbf16> to vector<8x8xbf16>
    %c0_30 = arith.constant 0 : index
    %c0_31 = arith.constant 0 : index
    %c0_32 = arith.constant 0 : index
    %99 = vector.load %arg5[%c0_30, %c0_31, %c0_32] : memref<4x8x32xbf16, #tpu.memory_space<vmem>>, vector<1x8x32xbf16>
    %100 = vector.shape_cast %99 : vector<1x8x32xbf16> to vector<8x32xbf16>
    %cst_33 = arith.constant dense<0.000000e+00> : vector<8x32xf32>
    %101 = tpu.matmul %98, %100, %cst_33 {dimension_numbers = #tpu.dot_dimension_numbers<[1], [0], [0], [1], [0, 0, 1, 1], [], []>} : vector<8x8xbf16>, vector<8x32xbf16>, vector<8x32xf32> -> vector<8x32xf32>
    %102 = vector.extract_strided_slice %96 {offsets = [1, 0, 0], sizes = [1, 8, 8], strides = [1, 1, 1]} : vector<4x8x8xbf16> to vector<1x8x8xbf16>
    %103 = vector.shape_cast %102 : vector<1x8x8xbf16> to vector<8x8xbf16>
    %c1_34 = arith.constant 1 : index
    %c0_35 = arith.constant 0 : index
    %c0_36 = arith.constant 0 : index
    %104 = vector.load %arg5[%c1_34, %c0_35, %c0_36] : memref<4x8x32xbf16, #tpu.memory_space<vmem>>, vector<1x8x32xbf16>
    %105 = vector.shape_cast %104 : vector<1x8x32xbf16> to vector<8x32xbf16>
    %cst_37 = arith.constant dense<0.000000e+00> : vector<8x32xf32>
    %106 = tpu.matmul %103, %105, %cst_37 {dimension_numbers = #tpu.dot_dimension_numbers<[1], [0], [0], [1], [0, 0, 1, 1], [], []>} : vector<8x8xbf16>, vector<8x32xbf16>, vector<8x32xf32> -> vector<8x32xf32>
    %107 = arith.addf %101, %106 : vector<8x32xf32>
    %108 = vector.extract_strided_slice %96 {offsets = [2, 0, 0], sizes = [1, 8, 8], strides = [1, 1, 1]} : vector<4x8x8xbf16> to vector<1x8x8xbf16>
    %109 = vector.shape_cast %108 : vector<1x8x8xbf16> to vector<8x8xbf16>
    %c2_38 = arith.constant 2 : index
    %c0_39 = arith.constant 0 : index
    %c0_40 = arith.constant 0 : index
    %110 = vector.load %arg5[%c2_38, %c0_39, %c0_40] : memref<4x8x32xbf16, #tpu.memory_space<vmem>>, vector<1x8x32xbf16>
    %111 = vector.shape_cast %110 : vector<1x8x32xbf16> to vector<8x32xbf16>
    %cst_41 = arith.constant dense<0.000000e+00> : vector<8x32xf32>
    %112 = tpu.matmul %109, %111, %cst_41 {dimension_numbers = #tpu.dot_dimension_numbers<[1], [0], [0], [1], [0, 0, 1, 1], [], []>} : vector<8x8xbf16>, vector<8x32xbf16>, vector<8x32xf32> -> vector<8x32xf32>
    %113 = arith.addf %107, %112 : vector<8x32xf32>
    %114 = vector.extract_strided_slice %96 {offsets = [3, 0, 0], sizes = [1, 8, 8], strides = [1, 1, 1]} : vector<4x8x8xbf16> to vector<1x8x8xbf16>
    %115 = vector.shape_cast %114 : vector<1x8x8xbf16> to vector<8x8xbf16>
    %c3_42 = arith.constant 3 : index
    %c0_43 = arith.constant 0 : index
    %c0_44 = arith.constant 0 : index
    %116 = vector.load %arg5[%c3_42, %c0_43, %c0_44] : memref<4x8x32xbf16, #tpu.memory_space<vmem>>, vector<1x8x32xbf16>
    %117 = vector.shape_cast %116 : vector<1x8x32xbf16> to vector<8x32xbf16>
    %cst_45 = arith.constant dense<0.000000e+00> : vector<8x32xf32>
    %118 = tpu.matmul %115, %117, %cst_45 {dimension_numbers = #tpu.dot_dimension_numbers<[1], [0], [0], [1], [0, 0, 1, 1], [], []>} : vector<8x8xbf16>, vector<8x32xbf16>, vector<8x32xf32> -> vector<8x32xf32>
    %119 = arith.addf %113, %118 : vector<8x32xf32>
    %120 = tpu.concatenate %78, %119 in 0 : vector<8x32xf32>, vector<8x32xf32> -> vector<16x32xf32>
    %c0_46 = arith.constant 0 : index
    %c0_47 = arith.constant 0 : index
    %121 = vector.load %arg6[%c0_46, %c0_47] : memref<1x32xf32, #tpu.memory_space<vmem>>, vector<1x32xf32>
    %122 = vector.broadcast %121 : vector<1x32xf32> to vector<16x32xf32>
    %123 = arith.addf %120, %122 : vector<16x32xf32>
    %124 = arith.addf %2, %123 : vector<16x32xf32>
    %cst_48 = arith.constant dense<0.000000e+00> : vector<16xf32>
    %125 = vector.multi_reduction <add>, %124, %cst_48 [1] : vector<16x32xf32> to vector<16xf32>
    %126 = vector.shape_cast %125 : vector<16xf32> to vector<16x1xf32>
    %cst_49 = arith.constant 3.200000e+01 : f32
    %127 = vector.broadcast %cst_49 : f32 to vector<16x1xf32>
    %128 = arith.divf %126, %127 : vector<16x1xf32>
    %129 = vector.broadcast %128 : vector<16x1xf32> to vector<16x32xf32>
    %130 = arith.subf %124, %129 : vector<16x32xf32>
    %131 = arith.mulf %130, %130 : vector<16x32xf32>
    %cst_50 = arith.constant dense<0.000000e+00> : vector<16xf32>
    %132 = vector.multi_reduction <add>, %131, %cst_50 [1] : vector<16x32xf32> to vector<16xf32>
    %133 = vector.shape_cast %132 : vector<16xf32> to vector<16x1xf32>
    %cst_51 = arith.constant 3.200000e+01 : f32
    %134 = vector.broadcast %cst_51 : f32 to vector<16x1xf32>
    %135 = arith.divf %133, %134 : vector<16x1xf32>
    %cst_52 = arith.constant 9.99999974E-6 : f32
    %136 = vector.broadcast %cst_52 : f32 to vector<16x1xf32>
    %137 = arith.addf %135, %136 : vector<16x1xf32>
    %138 = math.rsqrt %137 : vector<16x1xf32>
    %139 = vector.broadcast %138 : vector<16x1xf32> to vector<16x32xf32>
    %140 = arith.mulf %130, %139 : vector<16x32xf32>
    %c0_53 = arith.constant 0 : index
    %c0_54 = arith.constant 0 : index
    %141 = vector.load %arg7[%c0_53, %c0_54] : memref<1x32xf32, #tpu.memory_space<vmem>>, vector<1x32xf32>
    %142 = vector.broadcast %141 : vector<1x32xf32> to vector<16x32xf32>
    %143 = arith.mulf %140, %142 : vector<16x32xf32>
    %c0_55 = arith.constant 0 : index
    %c0_56 = arith.constant 0 : index
    %144 = vector.load %arg8[%c0_55, %c0_56] : memref<1x32xf32, #tpu.memory_space<vmem>>, vector<1x32xf32>
    %145 = vector.broadcast %144 : vector<1x32xf32> to vector<16x32xf32>
    %146 = arith.addf %143, %145 : vector<16x32xf32>
    %147 = arith.truncf %146 : vector<16x32xf32> to vector<16x32xbf16>
    %c0_57 = arith.constant 0 : index
    %c0_58 = arith.constant 0 : index
    %148 = vector.load %arg9[%c0_57, %c0_58] : memref<32x64xbf16, #tpu.memory_space<vmem>>, vector<32x64xbf16>
    %cst_59 = arith.constant dense<0.000000e+00> : vector<16x64xf32>
    %149 = tpu.matmul %147, %148, %cst_59 {dimension_numbers = #tpu.dot_dimension_numbers<[1], [0], [0], [1], [0, 0, 1, 1], [], []>} : vector<16x32xbf16>, vector<32x64xbf16>, vector<16x64xf32> -> vector<16x64xf32>
    %c0_60 = arith.constant 0 : index
    %c0_61 = arith.constant 0 : index
    %150 = vector.load %arg10[%c0_60, %c0_61] : memref<1x64xf32, #tpu.memory_space<vmem>>, vector<1x64xf32>
    %151 = vector.broadcast %150 : vector<1x64xf32> to vector<16x64xf32>
    %152 = arith.addf %149, %151 : vector<16x64xf32>
    %cst_62 = arith.constant 0.000000e+00 : f32
    %153 = vector.broadcast %cst_62 : f32 to vector<16x64xf32>
    %154 = arith.maximumf %152, %153 : vector<16x64xf32>
    %155 = arith.truncf %154 : vector<16x64xf32> to vector<16x64xbf16>
    %c0_63 = arith.constant 0 : index
    %c0_64 = arith.constant 0 : index
    %156 = vector.load %arg11[%c0_63, %c0_64] : memref<64x32xbf16, #tpu.memory_space<vmem>>, vector<64x32xbf16>
    %cst_65 = arith.constant dense<0.000000e+00> : vector<16x32xf32>
    %157 = tpu.matmul %155, %156, %cst_65 {dimension_numbers = #tpu.dot_dimension_numbers<[1], [0], [0], [1], [0, 0, 1, 1], [], []>} : vector<16x64xbf16>, vector<64x32xbf16>, vector<16x32xf32> -> vector<16x32xf32>
    %c0_66 = arith.constant 0 : index
    %c0_67 = arith.constant 0 : index
    %158 = vector.load %arg12[%c0_66, %c0_67] : memref<1x32xf32, #tpu.memory_space<vmem>>, vector<1x32xf32>
    %159 = vector.broadcast %158 : vector<1x32xf32> to vector<16x32xf32>
    %160 = arith.addf %157, %159 : vector<16x32xf32>
    %161 = arith.addf %146, %160 : vector<16x32xf32>
    %cst_68 = arith.constant dense<0.000000e+00> : vector<16xf32>
    %162 = vector.multi_reduction <add>, %161, %cst_68 [1] : vector<16x32xf32> to vector<16xf32>
    %163 = vector.shape_cast %162 : vector<16xf32> to vector<16x1xf32>
    %cst_69 = arith.constant 3.200000e+01 : f32
    %164 = vector.broadcast %cst_69 : f32 to vector<16x1xf32>
    %165 = arith.divf %163, %164 : vector<16x1xf32>
    %166 = vector.broadcast %165 : vector<16x1xf32> to vector<16x32xf32>
    %167 = arith.subf %161, %166 : vector<16x32xf32>
    %168 = arith.mulf %167, %167 : vector<16x32xf32>
    %cst_70 = arith.constant dense<0.000000e+00> : vector<16xf32>
    %169 = vector.multi_reduction <add>, %168, %cst_70 [1] : vector<16x32xf32> to vector<16xf32>
    %170 = vector.shape_cast %169 : vector<16xf32> to vector<16x1xf32>
    %cst_71 = arith.constant 3.200000e+01 : f32
    %171 = vector.broadcast %cst_71 : f32 to vector<16x1xf32>
    %172 = arith.divf %170, %171 : vector<16x1xf32>
    %cst_72 = arith.constant 9.99999974E-6 : f32
    %173 = vector.broadcast %cst_72 : f32 to vector<16x1xf32>
    %174 = arith.addf %172, %173 : vector<16x1xf32>
    %175 = math.rsqrt %174 : vector<16x1xf32>
    %176 = vector.broadcast %175 : vector<16x1xf32> to vector<16x32xf32>
    %177 = arith.mulf %167, %176 : vector<16x32xf32>
    %c0_73 = arith.constant 0 : index
    %c0_74 = arith.constant 0 : index
    %178 = vector.load %arg13[%c0_73, %c0_74] : memref<1x32xf32, #tpu.memory_space<vmem>>, vector<1x32xf32>
    %179 = vector.broadcast %178 : vector<1x32xf32> to vector<16x32xf32>
    %180 = arith.mulf %177, %179 : vector<16x32xf32>
    %c0_75 = arith.constant 0 : index
    %c0_76 = arith.constant 0 : index
    %181 = vector.load %arg14[%c0_75, %c0_76] : memref<1x32xf32, #tpu.memory_space<vmem>>, vector<1x32xf32>
    %182 = vector.broadcast %181 : vector<1x32xf32> to vector<16x32xf32>
    %183 = arith.addf %180, %182 : vector<16x32xf32>
    %184 = vector.shape_cast %183 : vector<16x32xf32> to vector<2x8x32xf32>
    %185 = arith.truncf %184 : vector<2x8x32xf32> to vector<2x8x32xbf16>
    %c0_77 = arith.constant 0 : index
    %c0_78 = arith.constant 0 : index
    %c0_79 = arith.constant 0 : index
    %186 = vector.load %arg15[%c0_77, %c0_78, %c0_79] : memref<2x8x32xbf16, #tpu.memory_space<vmem>>, vector<2x8x32xbf16>
    tpu.vector_store %arg15[%c0_77, %c0_78, %c0_79], %185 {strides = array<i32>} : memref<2x8x32xbf16, #tpu.memory_space<vmem>>, vector<2x8x32xbf16>,
    return
  }
  func.func @transform_0(%arg0: i32) -> (i32, i32, i32) {
    %c0_i32 = arith.constant 0 : i32
    %c0_i32_0 = arith.constant 0 : i32
    %c0_i32_1 = arith.constant 0 : i32
    return %arg0, %c0_i32, %c0_i32_0 : i32, i32, i32
  }
  func.func @transform_1(%arg0: i32) -> (i32, i32, i32) {
    %c0_i32 = arith.constant 0 : i32
    %c0_i32_0 = arith.constant 0 : i32
    %c0_i32_1 = arith.constant 0 : i32
    %c0_i32_2 = arith.constant 0 : i32
    return %c0_i32, %c0_i32_0, %c0_i32_1 : i32, i32, i32
  }
  func.func @transform_2(%arg0: i32) -> (i32, i32) {
    %c0_i32 = arith.constant 0 : i32
    %c0_i32_0 = arith.constant 0 : i32
    %c0_i32_1 = arith.constant 0 : i32
    return %c0_i32, %c0_i32_0 : i32, i32
  }
  func.func @transform_3(%arg0: i32) -> (i32, i32) {
    %c0_i32 = arith.constant 0 : i32
    %c0_i32_0 = arith.constant 0 : i32
    %c0_i32_1 = arith.constant 0 : i32
    return %c0_i32, %c0_i32_0 : i32, i32
  }
  func.func @transform_4(%arg0: i32) -> (i32, i32, i32) {
    %c0_i32 = arith.constant 0 : i32
    %c0_i32_0 = arith.constant 0 : i32
    %c0_i32_1 = arith.constant 0 : i32
    %c0_i32_2 = arith.constant 0 : i32
    return %c0_i32, %c0_i32_0, %c0_i32_1 : i32, i32, i32
  }
  func.func @transform_5(%arg0: i32) -> (i32, i32) {
    %c0_i32 = arith.constant 0 : i32
    %c0_i32_0 = arith.constant 0 : i32
    %c0_i32_1 = arith.constant 0 : i32
    return %c0_i32, %c0_i32_0 : i32, i32
  }
  func.func @transform_6(%arg0: i32) -> (i32, i32) {
    %c0_i32 = arith.constant 0 : i32
    %c0_i32_0 = arith.constant 0 : i32
    %c0_i32_1 = arith.constant 0 : i32
    return %c0_i32, %c0_i32_0 : i32, i32
  }
  func.func @transform_7(%arg0: i32) -> (i32, i32) {
    %c0_i32 = arith.constant 0 : i32
    %c0_i32_0 = arith.constant 0 : i32
    %c0_i32_1 = arith.constant 0 : i32
    return %c0_i32, %c0_i32_0 : i32, i32
  }
  func.func @transform_8(%arg0: i32) -> (i32, i32) {
    %c0_i32 = arith.constant 0 : i32
    %c0_i32_0 = arith.constant 0 : i32
    %c0_i32_1 = arith.constant 0 : i32
    return %c0_i32, %c0_i32_0 : i32, i32
  }
  func.func @transform_9(%arg0: i32) -> (i32, i32) {
    %c0_i32 = arith.constant 0 : i32
    %c0_i32_0 = arith.constant 0 : i32
    %c0_i32_1 = arith.constant 0 : i32
    return %c0_i32, %c0_i32_0 : i32, i32
  }
  func.func @transform_10(%arg0: i32) -> (i32, i32) {
    %c0_i32 = arith.constant 0 : i32
    %c0_i32_0 = arith.constant 0 : i32
    %c0_i32_1 = arith.constant 0 : i32
    return %c0_i32, %c0_i32_0 : i32, i32
  }
  func.func @transform_11(%arg0: i32) -> (i32, i32) {
    %c0_i32 = arith.constant 0 : i32
    %c0_i32_0 = arith.constant 0 : i32
    %c0_i32_1 = arith.constant 0 : i32
    return %c0_i32, %c0_i32_0 : i32, i32
  }
  func.func @transform_12(%arg0: i32) -> (i32, i32) {
    %c0_i32 = arith.constant 0 : i32
    %c0_i32_0 = arith.constant 0 : i32
    %c0_i32_1 = arith.constant 0 : i32
    return %c0_i32, %c0_i32_0 : i32, i32
  }
  func.func @transform_13(%arg0: i32) -> (i32, i32) {
    %c0_i32 = arith.constant 0 : i32
    %c0_i32_0 = arith.constant 0 : i32
    %c0_i32_1 = arith.constant 0 : i32
    return %c0_i32, %c0_i32_0 : i32, i32
  }
  func.func @transform_14(%arg0: i32) -> (i32, i32, i32) {
    %c0_i32 = arith.constant 0 : i32
    %c0_i32_0 = arith.constant 0 : i32
    %c0_i32_1 = arith.constant 0 : i32
    return %arg0, %c0_i32, %c0_i32_0 : i32, i32, i32
  }
}

module attributes {stable_mosaic.version = 11 : i64} {
  func.func @encoder_layer_kernel(%arg0: i32, %arg1: memref<2x8x32xbf16, #tpu.memory_space<vmem>>, %arg2: memref<4x8x8xbf16, #tpu.memory_space<vmem>>, %arg3: memref<32x96xbf16, #tpu.memory_space<vmem>>, %arg4: memref<1x96xf32, #tpu.memory_space<vmem>>, %arg5: memref<4x8x32xbf16, #tpu.memory_space<vmem>>, %arg6: memref<1x32xf32, #tpu.memory_space<vmem>>, %arg7: memref<1x32xf32, #tpu.memory_space<vmem>>, %arg8: memref<1x32xf32, #tpu.memory_space<vmem>>, %arg9: memref<32x64xbf16, #tpu.memory_space<vmem>>, %arg10: memref<1x64xf32, #tpu.memory_space<vmem>>, %arg11: memref<64x32xbf16, #tpu.memory_space<vmem>>, %arg12: memref<1x32xf32, #tpu.memory_space<vmem>>, %arg13: memref<1x32xf32, #tpu.memory_space<vmem>>, %arg14: memref<1x32xf32, #tpu.memory_space<vmem>>, %arg15: memref<2x8x32xbf16, #tpu.memory_space<vmem>>) attributes {dimension_semantics = [#tpu.dimension_semantics<parallel>], iteration_bounds = array<i64: 1>, scalar_prefetch = 0 : i64, scratch_operands = 0 : i64, tpu.core_type = #tpu.core_type<tc>, window_params = [{transform_indices = @transform_0, window_bounds = array<i64: 2, 8, 32>}, {pipeline_mode = #tpu.pipeline_mode<synchronous>, transform_indices = @transform_1, window_bounds = array<i64: 4, 8, 8>}, {pipeline_mode = #tpu.pipeline_mode<synchronous>, transform_indices = @transform_2, window_bounds = array<i64: 32, 96>}, {pipeline_mode = #tpu.pipeline_mode<synchronous>, transform_indices = @transform_3, window_bounds = array<i64: 1, 96>}, {pipeline_mode = #tpu.pipeline_mode<synchronous>, transform_indices = @transform_4, window_bounds = array<i64: 4, 8, 32>}, {pipeline_mode = #tpu.pipeline_mode<synchronous>, transform_indices = @transform_5, window_bounds = array<i64: 1, 32>}, {pipeline_mode = #tpu.pipeline_mode<synchronous>, transform_indices = @transform_6, window_bounds = array<i64: 1, 32>}, {pipeline_mode = #tpu.pipeline_mode<synchronous>, transform_indices = @transform_7, window_bounds = array<i64: 1, 32>}, {pipeline_mode = #tpu.pipeline_mode<synchronous>, transform_indices = @transform_8, window_bounds = array<i64: 32, 64>}, {pipeline_mode = #tpu.pipeline_mode<synchronous>, transform_indices = @transform_9, window_bounds = array<i64: 1, 64>}, {pipeline_mode = #tpu.pipeline_mode<synchronous>, transform_indices = @transform_10, window_bounds = array<i64: 64, 32>}, {pipeline_mode = #tpu.pipeline_mode<synchronous>, transform_indices = @transform_11, window_bounds = array<i64: 1, 32>}, {pipeline_mode = #tpu.pipeline_mode<synchronous>, transform_indices = @transform_12, window_bounds = array<i64: 1, 32>}, {pipeline_mode = #tpu.pipeline_mode<synchronous>, transform_indices = @transform_13, window_bounds = array<i64: 1, 32>}, {transform_indices = @transform_14, window_bounds = array<i64: 2, 8, 32>}]} {
    %c0 = arith.constant 0 : index
    %c0_0 = arith.constant 0 : index
    %c0_1 = arith.constant 0 : index
    %0 = vector.load %arg1[%c0, %c0_0, %c0_1] : memref<2x8x32xbf16, #tpu.memory_space<vmem>>, vector<2x8x32xbf16>
    %1 = vector.shape_cast %0 : vector<2x8x32xbf16> to vector<16x32xbf16>
    %2 = arith.extf %1 : vector<16x32xbf16> to vector<16x32xf32>
    %c0_2 = arith.constant 0 : index
    %c0_3 = arith.constant 0 : index
    %3 = vector.load %arg3[%c0_2, %c0_3] : memref<32x96xbf16, #tpu.memory_space<vmem>>, vector<32x96xbf16>
    %cst = arith.constant dense<0.000000e+00> : vector<16x96xf32>
    %4 = tpu.matmul %1, %3, %cst {dimension_numbers = #tpu.dot_dimension_numbers<[1], [0], [0], [1], [0, 0, 1, 1], [], []>} : vector<16x32xbf16>, vector<32x96xbf16>, vector<16x96xf32> -> vector<16x96xf32>
    %c0_4 = arith.constant 0 : index
    %c0_5 = arith.constant 0 : index
    %5 = vector.load %arg4[%c0_4, %c0_5] : memref<1x96xf32, #tpu.memory_space<vmem>>, vector<1x96xf32>
    %6 = vector.broadcast %5 : vector<1x96xf32> to vector<16x96xf32>
    %7 = arith.addf %4, %6 : vector<16x96xf32>
    %8 = arith.truncf %7 : vector<16x96xf32> to vector<16x96xbf16>
    %9 = vector.extract_strided_slice %8 {offsets = [0, 0], sizes = [16, 8], strides = [1, 1]} : vector<16x96xbf16> to vector<16x8xbf16>
    %10 = vector.extract_strided_slice %8 {offsets = [0, 8], sizes = [16, 8], strides = [1, 1]} : vector<16x96xbf16> to vector<16x8xbf16>
    %11 = vector.extract_strided_slice %8 {offsets = [0, 16], sizes = [16, 8], strides = [1, 1]} : vector<16x96xbf16> to vector<16x8xbf16>
    %12 = vector.extract_strided_slice %8 {offsets = [0, 24], sizes = [16, 8], strides = [1, 1]} : vector<16x96xbf16> to vector<16x8xbf16>
    %13 = vector.shape_cast %9 : vector<16x8xbf16> to vector<1x16x8xbf16>
    %14 = vector.shape_cast %10 : vector<16x8xbf16> to vector<1x16x8xbf16>
    %15 = vector.shape_cast %11 : vector<16x8xbf16> to vector<1x16x8xbf16>
    %16 = vector.shape_cast %12 : vector<16x8xbf16> to vector<1x16x8xbf16>
    %17 = tpu.concatenate %13, %14, %15, %16 in 0 : vector<1x16x8xbf16>, vector<1x16x8xbf16>, vector<1x16x8xbf16>, vector<1x16x8xbf16> -> vector<4x16x8xbf16>
    %18 = vector.extract_strided_slice %8 {offsets = [0, 32], sizes = [16, 8], strides = [1, 1]} : vector<16x96xbf16> to vector<16x8xbf16>
    %19 = vector.extract_strided_slice %8 {offsets = [0, 40], sizes = [16, 8], strides = [1, 1]} : vector<16x96xbf16> to vector<16x8xbf16>
    %20 = vector.extract_strided_slice %8 {offsets = [0, 48], sizes = [16, 8], strides = [1, 1]} : vector<16x96xbf16> to vector<16x8xbf16>
    %21 = vector.extract_strided_slice %8 {offsets = [0, 56], sizes = [16, 8], strides = [1, 1]} : vector<16x96xbf16> to vector<16x8xbf16>
    %22 = vector.shape_cast %18 : vector<16x8xbf16> to vector<1x16x8xbf16>
    %23 = vector.shape_cast %19 : vector<16x8xbf16> to vector<1x16x8xbf16>
    %24 = vector.shape_cast %20 : vector<16x8xbf16> to vector<1x16x8xbf16>
    %25 = vector.shape_cast %21 : vector<16x8xbf16> to vector<1x16x8xbf16>
    %26 = tpu.concatenate %22, %23, %24, %25 in 0 : vector<1x16x8xbf16>, vector<1x16x8xbf16>, vector<1x16x8xbf16>, vector<1x16x8xbf16> -> vector<4x16x8xbf16>
    %27 = vector.extract_strided_slice %8 {offsets = [0, 64], sizes = [16, 8], strides = [1, 1]} : vector<16x96xbf16> to vector<16x8xbf16>
    %28 = vector.extract_strided_slice %8 {offsets = [0, 72], sizes = [16, 8], strides = [1, 1]} : vector<16x96xbf16> to vector<16x8xbf16>
    %29 = vector.extract_strided_slice %8 {offsets = [0, 80], sizes = [16, 8], strides = [1, 1]} : vector<16x96xbf16> to vector<16x8xbf16>
    %30 = vector.extract_strided_slice %8 {offsets = [0, 88], sizes = [16, 8], strides = [1, 1]} : vector<16x96xbf16> to vector<16x8xbf16>
    %31 = vector.shape_cast %27 : vector<16x8xbf16> to vector<1x16x8xbf16>
    %32 = vector.shape_cast %28 : vector<16x8xbf16> to vector<1x16x8xbf16>
    %33 = vector.shape_cast %29 : vector<16x8xbf16> to vector<1x16x8xbf16>
    %34 = vector.shape_cast %30 : vector<16x8xbf16> to vector<1x16x8xbf16>
    %35 = tpu.concatenate %31, %32, %33, %34 in 0 : vector<1x16x8xbf16>, vector<1x16x8xbf16>, vector<1x16x8xbf16>, vector<1x16x8xbf16> -> vector<4x16x8xbf16>
    %c0_6 = arith.constant 0 : index
    %c0_7 = arith.constant 0 : index
    %c0_8 = arith.constant 0 : index
    %36 = vector.load %arg2[%c0_6, %c0_7, %c0_8] : memref<4x8x8xbf16, #tpu.memory_space<vmem>>, vector<4x8x8xbf16>
    %37 = arith.extf %36 : vector<4x8x8xbf16> to vector<4x8x8xf32>
    %38 = vector.extract_strided_slice %17 {offsets = [0, 0, 0], sizes = [4, 8, 8], strides = [1, 1, 1]} : vector<4x16x8xbf16> to vector<4x8x8xbf16>
    %39 = vector.extract_strided_slice %26 {offsets = [0, 0, 0], sizes = [4, 8, 8], strides = [1, 1, 1]} : vector<4x16x8xbf16> to vector<4x8x8xbf16>
    %40 = vector.extract_strided_slice %35 {offsets = [0, 0, 0], sizes = [4, 8, 8], strides = [1, 1, 1]} : vector<4x16x8xbf16> to vector<4x8x8xbf16>
    "tpu.trace_start"() <{level = 10 : i32, message = "hqd,hkd->hqk"}> : () -> ()
    %cst_9 = arith.constant dense<0.000000e+00> : vector<4x8x8xf32>
    %41 = tpu.matmul %38, %39, %cst_9 {dimension_numbers = #tpu.dot_dimension_numbers<[2], [2], [1], [1], [0, 0, 0, 1, 1, 1], [0], [0]>} : vector<4x8x8xbf16>, vector<4x8x8xbf16>, vector<4x8x8xf32> -> vector<4x8x8xf32>
    "tpu.trace_stop"() : () -> ()
    %42 = arith.addf %41, %37 : vector<4x8x8xf32>
    %cst_10 = arith.constant dense<0xFF800000> : vector<4x8xf32>
    %43 = vector.multi_reduction <maximumf>, %42, %cst_10 [2] : vector<4x8x8xf32> to vector<4x8xf32>
    %44 = vector.shape_cast %43 : vector<4x8xf32> to vector<4x8x1xf32>
    %45 = vector.broadcast %44 : vector<4x8x1xf32> to vector<4x8x8xf32>
    %46 = arith.subf %42, %45 : vector<4x8x8xf32>
    %47 = math.exp %46 : vector<4x8x8xf32>
    %cst_11 = arith.constant dense<0.000000e+00> : vector<4x8xf32>
    %48 = vector.multi_reduction <add>, %47, %cst_11 [2] : vector<4x8x8xf32> to vector<4x8xf32>
    %49 = vector.shape_cast %48 : vector<4x8xf32> to vector<4x8x1xf32>
    %50 = tpu.reciprocal %49 {approx = true} : vector<4x8x1xf32> -> vector<4x8x1xf32>
    %51 = vector.broadcast %50 : vector<4x8x1xf32> to vector<4x8x8xf32>
    %52 = arith.mulf %47, %51 : vector<4x8x8xf32>
    %53 = arith.truncf %52 : vector<4x8x8xf32> to vector<4x8x8xbf16>
    "tpu.trace_start"() <{level = 10 : i32, message = "hqk,hkd->hqd"}> : () -> ()
    %cst_12 = arith.constant dense<0.000000e+00> : vector<4x8x8xf32>
    %54 = tpu.matmul %53, %40, %cst_12 {dimension_numbers = #tpu.dot_dimension_numbers<[2], [1], [1], [2], [0, 0, 0, 1, 1, 2], [0], [0]>} : vector<4x8x8xbf16>, vector<4x8x8xbf16>, vector<4x8x8xf32> -> vector<4x8x8xf32>
    "tpu.trace_stop"() : () -> ()
    %55 = arith.truncf %54 : vector<4x8x8xf32> to vector<4x8x8xbf16>
    %56 = vector.extract_strided_slice %55 {offsets = [0, 0, 0], sizes = [1, 8, 8], strides = [1, 1, 1]} : vector<4x8x8xbf16> to vector<1x8x8xbf16>
    %57 = vector.shape_cast %56 : vector<1x8x8xbf16> to vector<8x8xbf16>
    %c0_13 = arith.constant 0 : index
    %c0_14 = arith.constant 0 : index
    %c0_15 = arith.constant 0 : index
    %58 = vector.load %arg5[%c0_13, %c0_14, %c0_15] : memref<4x8x32xbf16, #tpu.memory_space<vmem>>, vector<1x8x32xbf16>
    %59 = vector.shape_cast %58 : vector<1x8x32xbf16> to vector<8x32xbf16>
    %cst_16 = arith.constant dense<0.000000e+00> : vector<8x32xf32>
    %60 = tpu.matmul %57, %59, %cst_16 {dimension_numbers = #tpu.dot_dimension_numbers<[1], [0], [0], [1], [0, 0, 1, 1], [], []>} : vector<8x8xbf16>, vector<8x32xbf16>, vector<8x32xf32> -> vector<8x32xf32>
    %61 = vector.extract_strided_slice %55 {offsets = [1, 0, 0], sizes = [1, 8, 8], strides = [1, 1, 1]} : vector<4x8x8xbf16> to vector<1x8x8xbf16>
    %62 = vector.shape_cast %61 : vector<1x8x8xbf16> to vector<8x8xbf16>
    %c1 = arith.constant 1 : index
    %c0_17 = arith.constant 0 : index
    %c0_18 = arith.constant 0 : index
    %63 = vector.load %arg5[%c1, %c0_17, %c0_18] : memref<4x8x32xbf16, #tpu.memory_space<vmem>>, vector<1x8x32xbf16>
    %64 = vector.shape_cast %63 : vector<1x8x32xbf16> to vector<8x32xbf16>
    %cst_19 = arith.constant dense<0.000000e+00> : vector<8x32xf32>
    %65 = tpu.matmul %62, %64, %cst_19 {dimension_numbers = #tpu.dot_dimension_numbers<[1], [0], [0], [1], [0, 0, 1, 1], [], []>} : vector<8x8xbf16>, vector<8x32xbf16>, vector<8x32xf32> -> vector<8x32xf32>
    %66 = arith.addf %60, %65 : vector<8x32xf32>
    %67 = vector.extract_strided_slice %55 {offsets = [2, 0, 0], sizes = [1, 8, 8], strides = [1, 1, 1]} : vector<4x8x8xbf16> to vector<1x8x8xbf16>
    %68 = vector.shape_cast %67 : vector<1x8x8xbf16> to vector<8x8xbf16>
    %c2 = arith.constant 2 : index
    %c0_20 = arith.constant 0 : index
    %c0_21 = arith.constant 0 : index
    %69 = vector.load %arg5[%c2, %c0_20, %c0_21] : memref<4x8x32xbf16, #tpu.memory_space<vmem>>, vector<1x8x32xbf16>
    %70 = vector.shape_cast %69 : vector<1x8x32xbf16> to vector<8x32xbf16>
    %cst_22 = arith.constant dense<0.000000e+00> : vector<8x32xf32>
    %71 = tpu.matmul %68, %70, %cst_22 {dimension_numbers = #tpu.dot_dimension_numbers<[1], [0], [0], [1], [0, 0, 1, 1], [], []>} : vector<8x8xbf16>, vector<8x32xbf16>, vector<8x32xf32> -> vector<8x32xf32>
    %72 = arith.addf %66, %71 : vector<8x32xf32>
    %73 = vector.extract_strided_slice %55 {offsets = [3, 0, 0], sizes = [1, 8, 8], strides = [1, 1, 1]} : vector<4x8x8xbf16> to vector<1x8x8xbf16>
    %74 = vector.shape_cast %73 : vector<1x8x8xbf16> to vector<8x8xbf16>
    %c3 = arith.constant 3 : index
    %c0_23 = arith.constant 0 : index
    %c0_24 = arith.constant 0 : index
    %75 = vector.load %arg5[%c3, %c0_23, %c0_24] : memref<4x8x32xbf16, #tpu.memory_space<vmem>>, vector<1x8x32xbf16>
    %76 = vector.shape_cast %75 : vector<1x8x32xbf16> to vector<8x32xbf16>
    %cst_25 = arith.constant dense<0.000000e+00> : vector<8x32xf32>
    %77 = tpu.matmul %74, %76, %cst_25 {dimension_numbers = #tpu.dot_dimension_numbers<[1], [0], [0], [1], [0, 0, 1, 1], [], []>} : vector<8x8xbf16>, vector<8x32xbf16>, vector<8x32xf32> -> vector<8x32xf32>
    %78 = arith.addf %72, %77 : vector<8x32xf32>
    %79 = vector.extract_strided_slice %17 {offsets = [0, 8, 0], sizes = [4, 8, 8], strides = [1, 1, 1]} : vector<4x16x8xbf16> to vector<4x8x8xbf16>
    %80 = vector.extract_strided_slice %26 {offsets = [0, 8, 0], sizes = [4, 8, 8], strides = [1, 1, 1]} : vector<4x16x8xbf16> to vector<4x8x8xbf16>
    %81 = vector.extract_strided_slice %35 {offsets = [0, 8, 0], sizes = [4, 8, 8], strides = [1, 1, 1]} : vector<4x16x8xbf16> to vector<4x8x8xbf16>
    "tpu.trace_start"() <{level = 10 : i32, message = "hqd,hkd->hqk"}> : () -> ()
    %cst_26 = arith.constant dense<0.000000e+00> : vector<4x8x8xf32>
    %82 = tpu.matmul %79, %80, %cst_26 {dimension_numbers = #tpu.dot_dimension_numbers<[2], [2], [1], [1], [0, 0, 0, 1, 1, 1], [0], [0]>} : vector<4x8x8xbf16>, vector<4x8x8xbf16>, vector<4x8x8xf32> -> vector<4x8x8xf32>
    "tpu.trace_stop"() : () -> ()
    %83 = arith.addf %82, %37 : vector<4x8x8xf32>
    %cst_27 = arith.constant dense<0xFF800000> : vector<4x8xf32>
    %84 = vector.multi_reduction <maximumf>, %83, %cst_27 [2] : vector<4x8x8xf32> to vector<4x8xf32>
    %85 = vector.shape_cast %84 : vector<4x8xf32> to vector<4x8x1xf32>
    %86 = vector.broadcast %85 : vector<4x8x1xf32> to vector<4x8x8xf32>
    %87 = arith.subf %83, %86 : vector<4x8x8xf32>
    %88 = math.exp %87 : vector<4x8x8xf32>
    %cst_28 = arith.constant dense<0.000000e+00> : vector<4x8xf32>
    %89 = vector.multi_reduction <add>, %88, %cst_28 [2] : vector<4x8x8xf32> to vector<4x8xf32>
    %90 = vector.shape_cast %89 : vector<4x8xf32> to vector<4x8x1xf32>
    %91 = tpu.reciprocal %90 {approx = true} : vector<4x8x1xf32> -> vector<4x8x1xf32>
    %92 = vector.broadcast %91 : vector<4x8x1xf32> to vector<4x8x8xf32>
    %93 = arith.mulf %88, %92 : vector<4x8x8xf32>
    %94 = arith.truncf %93 : vector<4x8x8xf32> to vector<4x8x8xbf16>
    "tpu.trace_start"() <{level = 10 : i32, message = "hqk,hkd->hqd"}> : () -> ()
    %cst_29 = arith.constant dense<0.000000e+00> : vector<4x8x8xf32>
    %95 = tpu.matmul %94, %81, %cst_29 {dimension_numbers = #tpu.dot_dimension_numbers<[2], [1], [1], [2], [0, 0, 0, 1, 1, 2], [0], [0]>} : vector<4x8x8xbf16>, vector<4x8x8xbf16>, vector<4x8x8xf32> -> vector<4x8x8xf32>
    "tpu.trace_stop"() : () -> ()
    %96 = arith.truncf %95 : vector<4x8x8xf32> to vector<4x8x8xbf16>
    %97 = vector.extract_strided_slice %96 {offsets = [0, 0, 0], sizes = [1, 8, 8], strides = [1, 1, 1]} : vector<4x8x8xbf16> to vector<1x8x8xbf16>
    %98 = vector.shape_cast %97 : vector<1x8x8xbf16> to vector<8x8xbf16>
    %c0_30 = arith.constant 0 : index
    %c0_31 = arith.constant 0 : index
    %c0_32 = arith.constant 0 : index
    %99 = vector.load %arg5[%c0_30, %c0_31, %c0_32] : memref<4x8x32xbf16, #tpu.memory_space<vmem>>, vector<1x8x32xbf16>
    %100 = vector.shape_cast %99 : vector<1x8x32xbf16> to vector<8x32xbf16>
    %cst_33 = arith.constant dense<0.000000e+00> : vector<8x32xf32>
    %101 = tpu.matmul %98, %100, %cst_33 {dimension_numbers = #tpu.dot_dimension_numbers<[1], [0], [0], [1], [0, 0, 1, 1], [], []>} : vector<8x8xbf16>, vector<8x32xbf16>, vector<8x32xf32> -> vector<8x32xf32>
    %102 = vector.extract_strided_slice %96 {offsets = [1, 0, 0], sizes = [1, 8, 8], strides = [1, 1, 1]} : vector<4x8x8xbf16> to vector<1x8x8xbf16>
    %103 = vector.shape_cast %102 : vector<1x8x8xbf16> to vector<8x8xbf16>
    %c1_34 = arith.constant 1 : index
    %c0_35 = arith.constant 0 : index
    %c0_36 = arith.constant 0 : index
    %104 = vector.load %arg5[%c1_34, %c0_35, %c0_36] : memref<4x8x32xbf16, #tpu.memory_space<vmem>>, vector<1x8x32xbf16>
    %105 = vector.shape_cast %104 : vector<1x8x32xbf16> to vector<8x32xbf16>
    %cst_37 = arith.constant dense<0.000000e+00> : vector<8x32xf32>
    %106 = tpu.matmul %103, %105, %cst_37 {dimension_numbers = #tpu.dot_dimension_numbers<[1], [0], [0], [1], [0, 0, 1, 1], [], []>} : vector<8x8xbf16>, vector<8x32xbf16>, vector<8x32xf32> -> vector<8x32xf32>
    %107 = arith.addf %101, %106 : vector<8x32xf32>
    %108 = vector.extract_strided_slice %96 {offsets = [2, 0, 0], sizes = [1, 8, 8], strides = [1, 1, 1]} : vector<4x8x8xbf16> to vector<1x8x8xbf16>
    %109 = vector.shape_cast %108 : vector<1x8x8xbf16> to vector<8x8xbf16>
    %c2_38 = arith.constant 2 : index
    %c0_39 = arith.constant 0 : index
    %c0_40 = arith.constant 0 : index
    %110 = vector.load %arg5[%c2_38, %c0_39, %c0_40] : memref<4x8x32xbf16, #tpu.memory_space<vmem>>, vector<1x8x32xbf16>
    %111 = vector.shape_cast %110 : vector<1x8x32xbf16> to vector<8x32xbf16>
    %cst_41 = arith.constant dense<0.000000e+00> : vector<8x32xf32>
    %112 = tpu.matmul %109, %111, %cst_41 {dimension_numbers = #tpu.dot_dimension_numbers<[1], [0], [0], [1], [0, 0, 1, 1], [], []>} : vector<8x8xbf16>, vector<8x32xbf16>, vector<8x32xf32> -> vector<8x32xf32>
    %113 = arith.addf %107, %112 : vector<8x32xf32>
    %114 = vector.extract_strided_slice %96 {offsets = [3, 0, 0], sizes = [1, 8, 8], strides = [1, 1, 1]} : vector<4x8x8xbf16> to vector<1x8x8xbf16>
    %115 = vector.shape_cast %114 : vector<1x8x8xbf16> to vector<8x8xbf16>
    %c3_42 = arith.constant 3 : index
    %c0_43 = arith.constant 0 : index
    %c0_44 = arith.constant 0 : index
    %116 = vector.load %arg5[%c3_42, %c0_43, %c0_44] : memref<4x8x32xbf16, #tpu.memory_space<vmem>>, vector<1x8x32xbf16>
    %117 = vector.shape_cast %116 : vector<1x8x32xbf16> to vector<8x32xbf16>
    %cst_45 = arith.constant dense<0.000000e+00> : vector<8x32xf32>
    %118 = tpu.matmul %115, %117, %cst_45 {dimension_numbers = #tpu.dot_dimension_numbers<[1], [0], [0], [1], [0, 0, 1, 1], [], []>} : vector<8x8xbf16>, vector<8x32xbf16>, vector<8x32xf32> -> vector<8x32xf32>
    %119 = arith.addf %113, %118 : vector<8x32xf32>
    %120 = tpu.concatenate %78, %119 in 0 : vector<8x32xf32>, vector<8x32xf32> -> vector<16x32xf32>
    %c0_46 = arith.constant 0 : index
    %c0_47 = arith.constant 0 : index
    %121 = vector.load %arg6[%c0_46, %c0_47] : memref<1x32xf32, #tpu.memory_space<vmem>>, vector<1x32xf32>
    %122 = vector.broadcast %121 : vector<1x32xf32> to vector<16x32xf32>
    %123 = arith.addf %120, %122 : vector<16x32xf32>
    %124 = arith.addf %2, %123 : vector<16x32xf32>
    %cst_48 = arith.constant dense<0.000000e+00> : vector<16xf32>
    %125 = vector.multi_reduction <add>, %124, %cst_48 [1] : vector<16x32xf32> to vector<16xf32>
    %126 = vector.shape_cast %125 : vector<16xf32> to vector<16x1xf32>
    %cst_49 = arith.constant 3.200000e+01 : f32
    %127 = vector.broadcast %cst_49 : f32 to vector<16x1xf32>
    %128 = arith.divf %126, %127 : vector<16x1xf32>
    %129 = vector.broadcast %128 : vector<16x1xf32> to vector<16x32xf32>
    %130 = arith.subf %124, %129 : vector<16x32xf32>
    %131 = arith.mulf %130, %130 : vector<16x32xf32>
    %cst_50 = arith.constant dense<0.000000e+00> : vector<16xf32>
    %132 = vector.multi_reduction <add>, %131, %cst_50 [1] : vector<16x32xf32> to vector<16xf32>
    %133 = vector.shape_cast %132 : vector<16xf32> to vector<16x1xf32>
    %cst_51 = arith.constant 3.200000e+01 : f32
    %134 = vector.broadcast %cst_51 : f32 to vector<16x1xf32>
    %135 = arith.divf %133, %134 : vector<16x1xf32>
    %cst_52 = arith.constant 9.99999974E-6 : f32
    %136 = vector.broadcast %cst_52 : f32 to vector<16x1xf32>
    %137 = arith.addf %135, %136 : vector<16x1xf32>
    %138 = math.rsqrt %137 : vector<16x1xf32>
    %139 = vector.broadcast %138 : vector<16x1xf32> to vector<16x32xf32>
    %140 = arith.mulf %130, %139 : vector<16x32xf32>
    %c0_53 = arith.constant 0 : index
    %c0_54 = arith.constant 0 : index
    %141 = vector.load %arg7[%c0_53, %c0_54] : memref<1x32xf32, #tpu.memory_space<vmem>>, vector<1x32xf32>
    %142 = vector.broadcast %141 : vector<1x32xf32> to vector<16x32xf32>
    %143 = arith.mulf %140, %142 : vector<16x32xf32>
    %c0_55 = arith.constant 0 : index
    %c0_56 = arith.constant 0 : index
    %144 = vector.load %arg8[%c0_55, %c0_56] : memref<1x32xf32, #tpu.memory_space<vmem>>, vector<1x32xf32>
    %145 = vector.broadcast %144 : vector<1x32xf32> to vector<16x32xf32>
    %146 = arith.addf %143, %145 : vector<16x32xf32>
    %147 = arith.truncf %146 : vector<16x32xf32> to vector<16x32xbf16>
    %c0_57 = arith.constant 0 : index
    %c0_58 = arith.constant 0 : index
    %148 = vector.load %arg9[%c0_57, %c0_58] : memref<32x64xbf16, #tpu.memory_space<vmem>>, vector<32x64xbf16>
    %cst_59 = arith.constant dense<0.000000e+00> : vector<16x64xf32>
    %149 = tpu.matmul %147, %148, %cst_59 {dimension_numbers = #tpu.dot_dimension_numbers<[1], [0], [0], [1], [0, 0, 1, 1], [], []>} : vector<16x32xbf16>, vector<32x64xbf16>, vector<16x64xf32> -> vector<16x64xf32>
    %c0_60 = arith.constant 0 : index
    %c0_61 = arith.constant 0 : index
    %150 = vector.load %arg10[%c0_60, %c0_61] : memref<1x64xf32, #tpu.memory_space<vmem>>, vector<1x64xf32>
    %151 = vector.broadcast %150 : vector<1x64xf32> to vector<16x64xf32>
    %152 = arith.addf %149, %151 : vector<16x64xf32>
    %cst_62 = arith.constant 0.000000e+00 : f32
    %153 = vector.broadcast %cst_62 : f32 to vector<16x64xf32>
    %154 = arith.maximumf %152, %153 : vector<16x64xf32>
    %155 = arith.truncf %154 : vector<16x64xf32> to vector<16x64xbf16>
    %c0_63 = arith.constant 0 : index
    %c0_64 = arith.constant 0 : index
    %156 = vector.load %arg11[%c0_63, %c0_64] : memref<64x32xbf16, #tpu.memory_space<vmem>>, vector<64x32xbf16>
    %cst_65 = arith.constant dense<0.000000e+00> : vector<16x32xf32>
    %157 = tpu.matmul %155, %156, %cst_65 {dimension_numbers = #tpu.dot_dimension_numbers<[1], [0], [0], [1], [0, 0, 1, 1], [], []>} : vector<16x64xbf16>, vector<64x32xbf16>, vector<16x32xf32> -> vector<16x32xf32>
    %c0_66 = arith.constant 0 : index
    %c0_67 = arith.constant 0 : index
    %158 = vector.load %arg12[%c0_66, %c0_67] : memref<1x32xf32, #tpu.memory_space<vmem>>, vector<1x32xf32>
    %159 = vector.broadcast %158 : vector<1x32xf32> to vector<16x32xf32>
    %160 = arith.addf %157, %159 : vector<16x32xf32>
    %161 = arith.addf %146, %160 : vector<16x32xf32>
    %cst_68 = arith.constant dense<0.000000e+00> : vector<16xf32>
    %162 = vector.multi_reduction <add>, %161, %cst_68 [1] : vector<16x32xf32> to vector<16xf32>
    %163 = vector.shape_cast %162 : vector<16xf32> to vector<16x1xf32>
    %cst_69 = arith.constant 3.200000e+01 : f32
    %164 = vector.broadcast %cst_69 : f32 to vector<16x1xf32>
    %165 = arith.divf %163, %164 : vector<16x1xf32>
    %166 = vector.broadcast %165 : vector<16x1xf32> to vector<16x32xf32>
    %167 = arith.subf %161, %166 : vector<16x32xf32>
    %168 = arith.mulf %167, %167 : vector<16x32xf32>
    %cst_70 = arith.constant dense<0.000000e+00> : vector<16xf32>
    %169 = vector.multi_reduction <add>, %168, %cst_70 [1] : vector<16x32xf32> to vector<16xf32>
    %170 = vector.shape_cast %169 : vector<16xf32> to vector<16x1xf32>
    %cst_71 = arith.constant 3.200000e+01 : f32
    %171 = vector.broadcast %cst_71 : f32 to vector<16x1xf32>
    %172 = arith.divf %170, %171 : vector<16x1xf32>
    %cst_72 = arith.constant 9.99999974E-6 : f32
    %173 = vector.broadcast %cst_72 : f32 to vector<16x1xf32>
    %174 = arith.addf %172, %173 : vector<16x1xf32>
    %175 = math.rsqrt %174 : vector<16x1xf32>
    %176 = vector.broadcast %175 : vector<16x1xf32> to vector<16x32xf32>
    %177 = arith.mulf %167, %176 : vector<16x32xf32>
    %c0_73 = arith.constant 0 : index
    %c0_74 = arith.constant 0 : index
    %178 = vector.load %arg13[%c0_73, %c0_74] : memref<1x32xf32, #tpu.memory_space<vmem>>, vector<1x32xf32>
    %179 = vector.broadcast %178 : vector<1x32xf32> to vector<16x32xf32>
    %180 = arith.mulf %177, %179 : vector<16x32xf32>
    %c0_75 = arith.constant 0 : index
    %c0_76 = arith.constant 0 : index
    %181 = vector.load %arg14[%c0_75, %c0_76] : memref<1x32xf32, #tpu.memory_space<vmem>>, vector<1x32xf32>
    %182 = vector.broadcast %181 : vector<1x32xf32> to vector<16x32xf32>
    %183 = arith.addf %180, %182 : vector<16x32xf32>
    %184 = vector.shape_cast %183 : vector<16x32xf32> to vector<2x8x32xf32>
    %185 = arith.truncf %184 : vector<2x8x32xf32> to vector<2x8x32xbf16>
    %c0_77 = arith.constant 0 : index
    %c0_78 = arith.constant 0 : index
    %c0_79 = arith.constant 0 : index
    %186 = vector.load %arg15[%c0_77, %c0_78, %c0_79] : memref<2x8x32xbf16, #tpu.memory_space<vmem>>, vector<2x8x32xbf16>
    tpu.vector_store %arg15[%c0_77, %c0_78, %c0_79], %185 {strides = array<i32>} : memref<2x8x32xbf16, #tpu.memory_space<vmem>>, vector<2x8x32xbf16>,
    return
  }
  func.func @transform_0(%arg0: i32) -> (i32, i32, i32) {
    %c0_i32 = arith.constant 0 : i32
    %c0_i32_0 = arith.constant 0 : i32
    %c0_i32_1 = arith.constant 0 : i32
    return %arg0, %c0_i32, %c0_i32_0 : i32, i32, i32
  }
  func.func @transform_1(%arg0: i32) -> (i32, i32, i32) {
    %c0_i32 = arith.constant 0 : i32
    %c0_i32_0 = arith.constant 0 : i32
    %c0_i32_1 = arith.constant 0 : i32
    %c0_i32_2 = arith.constant 0 : i32
    return %c0_i32, %c0_i32_0, %c0_i32_1 : i32, i32, i32
  }
  func.func @transform_2(%arg0: i32) -> (i32, i32) {
    %c0_i32 = arith.constant 0 : i32
    %c0_i32_0 = arith.constant 0 : i32
    %c0_i32_1 = arith.constant 0 : i32
    return %c0_i32, %c0_i32_0 : i32, i32
  }
  func.func @transform_3(%arg0: i32) -> (i32, i32) {
    %c0_i32 = arith.constant 0 : i32
    %c0_i32_0 = arith.constant 0 : i32
    %c0_i32_1 = arith.constant 0 : i32
    return %c0_i32, %c0_i32_0 : i32, i32
  }
  func.func @transform_4(%arg0: i32) -> (i32, i32, i32) {
    %c0_i32 = arith.constant 0 : i32
    %c0_i32_0 = arith.constant 0 : i32
    %c0_i32_1 = arith.constant 0 : i32
    %c0_i32_2 = arith.constant 0 : i32
    return %c0_i32, %c0_i32_0, %c0_i32_1 : i32, i32, i32
  }
  func.func @transform_5(%arg0: i32) -> (i32, i32) {
    %c0_i32 = arith.constant 0 : i32
    %c0_i32_0 = arith.constant 0 : i32
    %c0_i32_1 = arith.constant 0 : i32
    return %c0_i32, %c0_i32_0 : i32, i32
  }
  func.func @transform_6(%arg0: i32) -> (i32, i32) {
    %c0_i32 = arith.constant 0 : i32
    %c0_i32_0 = arith.constant 0 : i32
    %c0_i32_1 = arith.constant 0 : i32
    return %c0_i32, %c0_i32_0 : i32, i32
  }
  func.func @transform_7(%arg0: i32) -> (i32, i32) {
    %c0_i32 = arith.constant 0 : i32
    %c0_i32_0 = arith.constant 0 : i32
    %c0_i32_1 = arith.constant 0 : i32
    return %c0_i32, %c0_i32_0 : i32, i32
  }
  func.func @transform_8(%arg0: i32) -> (i32, i32) {
    %c0_i32 = arith.constant 0 : i32
    %c0_i32_0 = arith.constant 0 : i32
    %c0_i32_1 = arith.constant 0 : i32
    return %c0_i32, %c0_i32_0 : i32, i32
  }
  func.func @transform_9(%arg0: i32) -> (i32, i32) {
    %c0_i32 = arith.constant 0 : i32
    %c0_i32_0 = arith.constant 0 : i32
    %c0_i32_1 = arith.constant 0 : i32
    return %c0_i32, %c0_i32_0 : i32, i32
  }
  func.func @transform_10(%arg0: i32) -> (i32, i32) {
    %c0_i32 = arith.constant 0 : i32
    %c0_i32_0 = arith.constant 0 : i32
    %c0_i32_1 = arith.constant 0 : i32
    return %c0_i32, %c0_i32_0 : i32, i32
  }
  func.func @transform_11(%arg0: i32) -> (i32, i32) {
    %c0_i32 = arith.constant 0 : i32
    %c0_i32_0 = arith.constant 0 : i32
    %c0_i32_1 = arith.constant 0 : i32
    return %c0_i32, %c0_i32_0 : i32, i32
  }
  func.func @transform_12(%arg0: i32) -> (i32, i32) {
    %c0_i32 = arith.constant 0 : i32
    %c0_i32_0 = arith.constant 0 : i32
    %c0_i32_1 = arith.constant 0 : i32
    return %c0_i32, %c0_i32_0 : i32, i32
  }
  func.func @transform_13(%arg0: i32) -> (i32, i32) {
    %c0_i32 = arith.constant 0 : i32
    %c0_i32_0 = arith.constant 0 : i32
    %c0_i32_1 = arith.constant 0 : i32
    return %c0_i32, %c0_i32_0 : i32, i32
  }
  func.func @transform_14(%arg0: i32) -> (i32, i32, i32) {
    %c0_i32 = arith.constant 0 : i32
    %c0_i32_0 = arith.constant 0 : i32
    %c0_i32_1 = arith.constant 0 : i32
    return %arg0, %c0_i32, %c0_i32_0 : i32, i32, i32
  }
}

</mosaic_0001>

<llo_original>
// kernel: tpu_custom_call.1
$region0: #{tpu_custom_call.1}
  #allocation0 [shape = 'u32[]', space=smem, size = 0x4, offset = 0x4, fixed_abs, tag = 'smem constant byte address 0x4 - core index']
  #allocation1 [shape = 'u32[144,128]{1,0:T(1,128)}', space=vmem, size = 0x12000, scoped, tag = 'internal scratch']
  %s0 = inlined_call_operand.hbm [shape: bf16[2,8,32], index: 0, kind: input, shape index: {}]
  %s1 = inlined_call_operand.hbm [shape: bf16[4,8,8], index: 1, kind: input, shape index: {}]
  %s2 = inlined_call_operand.hbm [shape: bf16[32,96], index: 2, kind: input, shape index: {}]
  %s3 = inlined_call_operand.hbm [shape: f32[1,96], index: 3, kind: input, shape index: {}]
  %s4 = inlined_call_operand.hbm [shape: bf16[4,8,32], index: 4, kind: input, shape index: {}]
  %s5 = inlined_call_operand.hbm [shape: f32[1,32], index: 5, kind: input, shape index: {}]
  %s6 = inlined_call_operand.hbm [shape: f32[1,32], index: 6, kind: input, shape index: {}]
  %s7 = inlined_call_operand.hbm [shape: f32[1,32], index: 7, kind: input, shape index: {}]
  %s8 = inlined_call_operand.hbm [shape: bf16[32,64], index: 8, kind: input, shape index: {}]
  %s9 = inlined_call_operand.hbm [shape: f32[1,64], index: 9, kind: input, shape index: {}]
  %s10 = inlined_call_operand.hbm [shape: bf16[64,32], index: 10, kind: input, shape index: {}]
  %s11 = inlined_call_operand.hbm [shape: f32[1,32], index: 11, kind: input, shape index: {}]
  %s12 = inlined_call_operand.hbm [shape: f32[1,32], index: 12, kind: input, shape index: {}]
  %s13 = inlined_call_operand.hbm [shape: f32[1,32], index: 13, kind: input, shape index: {}]
  %s14 = inlined_call_operand.hbm [shape: bf16[2,8,32], index: 14, kind: output, shape index: {}]
  %s15 = sld [smem:[#allocation0]]
  $region122: #{tpu_custom_call.1} parent=0
    _
  %s17 = ssub.s32 1, %s15
  %s18 = scalar_select 0, %s17, %s15
  $region1: #{tpu_custom_call.1} parent=0
    #allocation2 [shape = 'u8[4096]{0}', space=vmem, size = 0x1000, scoped, tag = 'input window, operand 0, single buffered']
    #allocation3 [shape = 's32[1]{0}', space=sflag, size = 0x4, scoped, tag = 'scoped memory for tpu_custom_call.1']
    #allocation4 [shape = 's32[1]{0}', space=sflag, size = 0x4, scoped, tag = 'scoped memory for tpu_custom_call.1']
    #allocation5 [shape = 'u8[8192]{0}', space=vmem, size = 0x2000, scoped, tag = 'input window, operand 1, single buffered']
    #allocation6 [shape = 's32[1]{0}', space=sflag, size = 0x4, scoped, tag = 'scoped memory for tpu_custom_call.1']
    #allocation7 [shape = 'u8[8192]{0}', space=vmem, size = 0x2000, scoped, tag = 'input window, operand 2, single buffered']
    #allocation8 [shape = 'u8[512]{0}', space=vmem, size = 0x400, scoped, tag = 'input window, operand 3, single buffered']
    #allocation9 [shape = 's32[1]{0}', space=sflag, size = 0x4, scoped, tag = 'scoped memory for tpu_custom_call.1']
    #allocation10 [shape = 'u8[8192]{0}', space=vmem, size = 0x2000, scoped, tag = 'input window, operand 4, single buffered']
    #allocation11 [shape = 'u8[512]{0}', space=vmem, size = 0x400, scoped, tag = 'input window, operand 5, single buffered']
    #allocation12 [shape = 's32[1]{0}', space=sflag, size = 0x4, scoped, tag = 'scoped memory for tpu_custom_call.1']
    #allocation13 [shape = 'u8[512]{0}', space=vmem, size = 0x400, scoped, tag = 'input window, operand 6, single buffered']
    #allocation14 [shape = 'u8[512]{0}', space=vmem, size = 0x400, scoped, tag = 'input window, operand 7, single buffered']
    #allocation15 [shape = 's32[1]{0}', space=sflag, size = 0x4, scoped, tag = 'scoped memory for tpu_custom_call.1']
    #allocation16 [shape = 'u8[8192]{0}', space=vmem, size = 0x2000, scoped, tag = 'input window, operand 8, single buffered']
    #allocation17 [shape = 'u8[512]{0}', space=vmem, size = 0x400, scoped, tag = 'input window, operand 9, single buffered']
    #allocation18 [shape = 's32[1]{0}', space=sflag, size = 0x4, scoped, tag = 'scoped memory for tpu_custom_call.1']
    #allocation19 [shape = 'u8[16384]{0}', space=vmem, size = 0x4000, scoped, tag = 'input window, operand 10, single buffered']
    #allocation20 [shape = 'u8[512]{0}', space=vmem, size = 0x400, scoped, tag = 'input window, operand 11, single buffered']
    #allocation21 [shape = 's32[1]{0}', space=sflag, size = 0x4, scoped, tag = 'scoped memory for tpu_custom_call.1']
    #allocation22 [shape = 'u8[512]{0}', space=vmem, size = 0x400, scoped, tag = 'input window, operand 12, single buffered']
    #allocation23 [shape = 'u8[512]{0}', space=vmem, size = 0x400, scoped, tag = 'input window, operand 13, single buffered']
    #allocation24 [shape = 's32[1]{0}', space=sflag, size = 0x4, scoped, tag = 'scoped memory for tpu_custom_call.1']
    #allocation25 [shape = 'u8[4096]{0}', space=vmem, size = 0x1000, scoped, tag = 'output window, operand 0, single buffered']
    %19 = vsyncpa [#allocation3], 0
    %20 = vsyncpa [#allocation6], 0
    %21 = vsyncpa [#allocation9], 0
    %22 = vsyncpa [#allocation12], 0
    %23 = vsyncpa [#allocation15], 0
    %24 = vsyncpa [#allocation18], 0
    %25 = vsyncpa [#allocation21], 0
    %26 = vsyncpa [#allocation24], 0
    %27 = vsyncpa [#allocation4], 0
    // Predicated region
    $region2: #{tpu_custom_call.1} parent=1 // pred_check
      _
    $region3: #{tpu_custom_call.1} parent=1 // pred_check_branch
      %29 = sbr.rel (0) target = $region5
    $region4: #{tpu_custom_call.1} parent=1 // pred_region
      %s31 = ssub.s32 128, 128
      %32 = vsyncadd [#allocation3], %s31
      %s33 = sshll.u32 [#allocation2], 4
      %s34 = int_to_ptr.vmem [resolvable:$true] %s33
      %39 = dma.hbm_to_vmem [thread:$0]  %s0, 128, %s34, [#allocation3], 64, 64, 4
    $region5: #{tpu_custom_call.1} parent=1 // pred_fallthru
      _
    // Predicated region
    $region6: #{tpu_custom_call.1} parent=1 // pred_check
      _
    $region7: #{tpu_custom_call.1} parent=1 // pred_check_branch
      %41 = sbr.rel (0) target = $region9
    $region8: #{tpu_custom_call.1} parent=1 // pred_region
      %s43 = ssub.s32 256, 256
      %44 = vsyncadd [#allocation6], %s43
      %s45 = sshll.u32 [#allocation5], 4
      %s46 = int_to_ptr.vmem [resolvable:$true] %s45
      %51 = dma.hbm_to_vmem [thread:$0]  %s1, 256, %s46, [#allocation6], 64, 64, 4
    $region9: #{tpu_custom_call.1} parent=1 // pred_fallthru
      _
    // Predicated region
    $region10: #{tpu_custom_call.1} parent=1 // pred_check
      _
    $region11: #{tpu_custom_call.1} parent=1 // pred_check_branch
      %53 = sbr.rel (0) target = $region13
    $region12: #{tpu_custom_call.1} parent=1 // pred_region
      %s55 = ssub.s32 256, 256
      %56 = vsyncadd [#allocation6], %s55
      %s57 = sshll.u32 [#allocation7], 4
      %s58 = int_to_ptr.vmem [resolvable:$true] %s57
      %63 = dma.hbm_to_vmem [thread:$0]  %s2, 256, %s58, [#allocation6], 64, 64, 4
    $region13: #{tpu_custom_call.1} parent=1 // pred_fallthru
      _
    // Predicated region
    $region14: #{tpu_custom_call.1} parent=1 // pred_check
      _
    $region15: #{tpu_custom_call.1} parent=1 // pred_check_branch
      %65 = sbr.rel (0) target = $region17
    $region16: #{tpu_custom_call.1} parent=1 // pred_region
      %s67 = ssub.s32 16, 16
      %68 = vsyncadd [#allocation9], %s67
      %s70 = sshll.u32 [#allocation8], 4
      %s71 = int_to_ptr.vmem [resolvable:$true] %s70
      %73 = dma.hbm_to_vmem [thread:$0]  %s3, 16, %s71, [#allocation9]
    $region17: #{tpu_custom_call.1} parent=1 // pred_fallthru
      _
    // Predicated region
    $region18: #{tpu_custom_call.1} parent=1 // pred_check
      _
    $region19: #{tpu_custom_call.1} parent=1 // pred_check_branch
      %75 = sbr.rel (0) target = $region21
    $region20: #{tpu_custom_call.1} parent=1 // pred_region
      %s77 = ssub.s32 256, 256
      %78 = vsyncadd [#allocation9], %s77
      %s79 = sshll.u32 [#allocation10], 4
      %s80 = int_to_ptr.vmem [resolvable:$true] %s79
      %85 = dma.hbm_to_vmem [thread:$0]  %s4, 256, %s80, [#allocation9], 64, 64, 4
    $region21: #{tpu_custom_call.1} parent=1 // pred_fallthru
      _
    // Predicated region
    $region22: #{tpu_custom_call.1} parent=1 // pred_check
      _
    $region23: #{tpu_custom_call.1} parent=1 // pred_check_branch
      %87 = sbr.rel (0) target = $region25
    $region24: #{tpu_custom_call.1} parent=1 // pred_region
      %s89 = ssub.s32 16, 16
      %90 = vsyncadd [#allocation12], %s89
      %s92 = sshll.u32 [#allocation11], 4
      %s93 = int_to_ptr.vmem [resolvable:$true] %s92
      %95 = dma.hbm_to_vmem [thread:$0]  %s5, 16, %s93, [#allocation12]
    $region25: #{tpu_custom_call.1} parent=1 // pred_fallthru
      _
    // Predicated region
    $region26: #{tpu_custom_call.1} parent=1 // pred_check
      _
    $region27: #{tpu_custom_call.1} parent=1 // pred_check_branch
      %97 = sbr.rel (0) target = $region29
    $region28: #{tpu_custom_call.1} parent=1 // pred_region
      %s99 = ssub.s32 16, 16
      %100 = vsyncadd [#allocation12], %s99
      %s102 = sshll.u32 [#allocation13], 4
      %s103 = int_to_ptr.vmem [resolvable:$true] %s102
      %105 = dma.hbm_to_vmem [thread:$0]  %s6, 16, %s103, [#allocation12]
    $region29: #{tpu_custom_call.1} parent=1 // pred_fallthru
      _
    // Predicated region
    $region30: #{tpu_custom_call.1} parent=1 // pred_check
      _
    $region31: #{tpu_custom_call.1} parent=1 // pred_check_branch
      %107 = sbr.rel (0) target = $region33
    $region32: #{tpu_custom_call.1} parent=1 // pred_region
      %s109 = ssub.s32 16, 16
      %110 = vsyncadd [#allocation15], %s109
      %s112 = sshll.u32 [#allocation14], 4
      %s113 = int_to_ptr.vmem [resolvable:$true] %s112
      %115 = dma.hbm_to_vmem [thread:$0]  %s7, 16, %s113, [#allocation15]
    $region33: #{tpu_custom_call.1} parent=1 // pred_fallthru
      _
    // Predicated region
    $region34: #{tpu_custom_call.1} parent=1 // pred_check
      _
    $region35: #{tpu_custom_call.1} parent=1 // pred_check_branch
      %117 = sbr.rel (0) target = $region37
    $region36: #{tpu_custom_call.1} parent=1 // pred_region
      %s119 = ssub.s32 256, 256
      %120 = vsyncadd [#allocation15], %s119
      %s121 = sshll.u32 [#allocation16], 4
      %s122 = int_to_ptr.vmem [resolvable:$true] %s121
      %127 = dma.hbm_to_vmem [thread:$0]  %s8, 256, %s122, [#allocation15], 64, 64, 4
    $region37: #{tpu_custom_call.1} parent=1 // pred_fallthru
      _
    // Predicated region
    $region38: #{tpu_custom_call.1} parent=1 // pred_check
      _
    $region39: #{tpu_custom_call.1} parent=1 // pred_check_branch
      %129 = sbr.rel (0) target = $region41
    $region40: #{tpu_custom_call.1} parent=1 // pred_region
      %s131 = ssub.s32 16, 16
      %132 = vsyncadd [#allocation18], %s131
      %s134 = sshll.u32 [#allocation17], 4
      %s135 = int_to_ptr.vmem [resolvable:$true] %s134
      %137 = dma.hbm_to_vmem [thread:$0]  %s9, 16, %s135, [#allocation18]
    $region41: #{tpu_custom_call.1} parent=1 // pred_fallthru
      _
    // Predicated region
    $region42: #{tpu_custom_call.1} parent=1 // pred_check
      _
    $region43: #{tpu_custom_call.1} parent=1 // pred_check_branch
      %139 = sbr.rel (0) target = $region45
    $region44: #{tpu_custom_call.1} parent=1 // pred_region
      %s141 = ssub.s32 512, 512
      %142 = vsyncadd [#allocation18], %s141
      %s143 = sshll.u32 [#allocation19], 4
      %s144 = int_to_ptr.vmem [resolvable:$true] %s143
      %149 = dma.hbm_to_vmem [thread:$0]  %s10, 512, %s144, [#allocation18], 64, 64, 4
    $region45: #{tpu_custom_call.1} parent=1 // pred_fallthru
      _
    // Predicated region
    $region46: #{tpu_custom_call.1} parent=1 // pred_check
      _
    $region47: #{tpu_custom_call.1} parent=1 // pred_check_branch
      %151 = sbr.rel (0) target = $region49
    $region48: #{tpu_custom_call.1} parent=1 // pred_region
      %s153 = ssub.s32 16, 16
      %154 = vsyncadd [#allocation21], %s153
      %s156 = sshll.u32 [#allocation20], 4
      %s157 = int_to_ptr.vmem [resolvable:$true] %s156
      %159 = dma.hbm_to_vmem [thread:$0]  %s11, 16, %s157, [#allocation21]
    $region49: #{tpu_custom_call.1} parent=1 // pred_fallthru
      _
    // Predicated region
    $region50: #{tpu_custom_call.1} parent=1 // pred_check
      _
    $region51: #{tpu_custom_call.1} parent=1 // pred_check_branch
      %161 = sbr.rel (0) target = $region53
    $region52: #{tpu_custom_call.1} parent=1 // pred_region
      %s163 = ssub.s32 16, 16
      %164 = vsyncadd [#allocation21], %s163
      %s166 = sshll.u32 [#allocation22], 4
      %s167 = int_to_ptr.vmem [resolvable:$true] %s166
      %169 = dma.hbm_to_vmem [thread:$0]  %s12, 16, %s167, [#allocation21]
    $region53: #{tpu_custom_call.1} parent=1 // pred_fallthru
      _
    // Predicated region
    $region54: #{tpu_custom_call.1} parent=1 // pred_check
      _
    $region55: #{tpu_custom_call.1} parent=1 // pred_check_branch
      %171 = sbr.rel (0) target = $region57
    $region56: #{tpu_custom_call.1} parent=1 // pred_region
      %s173 = ssub.s32 16, 16
      %174 = vsyncadd [#allocation24], %s173
      %s176 = sshll.u32 [#allocation23], 4
      %s177 = int_to_ptr.vmem [resolvable:$true] %s176
      %179 = dma.hbm_to_vmem [thread:$0]  %s13, 16, %s177, [#allocation24]
    $region57: #{tpu_custom_call.1} parent=1 // pred_fallthru
      _
    // Predicated region
    $region58: #{tpu_custom_call.1} parent=1 // pred_check
      _
    $region59: #{tpu_custom_call.1} parent=1 // pred_check_branch
      %181 = sbr.rel (0) target = $region61
    $region60: #{tpu_custom_call.1} parent=1 // pred_region
      %182 = dma.done [#allocation3], 128
    $region61: #{tpu_custom_call.1} parent=1 // pred_fallthru
      _
    // Predicated region
    $region62: #{tpu_custom_call.1} parent=1 // pred_check
      _
    $region63: #{tpu_custom_call.1} parent=1 // pred_check_branch
      %184 = sbr.rel (0) target = $region65
    $region64: #{tpu_custom_call.1} parent=1 // pred_region
      %185 = dma.done [#allocation6], 256
    $region65: #{tpu_custom_call.1} parent=1 // pred_fallthru
      _
    // Predicated region
    $region66: #{tpu_custom_call.1} parent=1 // pred_check
      _
    $region67: #{tpu_custom_call.1} parent=1 // pred_check_branch
      %187 = sbr.rel (0) target = $region69
    $region68: #{tpu_custom_call.1} parent=1 // pred_region
      %188 = dma.done [#allocation6], 256
    $region69: #{tpu_custom_call.1} parent=1 // pred_fallthru
      _
    // Predicated region
    $region70: #{tpu_custom_call.1} parent=1 // pred_check
      _
    $region71: #{tpu_custom_call.1} parent=1 // pred_check_branch
      %190 = sbr.rel (0) target = $region73
    $region72: #{tpu_custom_call.1} parent=1 // pred_region
      %191 = dma.done [#allocation9], 16
    $region73: #{tpu_custom_call.1} parent=1 // pred_fallthru
      _
    // Predicated region
    $region74: #{tpu_custom_call.1} parent=1 // pred_check
      _
    $region75: #{tpu_custom_call.1} parent=1 // pred_check_branch
      %193 = sbr.rel (0) target = $region77
    $region76: #{tpu_custom_call.1} parent=1 // pred_region
      %194 = dma.done [#allocation9], 256
    $region77: #{tpu_custom_call.1} parent=1 // pred_fallthru
      _
    // Predicated region
    $region78: #{tpu_custom_call.1} parent=1 // pred_check
      _
    $region79: #{tpu_custom_call.1} parent=1 // pred_check_branch
      %196 = sbr.rel (0) target = $region81
    $region80: #{tpu_custom_call.1} parent=1 // pred_region
      %197 = dma.done [#allocation12], 16
    $region81: #{tpu_custom_call.1} parent=1 // pred_fallthru
      _
    // Predicated region
    $region82: #{tpu_custom_call.1} parent=1 // pred_check
      _
    $region83: #{tpu_custom_call.1} parent=1 // pred_check_branch
      %199 = sbr.rel (0) target = $region85
    $region84: #{tpu_custom_call.1} parent=1 // pred_region
      %200 = dma.done [#allocation12], 16
    $region85: #{tpu_custom_call.1} parent=1 // pred_fallthru
      _
    // Predicated region
    $region86: #{tpu_custom_call.1} parent=1 // pred_check
      _
    $region87: #{tpu_custom_call.1} parent=1 // pred_check_branch
      %202 = sbr.rel (0) target = $region89
    $region88: #{tpu_custom_call.1} parent=1 // pred_region
      %203 = dma.done [#allocation15], 16
    $region89: #{tpu_custom_call.1} parent=1 // pred_fallthru
      _
    // Predicated region
    $region90: #{tpu_custom_call.1} parent=1 // pred_check
      _
    $region91: #{tpu_custom_call.1} parent=1 // pred_check_branch
      %205 = sbr.rel (0) target = $region93
    $region92: #{tpu_custom_call.1} parent=1 // pred_region
      %206 = dma.done [#allocation15], 256
    $region93: #{tpu_custom_call.1} parent=1 // pred_fallthru
      _
    // Predicated region
    $region94: #{tpu_custom_call.1} parent=1 // pred_check
      _
    $region95: #{tpu_custom_call.1} parent=1 // pred_check_branch
      %208 = sbr.rel (0) target = $region97
    $region96: #{tpu_custom_call.1} parent=1 // pred_region
      %209 = dma.done [#allocation18], 16
    $region97: #{tpu_custom_call.1} parent=1 // pred_fallthru
      _
    // Predicated region
    $region98: #{tpu_custom_call.1} parent=1 // pred_check
      _
    $region99: #{tpu_custom_call.1} parent=1 // pred_check_branch
      %211 = sbr.rel (0) target = $region101
    $region100: #{tpu_custom_call.1} parent=1 // pred_region
      %212 = dma.done [#allocation18], 512
    $region101: #{tpu_custom_call.1} parent=1 // pred_fallthru
      _
    // Predicated region
    $region102: #{tpu_custom_call.1} parent=1 // pred_check
      _
    $region103: #{tpu_custom_call.1} parent=1 // pred_check_branch
      %214 = sbr.rel (0) target = $region105
    $region104: #{tpu_custom_call.1} parent=1 // pred_region
      %215 = dma.done [#allocation21], 16
    $region105: #{tpu_custom_call.1} parent=1 // pred_fallthru
      _
    // Predicated region
    $region106: #{tpu_custom_call.1} parent=1 // pred_check
      _
    $region107: #{tpu_custom_call.1} parent=1 // pred_check_branch
      %217 = sbr.rel (0) target = $region109
    $region108: #{tpu_custom_call.1} parent=1 // pred_region
      %218 = dma.done [#allocation21], 16
    $region109: #{tpu_custom_call.1} parent=1 // pred_fallthru
      _
    // Predicated region
    $region110: #{tpu_custom_call.1} parent=1 // pred_check
      _
    $region111: #{tpu_custom_call.1} parent=1 // pred_check_branch
      %220 = sbr.rel (0) target = $region113
    $region112: #{tpu_custom_call.1} parent=1 // pred_region
      %221 = dma.done [#allocation24], 16
    $region113: #{tpu_custom_call.1} parent=1 // pred_fallthru
      _
    %v223 = vld [vmem:[#allocation2] sm:$0xf]
    %v224 = vld [vmem:[#allocation2 + $0x4] sm:$0xf]
    %v225 = vunpack.c.l.bf16 %v223
    %v226 = vunpack.c.l.bf16 %v224
    %v227 = vld [vmem:[#allocation7] sm:$0xf]
    %v228 = vld [vmem:[#allocation7 + $0x4] sm:$0xf]
    %v229 = vld [vmem:[#allocation7 + $0x8] sm:$0xf]
    %v230 = vld [vmem:[#allocation7 + $0xc] sm:$0xf]
    %v231 = vld [vmem:[#allocation8] sm:$0x1]
    %v233 = vlaneseq
    %v234 = vshrl.u32 %v233, 7
    %v235 = vsub.s32 0, %v234
    %v236 = vrot.slane %v231, %v235
    %v240 = vunpack.c.l.b16 %v223
    %v241 = vunpack.c.l.b16 %v224
    %v242 = vpack.c.b16 %v241, %v240
    %v247 = vunpack.c.l.b16 %v227
    %v248 = vunpack.c.l.b16 %v228
    %v249 = vunpack.c.l.b16 %v229
    %v250 = vunpack.c.l.b16 %v230
    %v251 = vpack.c.b16 %v248, %v247
    %v252 = vpack.c.b16 %v250, %v249
    %vm255 = vcmask 261120
    %v257 = vsel %vm255, %v242, 0
    %259 = vmatprep.subr.bf16.mxu0 0
    %260 = vmatpush1.bf16.msra.mxu0 %v251
    %261 = vmatprep.subr.bf16.mxu0 0
    %262 = vmatpush1.bf16.msra.mxu0 %v252
    %263 = vmatprep.subr.bf16.mxu0 0
    %264 = vmatpush1.bf16.msra.mxu0 0
    %265 = vmatprep.subr.bf16.mxu0 0
    %266 = vmatpush1.bf16.msra.mxu0 0
    %267 = vmatprep.subr.bf16.mxu0 0
    %268 = vmatpush1.bf16.msra.mxu0 0
    %269 = vmatprep.subr.bf16.mxu0 0
    %270 = vmatpush1.bf16.msra.mxu0 0
    %271 = vmatprep.subr.bf16.mxu0 0
    %272 = vmatpush1.bf16.msra.mxu0 0
    %273 = vmatprep.subr.bf16.mxu0 0
    %274 = vmatpush1.bf16.msra.mxu0 0
    %275 = vmatprep.subr.bf16.mxu0 0
    %276 = vmatpush1.bf16.msra.mxu0 0
    %277 = vmatprep.subr.bf16.mxu0 0
    %278 = vmatpush1.bf16.msra.mxu0 0
    %279 = vmatprep.subr.bf16.mxu0 0
    %280 = vmatpush1.bf16.msra.mxu0 0
    %281 = vmatprep.subr.bf16.mxu0 0
    %282 = vmatpush1.bf16.msra.mxu0 0
    %283 = vmatprep.subr.bf16.mxu0 0
    %284 = vmatpush1.bf16.msra.mxu0 0
    %285 = vmatprep.subr.bf16.mxu0 0
    %286 = vmatpush1.bf16.msra.mxu0 0
    %287 = vmatprep.subr.bf16.mxu0 0
    %288 = vmatpush1.bf16.msra.mxu0 0
    %289 = vmatprep.subr.bf16.mxu0 0
    %290 = vmatpush1.bf16.msra.mxu0 0
    %291 = vmatprep.mubr.bf16.mxu0 0
    %292 = vmatmul.mubr.bf16.gmra.mrb[0].mxu0 %v257
    %v293 = vpop.f32.mrb[0].mxu0
    %v294 = vadd.f32 %v236, %v293
    %v295 = vpop.f32.mrb[0].mxu0
    %v296 = vpop.f32.mrb[0].mxu0
    %v297 = vadd.f32 %v236, %v296
    %v298 = vpop.f32.mrb[0].mxu0
    %299 = vdwg.mxu0
    %v300 = vpack.c.bf16 %v297, %v294
    %302 = vrot.lane.b32.xlu0 %v300, 120
    %v303 = vpop.permute.xlu0 %302
    %304 = vrot.lane.b32.xlu0 %v300, 112
    %v305 = vpop.permute.xlu0 %304
    %306 = vrot.lane.b32.xlu0 %v300, 104
    %v307 = vpop.permute.xlu0 %306
    %v308 = vld [vmem:[#allocation5] sm:$0xf]
    %v309 = vld [vmem:[#allocation5 + $0x4] sm:$0xf]
    %v310 = vld [vmem:[#allocation5 + $0x8] sm:$0xf]
    %v311 = vld [vmem:[#allocation5 + $0xc] sm:$0xf]
    %v312 = vunpack.c.l.bf16 %v308
    %v313 = vunpack.c.l.bf16 %v309
    %v314 = vunpack.c.l.bf16 %v310
    %v315 = vunpack.c.l.bf16 %v311
    %316 = vrot.lane.b32.xlu0 %v300, 96
    %v317 = vpop.permute.xlu0 %316
    %vm318 = vcmask 64512
    %v320 = vsel %vm318, %v300, 0
    %v323 = vsel %vm318, %v317, 0
    %325 = vmatprep.subr.bf16.mxu0 0
    %326 = vmatpush1.bf16.xpose.msra.mxu0 %v323
    %327 = vmatprep.subr.bf16.mxu0 0
    %328 = vmatpush1.bf16.xpose.msra.mxu0 0
    %329 = vmatprep.subr.bf16.mxu0 0
    %330 = vmatpush1.bf16.xpose.msra.mxu0 0
    %331 = vmatprep.subr.bf16.mxu0 0
    %332 = vmatpush1.bf16.xpose.msra.mxu0 0
    %333 = vmatprep.subr.bf16.mxu0 0
    %334 = vmatpush1.bf16.xpose.msra.mxu0 0
    %335 = vmatprep.subr.bf16.mxu0 0
    %336 = vmatpush1.bf16.xpose.msra.mxu0 0
    %337 = vmatprep.subr.bf16.mxu0 0
    %338 = vmatpush1.bf16.xpose.msra.mxu0 0
    %339 = vmatprep.subr.bf16.mxu0 0
    %340 = vmatpush1.bf16.xpose.msra.mxu0 0
    %341 = vmatprep.subr.bf16.mxu0 0
    %342 = vmatpush1.bf16.xpose.msra.mxu0 0
    %343 = vmatprep.subr.bf16.mxu0 0
    %344 = vmatpush1.bf16.xpose.msra.mxu0 0
    %345 = vmatprep.subr.bf16.mxu0 0
    %346 = vmatpush1.bf16.xpose.msra.mxu0 0
    %347 = vmatprep.subr.bf16.mxu0 0
    %348 = vmatpush1.bf16.xpose.msra.mxu0 0
    %349 = vmatprep.subr.bf16.mxu0 0
    %350 = vmatpush1.bf16.xpose.msra.mxu0 0
    %351 = vmatprep.subr.bf16.mxu0 0
    %352 = vmatpush1.bf16.xpose.msra.mxu0 0
    %353 = vmatprep.subr.bf16.mxu0 0
    %354 = vmatpush1.bf16.xpose.msra.mxu0 0
    %355 = vmatprep.subr.bf16.mxu0 0
    %356 = vmatpush1.bf16.xpose.msra.mxu0 0
    %357 = vmatprep.mubr.bf16.mxu0 0
    %358 = vmatmul.mubr.bf16.gmra.mrb[0].mxu0 %v320
    %v359 = vpop.f32.mrb[0].mxu0
    %v360 = vadd.f32 %v312, %v359
    %v361 = vpop.f32.mrb[0].mxu0
    %v362 = vpop.f32.mrb[0].mxu0
    %v363 = vpop.f32.mrb[0].mxu0
    %364 = vdwg.mxu0
    %365 = vrot.lane.b32.xlu0 %v303, 96
    %v366 = vpop.permute.xlu0 %365
    %v368 = vsel %vm318, %v303, 0
    %v371 = vsel %vm318, %v366, 0
    %373 = vmatprep.subr.bf16.mxu0 0
    %374 = vmatpush1.bf16.xpose.msra.mxu0 %v371
    %375 = vmatprep.subr.bf16.mxu0 0
    %376 = vmatpush1.bf16.xpose.msra.mxu0 0
    %377 = vmatprep.subr.bf16.mxu0 0
    %378 = vmatpush1.bf16.xpose.msra.mxu0 0
    %379 = vmatprep.subr.bf16.mxu0 0
    %380 = vmatpush1.bf16.xpose.msra.mxu0 0
    %381 = vmatprep.subr.bf16.mxu0 0
    %382 = vmatpush1.bf16.xpose.msra.mxu0 0
    %383 = vmatprep.subr.bf16.mxu0 0
    %384 = vmatpush1.bf16.xpose.msra.mxu0 0
    %385 = vmatprep.subr.bf16.mxu0 0
    %386 = vmatpush1.bf16.xpose.msra.mxu0 0
    %387 = vmatprep.subr.bf16.mxu0 0
    %388 = vmatpush1.bf16.xpose.msra.mxu0 0
    %389 = vmatprep.subr.bf16.mxu0 0
    %390 = vmatpush1.bf16.xpose.msra.mxu0 0
    %391 = vmatprep.subr.bf16.mxu0 0
    %392 = vmatpush1.bf16.xpose.msra.mxu0 0
    %393 = vmatprep.subr.bf16.mxu0 0
    %394 = vmatpush1.bf16.xpose.msra.mxu0 0
    %395 = vmatprep.subr.bf16.mxu0 0
    %396 = vmatpush1.bf16.xpose.msra.mxu0 0
    %397 = vmatprep.subr.bf16.mxu0 0
    %398 = vmatpush1.bf16.xpose.msra.mxu0 0
    %399 = vmatprep.subr.bf16.mxu0 0
    %400 = vmatpush1.bf16.xpose.msra.mxu0 0
    %401 = vmatprep.subr.bf16.mxu0 0
    %402 = vmatpush1.bf16.xpose.msra.mxu0 0
    %403 = vmatprep.subr.bf16.mxu0 0
    %404 = vmatpush1.bf16.xpose.msra.mxu0 0
    %405 = vmatprep.mubr.bf16.mxu0 0
    %406 = vmatmul.mubr.bf16.gmra.mrb[0].mxu0 %v368
    %v407 = vpop.f32.mrb[0].mxu0
    %v408 = vadd.f32 %v313, %v407
    %v409 = vpop.f32.mrb[0].mxu0
    %v410 = vpop.f32.mrb[0].mxu0
    %v411 = vpop.f32.mrb[0].mxu0
    %412 = vdwg.mxu0
    %413 = vrot.lane.b32.xlu0 %v305, 96
    %v414 = vpop.permute.xlu0 %413
    %v416 = vsel %vm318, %v305, 0
    %v419 = vsel %vm318, %v414, 0
    %421 = vmatprep.subr.bf16.mxu0 0
    %422 = vmatpush1.bf16.xpose.msra.mxu0 %v419
    %423 = vmatprep.subr.bf16.mxu0 0
    %424 = vmatpush1.bf16.xpose.msra.mxu0 0
    %425 = vmatprep.subr.bf16.mxu0 0
    %426 = vmatpush1.bf16.xpose.msra.mxu0 0
    %427 = vmatprep.subr.bf16.mxu0 0
    %428 = vmatpush1.bf16.xpose.msra.mxu0 0
    %429 = vmatprep.subr.bf16.mxu0 0
    %430 = vmatpush1.bf16.xpose.msra.mxu0 0
    %431 = vmatprep.subr.bf16.mxu0 0
    %432 = vmatpush1.bf16.xpose.msra.mxu0 0
    %433 = vmatprep.subr.bf16.mxu0 0
    %434 = vmatpush1.bf16.xpose.msra.mxu0 0
    %435 = vmatprep.subr.bf16.mxu0 0
    %436 = vmatpush1.bf16.xpose.msra.mxu0 0
    %437 = vmatprep.subr.bf16.mxu0 0
    %438 = vmatpush1.bf16.xpose.msra.mxu0 0
    %439 = vmatprep.subr.bf16.mxu0 0
    %440 = vmatpush1.bf16.xpose.msra.mxu0 0
    %441 = vmatprep.subr.bf16.mxu0 0
    %442 = vmatpush1.bf16.xpose.msra.mxu0 0
    %443 = vmatprep.subr.bf16.mxu0 0
    %444 = vmatpush1.bf16.xpose.msra.mxu0 0
    %445 = vmatprep.subr.bf16.mxu0 0
    %446 = vmatpush1.bf16.xpose.msra.mxu0 0
    %447 = vmatprep.subr.bf16.mxu0 0
    %448 = vmatpush1.bf16.xpose.msra.mxu0 0
    %449 = vmatprep.subr.bf16.mxu0 0
    %450 = vmatpush1.bf16.xpose.msra.mxu0 0
    %451 = vmatprep.subr.bf16.mxu0 0
    %452 = vmatpush1.bf16.xpose.msra.mxu0 0
    %453 = vmatprep.mubr.bf16.mxu0 0
    %454 = vmatmul.mubr.bf16.gmra.mrb[0].mxu0 %v416
    %v455 = vpop.f32.mrb[0].mxu0
    %v456 = vadd.f32 %v314, %v455
    %v457 = vpop.f32.mrb[0].mxu0
    %v458 = vpop.f32.mrb[0].mxu0
    %v459 = vpop.f32.mrb[0].mxu0
    %460 = vdwg.mxu0
    %461 = vrot.lane.b32.xlu0 %v307, 96
    %v462 = vpop.permute.xlu0 %461
    %v464 = vsel %vm318, %v307, 0
    %v467 = vsel %vm318, %v462, 0
    %469 = vmatprep.subr.bf16.mxu0 0
    %470 = vmatpush1.bf16.xpose.msra.mxu0 %v467
    %471 = vmatprep.subr.bf16.mxu0 0
    %472 = vmatpush1.bf16.xpose.msra.mxu0 0
    %473 = vmatprep.subr.bf16.mxu0 0
    %474 = vmatpush1.bf16.xpose.msra.mxu0 0
    %475 = vmatprep.subr.bf16.mxu0 0
    %476 = vmatpush1.bf16.xpose.msra.mxu0 0
    %477 = vmatprep.subr.bf16.mxu0 0
    %478 = vmatpush1.bf16.xpose.msra.mxu0 0
    %479 = vmatprep.subr.bf16.mxu0 0
    %480 = vmatpush1.bf16.xpose.msra.mxu0 0
    %481 = vmatprep.subr.bf16.mxu0 0
    %482 = vmatpush1.bf16.xpose.msra.mxu0 0
    %483 = vmatprep.subr.bf16.mxu0 0
    %484 = vmatpush1.bf16.xpose.msra.mxu0 0
    %485 = vmatprep.subr.bf16.mxu0 0
    %486 = vmatpush1.bf16.xpose.msra.mxu0 0
    %487 = vmatprep.subr.bf16.mxu0 0
    %488 = vmatpush1.bf16.xpose.msra.mxu0 0
    %489 = vmatprep.subr.bf16.mxu0 0
    %490 = vmatpush1.bf16.xpose.msra.mxu0 0
    %491 = vmatprep.subr.bf16.mxu0 0
    %492 = vmatpush1.bf16.xpose.msra.mxu0 0
    %493 = vmatprep.subr.bf16.mxu0 0
    %494 = vmatpush1.bf16.xpose.msra.mxu0 0
    %495 = vmatprep.subr.bf16.mxu0 0
    %496 = vmatpush1.bf16.xpose.msra.mxu0 0
    %497 = vmatprep.subr.bf16.mxu0 0
    %498 = vmatpush1.bf16.xpose.msra.mxu0 0
    %499 = vmatprep.subr.bf16.mxu0 0
    %500 = vmatpush1.bf16.xpose.msra.mxu0 0
    %501 = vmatprep.mubr.bf16.mxu0 0
    %502 = vmatmul.mubr.bf16.gmra.mrb[0].mxu0 %v464
    %v503 = vpop.f32.mrb[0].mxu0
    %v504 = vadd.f32 %v315, %v503
    %v505 = vpop.f32.mrb[0].mxu0
    %v506 = vpop.f32.mrb[0].mxu0
    %v507 = vpop.f32.mrb[0].mxu0
    %508 = vdwg.mxu0
    %v509 = vsel %vm318, %v360, -inf
    %510 = vmax.xlane.f32.xlu0 %v509
    %v511 = vpop.xlane.xlu0 %510
    %v512 = vsel %vm318, %v408, -inf
    %513 = vmax.xlane.f32.xlu0 %v512
    %v514 = vpop.xlane.xlu0 %513
    %v515 = vsel %vm318, %v456, -inf
    %516 = vmax.xlane.f32.xlu0 %v515
    %v517 = vpop.xlane.xlu0 %516
    %v518 = vsel %vm318, %v504, -inf
    %519 = vmax.xlane.f32.xlu0 %v518
    %v520 = vpop.xlane.xlu0 %519
    %v521 = vsub.f32 %v360, %v511
    %v522 = vsub.f32 %v408, %v514
    %v523 = vsub.f32 %v456, %v517
    %v524 = vsub.f32 %v504, %v520
    %v525 = vmul.f32 %v521, 1.442695
    %v526 = vpow.pop %v525
    %v527 = vmul.f32 %v522, 1.442695
    %v528 = vpow.pop %v527
    %v529 = vmul.f32 %v523, 1.442695
    %v530 = vpow.pop %v529
    %v531 = vmul.f32 %v524, 1.442695
    %v532 = vpow.pop %v531
    %v533 = vsel %vm318, %v526, 0.0
    %534 = vadd.xlane.f32.xlu0 %v533
    %v535 = vpop.xlane.xlu0 %534
    %v536 = vsel %vm318, %v528, 0.0
    %537 = vadd.xlane.f32.xlu0 %v536
    %v538 = vpop.xlane.xlu0 %537
    %v539 = vsel %vm318, %v530, 0.0
    %540 = vadd.xlane.f32.xlu0 %v539
    %v541 = vpop.xlane.xlu0 %540
    %v542 = vsel %vm318, %v532, 0.0
    %543 = vadd.xlane.f32.xlu0 %v542
    %v544 = vpop.xlane.xlu0 %543
    %v545 = vrcp.pop %v535
    %v546 = vrcp.pop %v538
    %v547 = vrcp.pop %v541
    %v548 = vrcp.pop %v544
    %v549 = vmul.f32 %v526, %v545
    %v550 = vmul.f32 %v528, %v546
    %v551 = vmul.f32 %v530, %v547
    %v552 = vmul.f32 %v532, %v548
    %v553 = vpack.c.bf16 %v549, %v549
    %v554 = vpack.c.bf16 %v550, %v550
    %v555 = vpack.c.bf16 %v551, %v551
    %v556 = vpack.c.bf16 %v552, %v552
    %557 = vrot.lane.b32.xlu0 %v300, 64
    %v558 = vpop.permute.xlu0 %557
    %v560 = vsel %vm318, %v553, 0
    %vm562 = vcmask 1043456
    %v564 = vsel %vm562, %v558, 0
    %566 = vmatprep.subr.bf16.mxu0 0
    %567 = vmatpush1.bf16.msra.mxu0 %v564
    %568 = vmatprep.subr.bf16.mxu0 0
    %569 = vmatpush1.bf16.msra.mxu0 0
    %570 = vmatprep.subr.bf16.mxu0 0
    %571 = vmatpush1.bf16.msra.mxu0 0
    %572 = vmatprep.subr.bf16.mxu0 0
    %573 = vmatpush1.bf16.msra.mxu0 0
    %574 = vmatprep.subr.bf16.mxu0 0
    %575 = vmatpush1.bf16.msra.mxu0 0
    %576 = vmatprep.subr.bf16.mxu0 0
    %577 = vmatpush1.bf16.msra.mxu0 0
    %578 = vmatprep.subr.bf16.mxu0 0
    %579 = vmatpush1.bf16.msra.mxu0 0
    %580 = vmatprep.subr.bf16.mxu0 0
    %581 = vmatpush1.bf16.msra.mxu0 0
    %582 = vmatprep.subr.bf16.mxu0 0
    %583 = vmatpush1.bf16.msra.mxu0 0
    %584 = vmatprep.subr.bf16.mxu0 0
    %585 = vmatpush1.bf16.msra.mxu0 0
    %586 = vmatprep.subr.bf16.mxu0 0
    %587 = vmatpush1.bf16.msra.mxu0 0
    %588 = vmatprep.subr.bf16.mxu0 0
    %589 = vmatpush1.bf16.msra.mxu0 0
    %590 = vmatprep.subr.bf16.mxu0 0
    %591 = vmatpush1.bf16.msra.mxu0 0
    %592 = vmatprep.subr.bf16.mxu0 0
    %593 = vmatpush1.bf16.msra.mxu0 0
    %594 = vmatprep.subr.bf16.mxu0 0
    %595 = vmatpush1.bf16.msra.mxu0 0
    %596 = vmatprep.subr.bf16.mxu0 0
    %597 = vmatpush1.bf16.msra.mxu0 0
    %598 = vmatprep.mubr.bf16.mxu0 0
    %599 = vmatmul.mubr.bf16.gmra.mrb[0].mxu0 %v560
    %v600 = vpop.f32.mrb[0].mxu0
    %v601 = vadd.f32 0.0, %v600
    %v602 = vpop.f32.mrb[0].mxu0
    %v603 = vpop.f32.mrb[0].mxu0
    %v604 = vpop.f32.mrb[0].mxu0
    %605 = vdwg.mxu0
    %606 = vrot.lane.b32.xlu0 %v303, 64
    %v607 = vpop.permute.xlu0 %606
    %v609 = vsel %vm318, %v554, 0
    %v612 = vsel %vm562, %v607, 0
    %614 = vmatprep.subr.bf16.mxu0 0
    %615 = vmatpush1.bf16.msra.mxu0 %v612
    %616 = vmatprep.subr.bf16.mxu0 0
    %617 = vmatpush1.bf16.msra.mxu0 0
    %618 = vmatprep.subr.bf16.mxu0 0
    %619 = vmatpush1.bf16.msra.mxu0 0
    %620 = vmatprep.subr.bf16.mxu0 0
    %621 = vmatpush1.bf16.msra.mxu0 0
    %622 = vmatprep.subr.bf16.mxu0 0
    %623 = vmatpush1.bf16.msra.mxu0 0
    %624 = vmatprep.subr.bf16.mxu0 0
    %625 = vmatpush1.bf16.msra.mxu0 0
    %626 = vmatprep.subr.bf16.mxu0 0
    %627 = vmatpush1.bf16.msra.mxu0 0
    %628 = vmatprep.subr.bf16.mxu0 0
    %629 = vmatpush1.bf16.msra.mxu0 0
    %630 = vmatprep.subr.bf16.mxu0 0
    %631 = vmatpush1.bf16.msra.mxu0 0
    %632 = vmatprep.subr.bf16.mxu0 0
    %633 = vmatpush1.bf16.msra.mxu0 0
    %634 = vmatprep.subr.bf16.mxu0 0
    %635 = vmatpush1.bf16.msra.mxu0 0
    %636 = vmatprep.subr.bf16.mxu0 0
    %637 = vmatpush1.bf16.msra.mxu0 0
    %638 = vmatprep.subr.bf16.mxu0 0
    %639 = vmatpush1.bf16.msra.mxu0 0
    %640 = vmatprep.subr.bf16.mxu0 0
    %641 = vmatpush1.bf16.msra.mxu0 0
    %642 = vmatprep.subr.bf16.mxu0 0
    %643 = vmatpush1.bf16.msra.mxu0 0
    %644 = vmatprep.subr.bf16.mxu0 0
    %645 = vmatpush1.bf16.msra.mxu0 0
    %646 = vmatprep.mubr.bf16.mxu0 0
    %647 = vmatmul.mubr.bf16.gmra.mrb[0].mxu0 %v609
    %v648 = vpop.f32.mrb[0].mxu0
    %v649 = vadd.f32 0.0, %v648
    %v650 = vpop.f32.mrb[0].mxu0
    %v651 = vpop.f32.mrb[0].mxu0
    %v652 = vpop.f32.mrb[0].mxu0
    %653 = vdwg.mxu0
    %654 = vrot.lane.b32.xlu0 %v305, 64
    %v655 = vpop.permute.xlu0 %654
    %v657 = vsel %vm318, %v555, 0
    %v660 = vsel %vm562, %v655, 0
    %662 = vmatprep.subr.bf16.mxu0 0
    %663 = vmatpush1.bf16.msra.mxu0 %v660
    %664 = vmatprep.subr.bf16.mxu0 0
    %665 = vmatpush1.bf16.msra.mxu0 0
    %666 = vmatprep.subr.bf16.mxu0 0
    %667 = vmatpush1.bf16.msra.mxu0 0
    %668 = vmatprep.subr.bf16.mxu0 0
    %669 = vmatpush1.bf16.msra.mxu0 0
    %670 = vmatprep.subr.bf16.mxu0 0
    %671 = vmatpush1.bf16.msra.mxu0 0
    %672 = vmatprep.subr.bf16.mxu0 0
    %673 = vmatpush1.bf16.msra.mxu0 0
    %674 = vmatprep.subr.bf16.mxu0 0
    %675 = vmatpush1.bf16.msra.mxu0 0
    %676 = vmatprep.subr.bf16.mxu0 0
    %677 = vmatpush1.bf16.msra.mxu0 0
    %678 = vmatprep.subr.bf16.mxu0 0
    %679 = vmatpush1.bf16.msra.mxu0 0
    %680 = vmatprep.subr.bf16.mxu0 0
    %681 = vmatpush1.bf16.msra.mxu0 0
    %682 = vmatprep.subr.bf16.mxu0 0
    %683 = vmatpush1.bf16.msra.mxu0 0
    %684 = vmatprep.subr.bf16.mxu0 0
    %685 = vmatpush1.bf16.msra.mxu0 0
    %686 = vmatprep.subr.bf16.mxu0 0
    %687 = vmatpush1.bf16.msra.mxu0 0
    %688 = vmatprep.subr.bf16.mxu0 0
    %689 = vmatpush1.bf16.msra.mxu0 0
    %690 = vmatprep.subr.bf16.mxu0 0
    %691 = vmatpush1.bf16.msra.mxu0 0
    %692 = vmatprep.subr.bf16.mxu0 0
    %693 = vmatpush1.bf16.msra.mxu0 0
    %694 = vmatprep.mubr.bf16.mxu0 0
    %695 = vmatmul.mubr.bf16.gmra.mrb[0].mxu0 %v657
    %v696 = vpop.f32.mrb[0].mxu0
    %v697 = vadd.f32 0.0, %v696
    %v698 = vpop.f32.mrb[0].mxu0
    %v699 = vpop.f32.mrb[0].mxu0
    %v700 = vpop.f32.mrb[0].mxu0
    %701 = vdwg.mxu0
    %702 = vrot.lane.b32.xlu0 %v307, 64
    %v703 = vpop.permute.xlu0 %702
    %v705 = vsel %vm318, %v556, 0
    %v708 = vsel %vm562, %v703, 0
    %710 = vmatprep.subr.bf16.mxu0 0
    %711 = vmatpush1.bf16.msra.mxu0 %v708
    %712 = vmatprep.subr.bf16.mxu0 0
    %713 = vmatpush1.bf16.msra.mxu0 0
    %714 = vmatprep.subr.bf16.mxu0 0
    %715 = vmatpush1.bf16.msra.mxu0 0
    %716 = vmatprep.subr.bf16.mxu0 0
    %717 = vmatpush1.bf16.msra.mxu0 0
    %718 = vmatprep.subr.bf16.mxu0 0
    %719 = vmatpush1.bf16.msra.mxu0 0
    %720 = vmatprep.subr.bf16.mxu0 0
    %721 = vmatpush1.bf16.msra.mxu0 0
    %722 = vmatprep.subr.bf16.mxu0 0
    %723 = vmatpush1.bf16.msra.mxu0 0
    %724 = vmatprep.subr.bf16.mxu0 0
    %725 = vmatpush1.bf16.msra.mxu0 0
    %726 = vmatprep.subr.bf16.mxu0 0
    %727 = vmatpush1.bf16.msra.mxu0 0
    %728 = vmatprep.subr.bf16.mxu0 0
    %729 = vmatpush1.bf16.msra.mxu0 0
    %730 = vmatprep.subr.bf16.mxu0 0
    %731 = vmatpush1.bf16.msra.mxu0 0
    %732 = vmatprep.subr.bf16.mxu0 0
    %733 = vmatpush1.bf16.msra.mxu0 0
    %734 = vmatprep.subr.bf16.mxu0 0
    %735 = vmatpush1.bf16.msra.mxu0 0
    %736 = vmatprep.subr.bf16.mxu0 0
    %737 = vmatpush1.bf16.msra.mxu0 0
    %738 = vmatprep.subr.bf16.mxu0 0
    %739 = vmatpush1.bf16.msra.mxu0 0
    %740 = vmatprep.subr.bf16.mxu0 0
    %741 = vmatpush1.bf16.msra.mxu0 0
    %742 = vmatprep.mubr.bf16.mxu0 0
    %743 = vmatmul.mubr.bf16.gmra.mrb[0].mxu0 %v705
    %v744 = vpop.f32.mrb[0].mxu0
    %v745 = vadd.f32 0.0, %v744
    %v746 = vpop.f32.mrb[0].mxu0
    %v747 = vpop.f32.mrb[0].mxu0
    %v748 = vpop.f32.mrb[0].mxu0
    %749 = vdwg.mxu0
    %v750 = vpack.c.bf16 %v601, %v601
    %v751 = vpack.c.bf16 %v649, %v649
    %v752 = vpack.c.bf16 %v697, %v697
    %v753 = vpack.c.bf16 %v745, %v745
    %v754 = vld [vmem:[#allocation10] sm:$0xf]
    %s755 = scalar_lea.vmem [#allocation10], 4
    %v756 = vld [vmem:[%s755] sm:$0xf]
    %v758 = vsel %vm318, %v751, 0
    %v761 = vsel %vm562, %v756, 0
    %763 = vmatprep.subr.bf16.mxu0 0
    %764 = vmatpush1.bf16.msra.mxu0 %v761
    %765 = vmatprep.subr.bf16.mxu0 0
    %766 = vmatpush1.bf16.msra.mxu0 0
    %767 = vmatprep.subr.bf16.mxu0 0
    %768 = vmatpush1.bf16.msra.mxu0 0
    %769 = vmatprep.subr.bf16.mxu0 0
    %770 = vmatpush1.bf16.msra.mxu0 0
    %771 = vmatprep.subr.bf16.mxu0 0
    %772 = vmatpush1.bf16.msra.mxu0 0
    %773 = vmatprep.subr.bf16.mxu0 0
    %774 = vmatpush1.bf16.msra.mxu0 0
    %775 = vmatprep.subr.bf16.mxu0 0
    %776 = vmatpush1.bf16.msra.mxu0 0
    %777 = vmatprep.subr.bf16.mxu0 0
    %778 = vmatpush1.bf16.msra.mxu0 0
    %779 = vmatprep.subr.bf16.mxu0 0
    %780 = vmatpush1.bf16.msra.mxu0 0
    %781 = vmatprep.subr.bf16.mxu0 0
    %782 = vmatpush1.bf16.msra.mxu0 0
    %783 = vmatprep.subr.bf16.mxu0 0
    %784 = vmatpush1.bf16.msra.mxu0 0
    %785 = vmatprep.subr.bf16.mxu0 0
    %786 = vmatpush1.bf16.msra.mxu0 0
    %787 = vmatprep.subr.bf16.mxu0 0
    %788 = vmatpush1.bf16.msra.mxu0 0
    %789 = vmatprep.subr.bf16.mxu0 0
    %790 = vmatpush1.bf16.msra.mxu0 0
    %791 = vmatprep.subr.bf16.mxu0 0
    %792 = vmatpush1.bf16.msra.mxu0 0
    %793 = vmatprep.subr.bf16.mxu0 0
    %794 = vmatpush1.bf16.msra.mxu0 0
    %795 = vmatprep.mubr.bf16.mxu0 0
    %796 = vmatmul.mubr.bf16.gmra.mrb[0].mxu0 %v758
    %v797 = vpop.f32.mrb[0].mxu0
    %v798 = vadd.f32 0.0, %v797
    %v799 = vpop.f32.mrb[0].mxu0
    %v800 = vpop.f32.mrb[0].mxu0
    %v801 = vpop.f32.mrb[0].mxu0
    %802 = vdwg.mxu0
    %v804 = vsel %vm318, %v750, 0
    %v807 = vsel %vm562, %v754, 0
    %809 = vmatprep.subr.bf16.mxu0 0
    %810 = vmatpush1.bf16.msra.mxu0 %v807
    %811 = vmatprep.subr.bf16.mxu0 0
    %812 = vmatpush1.bf16.msra.mxu0 0
    %813 = vmatprep.subr.bf16.mxu0 0
    %814 = vmatpush1.bf16.msra.mxu0 0
    %815 = vmatprep.subr.bf16.mxu0 0
    %816 = vmatpush1.bf16.msra.mxu0 0
    %817 = vmatprep.subr.bf16.mxu0 0
    %818 = vmatpush1.bf16.msra.mxu0 0
    %819 = vmatprep.subr.bf16.mxu0 0
    %820 = vmatpush1.bf16.msra.mxu0 0
    %821 = vmatprep.subr.bf16.mxu0 0
    %822 = vmatpush1.bf16.msra.mxu0 0
    %823 = vmatprep.subr.bf16.mxu0 0
    %824 = vmatpush1.bf16.msra.mxu0 0
    %825 = vmatprep.subr.bf16.mxu0 0
    %826 = vmatpush1.bf16.msra.mxu0 0
    %827 = vmatprep.subr.bf16.mxu0 0
    %828 = vmatpush1.bf16.msra.mxu0 0
    %829 = vmatprep.subr.bf16.mxu0 0
    %830 = vmatpush1.bf16.msra.mxu0 0
    %831 = vmatprep.subr.bf16.mxu0 0
    %832 = vmatpush1.bf16.msra.mxu0 0
    %833 = vmatprep.subr.bf16.mxu0 0
    %834 = vmatpush1.bf16.msra.mxu0 0
    %835 = vmatprep.subr.bf16.mxu0 0
    %836 = vmatpush1.bf16.msra.mxu0 0
    %837 = vmatprep.subr.bf16.mxu0 0
    %838 = vmatpush1.bf16.msra.mxu0 0
    %839 = vmatprep.subr.bf16.mxu0 0
    %840 = vmatpush1.bf16.msra.mxu0 0
    %841 = vmatprep.mubr.bf16.mxu0 0
    %842 = vmatmul.mubr.bf16.gmra.mrb[0].mxu0 %v804
    %v843 = vpop.f32.mrb[0].mxu0
    %v844 = vadd.f32 %v798, %v843
    %v845 = vpop.f32.mrb[0].mxu0
    %v846 = vpop.f32.mrb[0].mxu0
    %v847 = vpop.f32.mrb[0].mxu0
    %848 = vdwg.mxu0
    %s849 = scalar_lea.vmem [#allocation10], 8
    %v850 = vld [vmem:[%s849] sm:$0xf]
    %v852 = vsel %vm318, %v752, 0
    %v855 = vsel %vm562, %v850, 0
    %857 = vmatprep.subr.bf16.mxu0 0
    %858 = vmatpush1.bf16.msra.mxu0 %v855
    %859 = vmatprep.subr.bf16.mxu0 0
    %860 = vmatpush1.bf16.msra.mxu0 0
    %861 = vmatprep.subr.bf16.mxu0 0
    %862 = vmatpush1.bf16.msra.mxu0 0
    %863 = vmatprep.subr.bf16.mxu0 0
    %864 = vmatpush1.bf16.msra.mxu0 0
    %865 = vmatprep.subr.bf16.mxu0 0
    %866 = vmatpush1.bf16.msra.mxu0 0
    %867 = vmatprep.subr.bf16.mxu0 0
    %868 = vmatpush1.bf16.msra.mxu0 0
    %869 = vmatprep.subr.bf16.mxu0 0
    %870 = vmatpush1.bf16.msra.mxu0 0
    %871 = vmatprep.subr.bf16.mxu0 0
    %872 = vmatpush1.bf16.msra.mxu0 0
    %873 = vmatprep.subr.bf16.mxu0 0
    %874 = vmatpush1.bf16.msra.mxu0 0
    %875 = vmatprep.subr.bf16.mxu0 0
    %876 = vmatpush1.bf16.msra.mxu0 0
    %877 = vmatprep.subr.bf16.mxu0 0
    %878 = vmatpush1.bf16.msra.mxu0 0
    %879 = vmatprep.subr.bf16.mxu0 0
    %880 = vmatpush1.bf16.msra.mxu0 0
    %881 = vmatprep.subr.bf16.mxu0 0
    %882 = vmatpush1.bf16.msra.mxu0 0
    %883 = vmatprep.subr.bf16.mxu0 0
    %884 = vmatpush1.bf16.msra.mxu0 0
    %885 = vmatprep.subr.bf16.mxu0 0
    %886 = vmatpush1.bf16.msra.mxu0 0
    %887 = vmatprep.subr.bf16.mxu0 0
    %888 = vmatpush1.bf16.msra.mxu0 0
    %889 = vmatprep.mubr.bf16.mxu0 0
    %890 = vmatmul.mubr.bf16.gmra.mrb[0].mxu0 %v852
    %v891 = vpop.f32.mrb[0].mxu0
    %v892 = vadd.f32 0.0, %v891
    %v893 = vpop.f32.mrb[0].mxu0
    %v894 = vpop.f32.mrb[0].mxu0
    %v895 = vpop.f32.mrb[0].mxu0
    %896 = vdwg.mxu0
    %v897 = vadd.f32 %v844, %v892
    %s898 = scalar_lea.vmem [#allocation10], 12
    %v899 = vld [vmem:[%s898] sm:$0xf]
    %v901 = vsel %vm318, %v753, 0
    %v904 = vsel %vm562, %v899, 0
    %906 = vmatprep.subr.bf16.mxu0 0
    %907 = vmatpush1.bf16.msra.mxu0 %v904
    %908 = vmatprep.subr.bf16.mxu0 0
    %909 = vmatpush1.bf16.msra.mxu0 0
    %910 = vmatprep.subr.bf16.mxu0 0
    %911 = vmatpush1.bf16.msra.mxu0 0
    %912 = vmatprep.subr.bf16.mxu0 0
    %913 = vmatpush1.bf16.msra.mxu0 0
    %914 = vmatprep.subr.bf16.mxu0 0
    %915 = vmatpush1.bf16.msra.mxu0 0
    %916 = vmatprep.subr.bf16.mxu0 0
    %917 = vmatpush1.bf16.msra.mxu0 0
    %918 = vmatprep.subr.bf16.mxu0 0
    %919 = vmatpush1.bf16.msra.mxu0 0
    %920 = vmatprep.subr.bf16.mxu0 0
    %921 = vmatpush1.bf16.msra.mxu0 0
    %922 = vmatprep.subr.bf16.mxu0 0
    %923 = vmatpush1.bf16.msra.mxu0 0
    %924 = vmatprep.subr.bf16.mxu0 0
    %925 = vmatpush1.bf16.msra.mxu0 0
    %926 = vmatprep.subr.bf16.mxu0 0
    %927 = vmatpush1.bf16.msra.mxu0 0
    %928 = vmatprep.subr.bf16.mxu0 0
    %929 = vmatpush1.bf16.msra.mxu0 0
    %930 = vmatprep.subr.bf16.mxu0 0
    %931 = vmatpush1.bf16.msra.mxu0 0
    %932 = vmatprep.subr.bf16.mxu0 0
    %933 = vmatpush1.bf16.msra.mxu0 0
    %934 = vmatprep.subr.bf16.mxu0 0
    %935 = vmatpush1.bf16.msra.mxu0 0
    %936 = vmatprep.subr.bf16.mxu0 0
    %937 = vmatpush1.bf16.msra.mxu0 0
    %938 = vmatprep.mubr.bf16.mxu0 0
    %939 = vmatmul.mubr.bf16.gmra.mrb[0].mxu0 %v901
    %v940 = vpop.f32.mrb[0].mxu0
    %v941 = vadd.f32 0.0, %v940
    %v942 = vpop.f32.mrb[0].mxu0
    %v943 = vpop.f32.mrb[0].mxu0
    %v944 = vpop.f32.mrb[0].mxu0
    %945 = vdwg.mxu0
    %v946 = vadd.f32 %v897, %v941
    %v947 = vrot.slane %v300, 4
    %948 = vrot.lane.b32.xlu0 %v947, 96
    %v949 = vpop.permute.xlu0 %948
    %v951 = vsel %vm318, %v947, 0
    %v954 = vsel %vm318, %v949, 0
    %956 = vmatprep.subr.bf16.mxu0 0
    %957 = vmatpush1.bf16.xpose.msra.mxu0 %v954
    %958 = vmatprep.subr.bf16.mxu0 0
    %959 = vmatpush1.bf16.xpose.msra.mxu0 0
    %960 = vmatprep.subr.bf16.mxu0 0
    %961 = vmatpush1.bf16.xpose.msra.mxu0 0
    %962 = vmatprep.subr.bf16.mxu0 0
    %963 = vmatpush1.bf16.xpose.msra.mxu0 0
    %964 = vmatprep.subr.bf16.mxu0 0
    %965 = vmatpush1.bf16.xpose.msra.mxu0 0
    %966 = vmatprep.subr.bf16.mxu0 0
    %967 = vmatpush1.bf16.xpose.msra.mxu0 0
    %968 = vmatprep.subr.bf16.mxu0 0
    %969 = vmatpush1.bf16.xpose.msra.mxu0 0
    %970 = vmatprep.subr.bf16.mxu0 0
    %971 = vmatpush1.bf16.xpose.msra.mxu0 0
    %972 = vmatprep.subr.bf16.mxu0 0
    %973 = vmatpush1.bf16.xpose.msra.mxu0 0
    %974 = vmatprep.subr.bf16.mxu0 0
    %975 = vmatpush1.bf16.xpose.msra.mxu0 0
    %976 = vmatprep.subr.bf16.mxu0 0
    %977 = vmatpush1.bf16.xpose.msra.mxu0 0
    %978 = vmatprep.subr.bf16.mxu0 0
    %979 = vmatpush1.bf16.xpose.msra.mxu0 0
    %980 = vmatprep.subr.bf16.mxu0 0
    %981 = vmatpush1.bf16.xpose.msra.mxu0 0
    %982 = vmatprep.subr.bf16.mxu0 0
    %983 = vmatpush1.bf16.xpose.msra.mxu0 0
    %984 = vmatprep.subr.bf16.mxu0 0
    %985 = vmatpush1.bf16.xpose.msra.mxu0 0
    %986 = vmatprep.subr.bf16.mxu0 0
    %987 = vmatpush1.bf16.xpose.msra.mxu0 0
    %988 = vmatprep.mubr.bf16.mxu0 0
    %989 = vmatmul.mubr.bf16.gmra.mrb[0].mxu0 %v951
    %v990 = vpop.f32.mrb[0].mxu0
    %v991 = vadd.f32 %v312, %v990
    %v992 = vpop.f32.mrb[0].mxu0
    %v993 = vpop.f32.mrb[0].mxu0
    %v994 = vpop.f32.mrb[0].mxu0
    %995 = vdwg.mxu0
    %v996 = vrot.slane %v303, 4
    %997 = vrot.lane.b32.xlu0 %v996, 96
    %v998 = vpop.permute.xlu0 %997
    %v1000 = vsel %vm318, %v996, 0
    %v1003 = vsel %vm318, %v998, 0
    %1005 = vmatprep.subr.bf16.mxu0 0
    %1006 = vmatpush1.bf16.xpose.msra.mxu0 %v1003
    %1007 = vmatprep.subr.bf16.mxu0 0
    %1008 = vmatpush1.bf16.xpose.msra.mxu0 0
    %1009 = vmatprep.subr.bf16.mxu0 0
    %1010 = vmatpush1.bf16.xpose.msra.mxu0 0
    %1011 = vmatprep.subr.bf16.mxu0 0
    %1012 = vmatpush1.bf16.xpose.msra.mxu0 0
    %1013 = vmatprep.subr.bf16.mxu0 0
    %1014 = vmatpush1.bf16.xpose.msra.mxu0 0
    %1015 = vmatprep.subr.bf16.mxu0 0
    %1016 = vmatpush1.bf16.xpose.msra.mxu0 0
    %1017 = vmatprep.subr.bf16.mxu0 0
    %1018 = vmatpush1.bf16.xpose.msra.mxu0 0
    %1019 = vmatprep.subr.bf16.mxu0 0
    %1020 = vmatpush1.bf16.xpose.msra.mxu0 0
    %1021 = vmatprep.subr.bf16.mxu0 0
    %1022 = vmatpush1.bf16.xpose.msra.mxu0 0
    %1023 = vmatprep.subr.bf16.mxu0 0
    %1024 = vmatpush1.bf16.xpose.msra.mxu0 0
    %1025 = vmatprep.subr.bf16.mxu0 0
    %1026 = vmatpush1.bf16.xpose.msra.mxu0 0
    %1027 = vmatprep.subr.bf16.mxu0 0
    %1028 = vmatpush1.bf16.xpose.msra.mxu0 0
    %1029 = vmatprep.subr.bf16.mxu0 0
    %1030 = vmatpush1.bf16.xpose.msra.mxu0 0
    %1031 = vmatprep.subr.bf16.mxu0 0
    %1032 = vmatpush1.bf16.xpose.msra.mxu0 0
    %1033 = vmatprep.subr.bf16.mxu0 0
    %1034 = vmatpush1.bf16.xpose.msra.mxu0 0
    %1035 = vmatprep.subr.bf16.mxu0 0
    %1036 = vmatpush1.bf16.xpose.msra.mxu0 0
    %1037 = vmatprep.mubr.bf16.mxu0 0
    %1038 = vmatmul.mubr.bf16.gmra.mrb[0].mxu0 %v1000
    %v1039 = vpop.f32.mrb[0].mxu0
    %v1040 = vadd.f32 %v313, %v1039
    %v1041 = vpop.f32.mrb[0].mxu0
    %v1042 = vpop.f32.mrb[0].mxu0
    %v1043 = vpop.f32.mrb[0].mxu0
    %1044 = vdwg.mxu0
    %v1045 = vrot.slane %v305, 4
    %1046 = vrot.lane.b32.xlu0 %v1045, 96
    %v1047 = vpop.permute.xlu0 %1046
    %v1049 = vsel %vm318, %v1045, 0
    %v1052 = vsel %vm318, %v1047, 0
    %1054 = vmatprep.subr.bf16.mxu0 0
    %1055 = vmatpush1.bf16.xpose.msra.mxu0 %v1052
    %1056 = vmatprep.subr.bf16.mxu0 0
    %1057 = vmatpush1.bf16.xpose.msra.mxu0 0
    %1058 = vmatprep.subr.bf16.mxu0 0
    %1059 = vmatpush1.bf16.xpose.msra.mxu0 0
    %1060 = vmatprep.subr.bf16.mxu0 0
    %1061 = vmatpush1.bf16.xpose.msra.mxu0 0
    %1062 = vmatprep.subr.bf16.mxu0 0
    %1063 = vmatpush1.bf16.xpose.msra.mxu0 0
    %1064 = vmatprep.subr.bf16.mxu0 0
    %1065 = vmatpush1.bf16.xpose.msra.mxu0 0
    %1066 = vmatprep.subr.bf16.mxu0 0
    %1067 = vmatpush1.bf16.xpose.msra.mxu0 0
    %1068 = vmatprep.subr.bf16.mxu0 0
    %1069 = vmatpush1.bf16.xpose.msra.mxu0 0
    %1070 = vmatprep.subr.bf16.mxu0 0
    %1071 = vmatpush1.bf16.xpose.msra.mxu0 0
    %1072 = vmatprep.subr.bf16.mxu0 0
    %1073 = vmatpush1.bf16.xpose.msra.mxu0 0
    %1074 = vmatprep.subr.bf16.mxu0 0
    %1075 = vmatpush1.bf16.xpose.msra.mxu0 0
    %1076 = vmatprep.subr.bf16.mxu0 0
    %1077 = vmatpush1.bf16.xpose.msra.mxu0 0
    %1078 = vmatprep.subr.bf16.mxu0 0
    %1079 = vmatpush1.bf16.xpose.msra.mxu0 0
    %1080 = vmatprep.subr.bf16.mxu0 0
    %1081 = vmatpush1.bf16.xpose.msra.mxu0 0
    %1082 = vmatprep.subr.bf16.mxu0 0
    %1083 = vmatpush1.bf16.xpose.msra.mxu0 0
    %1084 = vmatprep.subr.bf16.mxu0 0
    %1085 = vmatpush1.bf16.xpose.msra.mxu0 0
    %1086 = vmatprep.mubr.bf16.mxu0 0
    %1087 = vmatmul.mubr.bf16.gmra.mrb[0].mxu0 %v1049
    %v1088 = vpop.f32.mrb[0].mxu0
    %v1089 = vadd.f32 %v314, %v1088
    %v1090 = vpop.f32.mrb[0].mxu0
    %v1091 = vpop.f32.mrb[0].mxu0
    %v1092 = vpop.f32.mrb[0].mxu0
    %1093 = vdwg.mxu0
    %v1094 = vrot.slane %v307, 4
    %1095 = vrot.lane.b32.xlu0 %v1094, 96
    %v1096 = vpop.permute.xlu0 %1095
    %v1098 = vsel %vm318, %v1094, 0
    %v1101 = vsel %vm318, %v1096, 0
    %1103 = vmatprep.subr.bf16.mxu0 0
    %1104 = vmatpush1.bf16.xpose.msra.mxu0 %v1101
    %1105 = vmatprep.subr.bf16.mxu0 0
    %1106 = vmatpush1.bf16.xpose.msra.mxu0 0
    %1107 = vmatprep.subr.bf16.mxu0 0
    %1108 = vmatpush1.bf16.xpose.msra.mxu0 0
    %1109 = vmatprep.subr.bf16.mxu0 0
    %1110 = vmatpush1.bf16.xpose.msra.mxu0 0
    %1111 = vmatprep.subr.bf16.mxu0 0
    %1112 = vmatpush1.bf16.xpose.msra.mxu0 0
    %1113 = vmatprep.subr.bf16.mxu0 0
    %1114 = vmatpush1.bf16.xpose.msra.mxu0 0
    %1115 = vmatprep.subr.bf16.mxu0 0
    %1116 = vmatpush1.bf16.xpose.msra.mxu0 0
    %1117 = vmatprep.subr.bf16.mxu0 0
    %1118 = vmatpush1.bf16.xpose.msra.mxu0 0
    %1119 = vmatprep.subr.bf16.mxu0 0
    %1120 = vmatpush1.bf16.xpose.msra.mxu0 0
    %1121 = vmatprep.subr.bf16.mxu0 0
    %1122 = vmatpush1.bf16.xpose.msra.mxu0 0
    %1123 = vmatprep.subr.bf16.mxu0 0
    %1124 = vmatpush1.bf16.xpose.msra.mxu0 0
    %1125 = vmatprep.subr.bf16.mxu0 0
    %1126 = vmatpush1.bf16.xpose.msra.mxu0 0
    %1127 = vmatprep.subr.bf16.mxu0 0
    %1128 = vmatpush1.bf16.xpose.msra.mxu0 0
    %1129 = vmatprep.subr.bf16.mxu0 0
    %1130 = vmatpush1.bf16.xpose.msra.mxu0 0
    %1131 = vmatprep.subr.bf16.mxu0 0
    %1132 = vmatpush1.bf16.xpose.msra.mxu0 0
    %1133 = vmatprep.subr.bf16.mxu0 0
    %1134 = vmatpush1.bf16.xpose.msra.mxu0 0
    %1135 = vmatprep.mubr.bf16.mxu0 0
    %1136 = vmatmul.mubr.bf16.gmra.mrb[0].mxu0 %v1098
    %v1137 = vpop.f32.mrb[0].mxu0
    %v1138 = vadd.f32 %v315, %v1137
    %v1139 = vpop.f32.mrb[0].mxu0
    %v1140 = vpop.f32.mrb[0].mxu0
    %v1141 = vpop.f32.mrb[0].mxu0
    %1142 = vdwg.mxu0
    %v1143 = vsel %vm318, %v991, -inf
    %1144 = vmax.xlane.f32.xlu0 %v1143
    %v1145 = vpop.xlane.xlu0 %1144
    %v1146 = vsel %vm318, %v1040, -inf
    %1147 = vmax.xlane.f32.xlu0 %v1146
    %v1148 = vpop.xlane.xlu0 %1147
    %v1149 = vsel %vm318, %v1089, -inf
    %1150 = vmax.xlane.f32.xlu0 %v1149
    %v1151 = vpop.xlane.xlu0 %1150
    %v1152 = vsel %vm318, %v1138, -inf
    %1153 = vmax.xlane.f32.xlu0 %v1152
    %v1154 = vpop.xlane.xlu0 %1153
    %v1155 = vsub.f32 %v991, %v1145
    %v1156 = vsub.f32 %v1040, %v1148
    %v1157 = vsub.f32 %v1089, %v1151
    %v1158 = vsub.f32 %v1138, %v1154
    %v1159 = vmul.f32 %v1155, 1.442695
    %v1160 = vpow.pop %v1159
    %v1161 = vmul.f32 %v1156, 1.442695
    %v1162 = vpow.pop %v1161
    %v1163 = vmul.f32 %v1157, 1.442695
    %v1164 = vpow.pop %v1163
    %v1165 = vmul.f32 %v1158, 1.442695
    %v1166 = vpow.pop %v1165
    %v1167 = vsel %vm318, %v1160, 0.0
    %1168 = vadd.xlane.f32.xlu0 %v1167
    %v1169 = vpop.xlane.xlu0 %1168
    %v1170 = vsel %vm318, %v1162, 0.0
    %1171 = vadd.xlane.f32.xlu0 %v1170
    %v1172 = vpop.xlane.xlu0 %1171
    %v1173 = vsel %vm318, %v1164, 0.0
    %1174 = vadd.xlane.f32.xlu0 %v1173
    %v1175 = vpop.xlane.xlu0 %1174
    %v1176 = vsel %vm318, %v1166, 0.0
    %1177 = vadd.xlane.f32.xlu0 %v1176
    %v1178 = vpop.xlane.xlu0 %1177
    %v1179 = vrcp.pop %v1169
    %v1180 = vrcp.pop %v1172
    %v1181 = vrcp.pop %v1175
    %v1182 = vrcp.pop %v1178
    %v1183 = vmul.f32 %v1160, %v1179
    %v1184 = vmul.f32 %v1162, %v1180
    %v1185 = vmul.f32 %v1164, %v1181
    %v1186 = vmul.f32 %v1166, %v1182
    %v1187 = vpack.c.bf16 %v1183, %v1183
    %v1188 = vpack.c.bf16 %v1184, %v1184
    %v1189 = vpack.c.bf16 %v1185, %v1185
    %v1190 = vpack.c.bf16 %v1186, %v1186
    %1191 = vrot.lane.b32.xlu0 %v947, 64
    %v1192 = vpop.permute.xlu0 %1191
    %v1194 = vsel %vm318, %v1187, 0
    %v1197 = vsel %vm562, %v1192, 0
    %1199 = vmatprep.subr.bf16.mxu0 0
    %1200 = vmatpush1.bf16.msra.mxu0 %v1197
    %1201 = vmatprep.subr.bf16.mxu0 0
    %1202 = vmatpush1.bf16.msra.mxu0 0
    %1203 = vmatprep.subr.bf16.mxu0 0
    %1204 = vmatpush1.bf16.msra.mxu0 0
    %1205 = vmatprep.subr.bf16.mxu0 0
    %1206 = vmatpush1.bf16.msra.mxu0 0
    %1207 = vmatprep.subr.bf16.mxu0 0
    %1208 = vmatpush1.bf16.msra.mxu0 0
    %1209 = vmatprep.subr.bf16.mxu0 0
    %1210 = vmatpush1.bf16.msra.mxu0 0
    %1211 = vmatprep.subr.bf16.mxu0 0
    %1212 = vmatpush1.bf16.msra.mxu0 0
    %1213 = vmatprep.subr.bf16.mxu0 0
    %1214 = vmatpush1.bf16.msra.mxu0 0
    %1215 = vmatprep.subr.bf16.mxu0 0
    %1216 = vmatpush1.bf16.msra.mxu0 0
    %1217 = vmatprep.subr.bf16.mxu0 0
    %1218 = vmatpush1.bf16.msra.mxu0 0
    %1219 = vmatprep.subr.bf16.mxu0 0
    %1220 = vmatpush1.bf16.msra.mxu0 0
    %1221 = vmatprep.subr.bf16.mxu0 0
    %1222 = vmatpush1.bf16.msra.mxu0 0
    %1223 = vmatprep.subr.bf16.mxu0 0
    %1224 = vmatpush1.bf16.msra.mxu0 0
    %1225 = vmatprep.subr.bf16.mxu0 0
    %1226 = vmatpush1.bf16.msra.mxu0 0
    %1227 = vmatprep.subr.bf16.mxu0 0
    %1228 = vmatpush1.bf16.msra.mxu0 0
    %1229 = vmatprep.subr.bf16.mxu0 0
    %1230 = vmatpush1.bf16.msra.mxu0 0
    %1231 = vmatprep.mubr.bf16.mxu0 0
    %1232 = vmatmul.mubr.bf16.gmra.mrb[0].mxu0 %v1194
    %v1233 = vpop.f32.mrb[0].mxu0
    %v1234 = vadd.f32 0.0, %v1233
    %v1235 = vpop.f32.mrb[0].mxu0
    %v1236 = vpop.f32.mrb[0].mxu0
    %v1237 = vpop.f32.mrb[0].mxu0
    %1238 = vdwg.mxu0
    %1239 = vrot.lane.b32.xlu0 %v996, 64
    %v1240 = vpop.permute.xlu0 %1239
    %v1242 = vsel %vm318, %v1188, 0
    %v1245 = vsel %vm562, %v1240, 0
    %1247 = vmatprep.subr.bf16.mxu0 0
    %1248 = vmatpush1.bf16.msra.mxu0 %v1245
    %1249 = vmatprep.subr.bf16.mxu0 0
    %1250 = vmatpush1.bf16.msra.mxu0 0
    %1251 = vmatprep.subr.bf16.mxu0 0
    %1252 = vmatpush1.bf16.msra.mxu0 0
    %1253 = vmatprep.subr.bf16.mxu0 0
    %1254 = vmatpush1.bf16.msra.mxu0 0
    %1255 = vmatprep.subr.bf16.mxu0 0
    %1256 = vmatpush1.bf16.msra.mxu0 0
    %1257 = vmatprep.subr.bf16.mxu0 0
    %1258 = vmatpush1.bf16.msra.mxu0 0
    %1259 = vmatprep.subr.bf16.mxu0 0
    %1260 = vmatpush1.bf16.msra.mxu0 0
    %1261 = vmatprep.subr.bf16.mxu0 0
    %1262 = vmatpush1.bf16.msra.mxu0 0
    %1263 = vmatprep.subr.bf16.mxu0 0
    %1264 = vmatpush1.bf16.msra.mxu0 0
    %1265 = vmatprep.subr.bf16.mxu0 0
    %1266 = vmatpush1.bf16.msra.mxu0 0
    %1267 = vmatprep.subr.bf16.mxu0 0
    %1268 = vmatpush1.bf16.msra.mxu0 0
    %1269 = vmatprep.subr.bf16.mxu0 0
    %1270 = vmatpush1.bf16.msra.mxu0 0
    %1271 = vmatprep.subr.bf16.mxu0 0
    %1272 = vmatpush1.bf16.msra.mxu0 0
    %1273 = vmatprep.subr.bf16.mxu0 0
    %1274 = vmatpush1.bf16.msra.mxu0 0
    %1275 = vmatprep.subr.bf16.mxu0 0
    %1276 = vmatpush1.bf16.msra.mxu0 0
    %1277 = vmatprep.subr.bf16.mxu0 0
    %1278 = vmatpush1.bf16.msra.mxu0 0
    %1279 = vmatprep.mubr.bf16.mxu0 0
    %1280 = vmatmul.mubr.bf16.gmra.mrb[0].mxu0 %v1242
    %v1281 = vpop.f32.mrb[0].mxu0
    %v1282 = vadd.f32 0.0, %v1281
    %v1283 = vpop.f32.mrb[0].mxu0
    %v1284 = vpop.f32.mrb[0].mxu0
    %v1285 = vpop.f32.mrb[0].mxu0
    %1286 = vdwg.mxu0
    %1287 = vrot.lane.b32.xlu0 %v1045, 64
    %v1288 = vpop.permute.xlu0 %1287
    %v1290 = vsel %vm318, %v1189, 0
    %v1293 = vsel %vm562, %v1288, 0
    %1295 = vmatprep.subr.bf16.mxu0 0
    %1296 = vmatpush1.bf16.msra.mxu0 %v1293
    %1297 = vmatprep.subr.bf16.mxu0 0
    %1298 = vmatpush1.bf16.msra.mxu0 0
    %1299 = vmatprep.subr.bf16.mxu0 0
    %1300 = vmatpush1.bf16.msra.mxu0 0
    %1301 = vmatprep.subr.bf16.mxu0 0
    %1302 = vmatpush1.bf16.msra.mxu0 0
    %1303 = vmatprep.subr.bf16.mxu0 0
    %1304 = vmatpush1.bf16.msra.mxu0 0
    %1305 = vmatprep.subr.bf16.mxu0 0
    %1306 = vmatpush1.bf16.msra.mxu0 0
    %1307 = vmatprep.subr.bf16.mxu0 0
    %1308 = vmatpush1.bf16.msra.mxu0 0
    %1309 = vmatprep.subr.bf16.mxu0 0
    %1310 = vmatpush1.bf16.msra.mxu0 0
    %1311 = vmatprep.subr.bf16.mxu0 0
    %1312 = vmatpush1.bf16.msra.mxu0 0
    %1313 = vmatprep.subr.bf16.mxu0 0
    %1314 = vmatpush1.bf16.msra.mxu0 0
    %1315 = vmatprep.subr.bf16.mxu0 0
    %1316 = vmatpush1.bf16.msra.mxu0 0
    %1317 = vmatprep.subr.bf16.mxu0 0
    %1318 = vmatpush1.bf16.msra.mxu0 0
    %1319 = vmatprep.subr.bf16.mxu0 0
    %1320 = vmatpush1.bf16.msra.mxu0 0
    %1321 = vmatprep.subr.bf16.mxu0 0
    %1322 = vmatpush1.bf16.msra.mxu0 0
    %1323 = vmatprep.subr.bf16.mxu0 0
    %1324 = vmatpush1.bf16.msra.mxu0 0
    %1325 = vmatprep.subr.bf16.mxu0 0
    %1326 = vmatpush1.bf16.msra.mxu0 0
    %1327 = vmatprep.mubr.bf16.mxu0 0
    %1328 = vmatmul.mubr.bf16.gmra.mrb[0].mxu0 %v1290
    %v1329 = vpop.f32.mrb[0].mxu0
    %v1330 = vadd.f32 0.0, %v1329
    %v1331 = vpop.f32.mrb[0].mxu0
    %v1332 = vpop.f32.mrb[0].mxu0
    %v1333 = vpop.f32.mrb[0].mxu0
    %1334 = vdwg.mxu0
    %1335 = vrot.lane.b32.xlu0 %v1094, 64
    %v1336 = vpop.permute.xlu0 %1335
    %v1338 = vsel %vm318, %v1190, 0
    %v1341 = vsel %vm562, %v1336, 0
    %1343 = vmatprep.subr.bf16.mxu0 0
    %1344 = vmatpush1.bf16.msra.mxu0 %v1341
    %1345 = vmatprep.subr.bf16.mxu0 0
    %1346 = vmatpush1.bf16.msra.mxu0 0
    %1347 = vmatprep.subr.bf16.mxu0 0
    %1348 = vmatpush1.bf16.msra.mxu0 0
    %1349 = vmatprep.subr.bf16.mxu0 0
    %1350 = vmatpush1.bf16.msra.mxu0 0
    %1351 = vmatprep.subr.bf16.mxu0 0
    %1352 = vmatpush1.bf16.msra.mxu0 0
    %1353 = vmatprep.subr.bf16.mxu0 0
    %1354 = vmatpush1.bf16.msra.mxu0 0
    %1355 = vmatprep.subr.bf16.mxu0 0
    %1356 = vmatpush1.bf16.msra.mxu0 0
    %1357 = vmatprep.subr.bf16.mxu0 0
    %1358 = vmatpush1.bf16.msra.mxu0 0
    %1359 = vmatprep.subr.bf16.mxu0 0
    %1360 = vmatpush1.bf16.msra.mxu0 0
    %1361 = vmatprep.subr.bf16.mxu0 0
    %1362 = vmatpush1.bf16.msra.mxu0 0
    %1363 = vmatprep.subr.bf16.mxu0 0
    %1364 = vmatpush1.bf16.msra.mxu0 0
    %1365 = vmatprep.subr.bf16.mxu0 0
    %1366 = vmatpush1.bf16.msra.mxu0 0
    %1367 = vmatprep.subr.bf16.mxu0 0
    %1368 = vmatpush1.bf16.msra.mxu0 0
    %1369 = vmatprep.subr.bf16.mxu0 0
    %1370 = vmatpush1.bf16.msra.mxu0 0
    %1371 = vmatprep.subr.bf16.mxu0 0
    %1372 = vmatpush1.bf16.msra.mxu0 0
    %1373 = vmatprep.subr.bf16.mxu0 0
    %1374 = vmatpush1.bf16.msra.mxu0 0
    %1375 = vmatprep.mubr.bf16.mxu0 0
    %1376 = vmatmul.mubr.bf16.gmra.mrb[0].mxu0 %v1338
    %v1377 = vpop.f32.mrb[0].mxu0
    %v1378 = vadd.f32 0.0, %v1377
    %v1379 = vpop.f32.mrb[0].mxu0
    %v1380 = vpop.f32.mrb[0].mxu0
    %v1381 = vpop.f32.mrb[0].mxu0
    %1382 = vdwg.mxu0
    %v1383 = vpack.c.bf16 %v1234, %v1234
    %v1384 = vpack.c.bf16 %v1282, %v1282
    %v1385 = vpack.c.bf16 %v1330, %v1330
    %v1386 = vpack.c.bf16 %v1378, %v1378
    %v1387 = vld [vmem:[#allocation10] sm:$0xf]
    %v1388 = vld [vmem:[%s755] sm:$0xf]
    %v1390 = vsel %vm318, %v1384, 0
    %v1393 = vsel %vm562, %v1388, 0
    %1395 = vmatprep.subr.bf16.mxu0 0
    %1396 = vmatpush1.bf16.msra.mxu0 %v1393
    %1397 = vmatprep.subr.bf16.mxu0 0
    %1398 = vmatpush1.bf16.msra.mxu0 0
    %1399 = vmatprep.subr.bf16.mxu0 0
    %1400 = vmatpush1.bf16.msra.mxu0 0
    %1401 = vmatprep.subr.bf16.mxu0 0
    %1402 = vmatpush1.bf16.msra.mxu0 0
    %1403 = vmatprep.subr.bf16.mxu0 0
    %1404 = vmatpush1.bf16.msra.mxu0 0
    %1405 = vmatprep.subr.bf16.mxu0 0
    %1406 = vmatpush1.bf16.msra.mxu0 0
    %1407 = vmatprep.subr.bf16.mxu0 0
    %1408 = vmatpush1.bf16.msra.mxu0 0
    %1409 = vmatprep.subr.bf16.mxu0 0
    %1410 = vmatpush1.bf16.msra.mxu0 0
    %1411 = vmatprep.subr.bf16.mxu0 0
    %1412 = vmatpush1.bf16.msra.mxu0 0
    %1413 = vmatprep.subr.bf16.mxu0 0
    %1414 = vmatpush1.bf16.msra.mxu0 0
    %1415 = vmatprep.subr.bf16.mxu0 0
    %1416 = vmatpush1.bf16.msra.mxu0 0
    %1417 = vmatprep.subr.bf16.mxu0 0
    %1418 = vmatpush1.bf16.msra.mxu0 0
    %1419 = vmatprep.subr.bf16.mxu0 0
    %1420 = vmatpush1.bf16.msra.mxu0 0
    %1421 = vmatprep.subr.bf16.mxu0 0
    %1422 = vmatpush1.bf16.msra.mxu0 0
    %1423 = vmatprep.subr.bf16.mxu0 0
    %1424 = vmatpush1.bf16.msra.mxu0 0
    %1425 = vmatprep.subr.bf16.mxu0 0
    %1426 = vmatpush1.bf16.msra.mxu0 0
    %1427 = vmatprep.mubr.bf16.mxu0 0
    %1428 = vmatmul.mubr.bf16.gmra.mrb[0].mxu0 %v1390
    %v1429 = vpop.f32.mrb[0].mxu0
    %v1430 = vadd.f32 0.0, %v1429
    %v1431 = vpop.f32.mrb[0].mxu0
    %v1432 = vpop.f32.mrb[0].mxu0
    %v1433 = vpop.f32.mrb[0].mxu0
    %1434 = vdwg.mxu0
    %v1436 = vsel %vm318, %v1383, 0
    %v1439 = vsel %vm562, %v1387, 0
    %1441 = vmatprep.subr.bf16.mxu0 0
    %1442 = vmatpush1.bf16.msra.mxu0 %v1439
    %1443 = vmatprep.subr.bf16.mxu0 0
    %1444 = vmatpush1.bf16.msra.mxu0 0
    %1445 = vmatprep.subr.bf16.mxu0 0
    %1446 = vmatpush1.bf16.msra.mxu0 0
    %1447 = vmatprep.subr.bf16.mxu0 0
    %1448 = vmatpush1.bf16.msra.mxu0 0
    %1449 = vmatprep.subr.bf16.mxu0 0
    %1450 = vmatpush1.bf16.msra.mxu0 0
    %1451 = vmatprep.subr.bf16.mxu0 0
    %1452 = vmatpush1.bf16.msra.mxu0 0
    %1453 = vmatprep.subr.bf16.mxu0 0
    %1454 = vmatpush1.bf16.msra.mxu0 0
    %1455 = vmatprep.subr.bf16.mxu0 0
    %1456 = vmatpush1.bf16.msra.mxu0 0
    %1457 = vmatprep.subr.bf16.mxu0 0
    %1458 = vmatpush1.bf16.msra.mxu0 0
    %1459 = vmatprep.subr.bf16.mxu0 0
    %1460 = vmatpush1.bf16.msra.mxu0 0
    %1461 = vmatprep.subr.bf16.mxu0 0
    %1462 = vmatpush1.bf16.msra.mxu0 0
    %1463 = vmatprep.subr.bf16.mxu0 0
    %1464 = vmatpush1.bf16.msra.mxu0 0
    %1465 = vmatprep.subr.bf16.mxu0 0
    %1466 = vmatpush1.bf16.msra.mxu0 0
    %1467 = vmatprep.subr.bf16.mxu0 0
    %1468 = vmatpush1.bf16.msra.mxu0 0
    %1469 = vmatprep.subr.bf16.mxu0 0
    %1470 = vmatpush1.bf16.msra.mxu0 0
    %1471 = vmatprep.subr.bf16.mxu0 0
    %1472 = vmatpush1.bf16.msra.mxu0 0
    %1473 = vmatprep.mubr.bf16.mxu0 0
    %1474 = vmatmul.mubr.bf16.gmra.mrb[0].mxu0 %v1436
    %v1475 = vpop.f32.mrb[0].mxu0
    %v1476 = vadd.f32 %v1430, %v1475
    %v1477 = vpop.f32.mrb[0].mxu0
    %v1478 = vpop.f32.mrb[0].mxu0
    %v1479 = vpop.f32.mrb[0].mxu0
    %1480 = vdwg.mxu0
    %v1481 = vld [vmem:[%s849] sm:$0xf]
    %v1483 = vsel %vm318, %v1385, 0
    %v1486 = vsel %vm562, %v1481, 0
    %1488 = vmatprep.subr.bf16.mxu0 0
    %1489 = vmatpush1.bf16.msra.mxu0 %v1486
    %1490 = vmatprep.subr.bf16.mxu0 0
    %1491 = vmatpush1.bf16.msra.mxu0 0
    %1492 = vmatprep.subr.bf16.mxu0 0
    %1493 = vmatpush1.bf16.msra.mxu0 0
    %1494 = vmatprep.subr.bf16.mxu0 0
    %1495 = vmatpush1.bf16.msra.mxu0 0
    %1496 = vmatprep.subr.bf16.mxu0 0
    %1497 = vmatpush1.bf16.msra.mxu0 0
    %1498 = vmatprep.subr.bf16.mxu0 0
    %1499 = vmatpush1.bf16.msra.mxu0 0
    %1500 = vmatprep.subr.bf16.mxu0 0
    %1501 = vmatpush1.bf16.msra.mxu0 0
    %1502 = vmatprep.subr.bf16.mxu0 0
    %1503 = vmatpush1.bf16.msra.mxu0 0
    %1504 = vmatprep.subr.bf16.mxu0 0
    %1505 = vmatpush1.bf16.msra.mxu0 0
    %1506 = vmatprep.subr.bf16.mxu0 0
    %1507 = vmatpush1.bf16.msra.mxu0 0
    %1508 = vmatprep.subr.bf16.mxu0 0
    %1509 = vmatpush1.bf16.msra.mxu0 0
    %1510 = vmatprep.subr.bf16.mxu0 0
    %1511 = vmatpush1.bf16.msra.mxu0 0
    %1512 = vmatprep.subr.bf16.mxu0 0
    %1513 = vmatpush1.bf16.msra.mxu0 0
    %1514 = vmatprep.subr.bf16.mxu0 0
    %1515 = vmatpush1.bf16.msra.mxu0 0
    %1516 = vmatprep.subr.bf16.mxu0 0
    %1517 = vmatpush1.bf16.msra.mxu0 0
    %1518 = vmatprep.subr.bf16.mxu0 0
    %1519 = vmatpush1.bf16.msra.mxu0 0
    %1520 = vmatprep.mubr.bf16.mxu0 0
    %1521 = vmatmul.mubr.bf16.gmra.mrb[0].mxu0 %v1483
    %v1522 = vpop.f32.mrb[0].mxu0
    %v1523 = vadd.f32 0.0, %v1522
    %v1524 = vpop.f32.mrb[0].mxu0
    %v1525 = vpop.f32.mrb[0].mxu0
    %v1526 = vpop.f32.mrb[0].mxu0
    %1527 = vdwg.mxu0
    %v1528 = vadd.f32 %v1476, %v1523
    %v1529 = vld [vmem:[%s898] sm:$0xf]
    %v1531 = vsel %vm318, %v1386, 0
    %v1534 = vsel %vm562, %v1529, 0
    %1536 = vmatprep.subr.bf16.mxu0 0
    %1537 = vmatpush1.bf16.msra.mxu0 %v1534
    %1538 = vmatprep.subr.bf16.mxu0 0
    %1539 = vmatpush1.bf16.msra.mxu0 0
    %1540 = vmatprep.subr.bf16.mxu0 0
    %1541 = vmatpush1.bf16.msra.mxu0 0
    %1542 = vmatprep.subr.bf16.mxu0 0
    %1543 = vmatpush1.bf16.msra.mxu0 0
    %1544 = vmatprep.subr.bf16.mxu0 0
    %1545 = vmatpush1.bf16.msra.mxu0 0
    %1546 = vmatprep.subr.bf16.mxu0 0
    %1547 = vmatpush1.bf16.msra.mxu0 0
    %1548 = vmatprep.subr.bf16.mxu0 0
    %1549 = vmatpush1.bf16.msra.mxu0 0
    %1550 = vmatprep.subr.bf16.mxu0 0
    %1551 = vmatpush1.bf16.msra.mxu0 0
    %1552 = vmatprep.subr.bf16.mxu0 0
    %1553 = vmatpush1.bf16.msra.mxu0 0
    %1554 = vmatprep.subr.bf16.mxu0 0
    %1555 = vmatpush1.bf16.msra.mxu0 0
    %1556 = vmatprep.subr.bf16.mxu0 0
    %1557 = vmatpush1.bf16.msra.mxu0 0
    %1558 = vmatprep.subr.bf16.mxu0 0
    %1559 = vmatpush1.bf16.msra.mxu0 0
    %1560 = vmatprep.subr.bf16.mxu0 0
    %1561 = vmatpush1.bf16.msra.mxu0 0
    %1562 = vmatprep.subr.bf16.mxu0 0
    %1563 = vmatpush1.bf16.msra.mxu0 0
    %1564 = vmatprep.subr.bf16.mxu0 0
    %1565 = vmatpush1.bf16.msra.mxu0 0
    %1566 = vmatprep.subr.bf16.mxu0 0
    %1567 = vmatpush1.bf16.msra.mxu0 0
    %1568 = vmatprep.mubr.bf16.mxu0 0
    %1569 = vmatmul.mubr.bf16.gmra.mrb[0].mxu0 %v1531
    %v1570 = vpop.f32.mrb[0].mxu0
    %v1571 = vadd.f32 0.0, %v1570
    %v1572 = vpop.f32.mrb[0].mxu0
    %v1573 = vpop.f32.mrb[0].mxu0
    %v1574 = vpop.f32.mrb[0].mxu0
    %1575 = vdwg.mxu0
    %v1576 = vadd.f32 %v1528, %v1571
    %v1577 = vld [vmem:[#allocation11] sm:$0x1]
    %v1579 = vlaneseq
    %v1580 = vshrl.u32 %v1579, 7
    %v1581 = vsub.s32 0, %v1580
    %v1582 = vrot.slane %v1577, %v1581
    %v1584 = vadd.f32 %v946, %v1582
    %v1585 = vadd.f32 %v1576, %v1582
    %v1586 = vadd.f32 %v225, %v1584
    %v1587 = vadd.f32 %v226, %v1585
    %v1588 = vsel %vm255, %v1586, 0.0
    %1589 = vadd.xlane.f32.xlu0 %v1588
    %v1590 = vpop.xlane.xlu0 %1589
    %v1591 = vsel %vm255, %v1587, 0.0
    %1592 = vadd.xlane.f32.xlu0 %v1591
    %v1593 = vpop.xlane.xlu0 %1592
    %v1594 = vrcp.pop 32.0
    %v1595 = vmul.f32 %v1590, %v1594
    %v1596 = vmul.f32 %v1593, %v1594
    %v1597 = vsub.f32 %v1586, %v1595
    %v1598 = vsub.f32 %v1587, %v1596
    %v1599 = vmul.f32 %v1597, %v1597
    %v1600 = vmul.f32 %v1598, %v1598
    %v1601 = vsel %vm255, %v1599, 0.0
    %1602 = vadd.xlane.f32.xlu0 %v1601
    %v1603 = vpop.xlane.xlu0 %1602
    %v1604 = vsel %vm255, %v1600, 0.0
    %1605 = vadd.xlane.f32.xlu0 %v1604
    %v1606 = vpop.xlane.xlu0 %1605
    %v1607 = vmul.f32 %v1603, %v1594
    %v1608 = vmul.f32 %v1606, %v1594
    %v1609 = vadd.f32 %v1607, 1e-05
    %v1610 = vadd.f32 %v1608, 1e-05
    %v1611 = vrsqrt.pop %v1609
    %v1612 = vrsqrt.pop %v1610
    %v1613 = vmul.f32 %v1597, %v1611
    %v1614 = vmul.f32 %v1598, %v1612
    %v1615 = vld [vmem:[#allocation13] sm:$0x1]
    %v1617 = vlaneseq
    %v1618 = vshrl.u32 %v1617, 7
    %v1619 = vsub.s32 0, %v1618
    %v1620 = vrot.slane %v1615, %v1619
    %v1622 = vmul.f32 %v1613, %v1620
    %v1623 = vmul.f32 %v1614, %v1620
    %v1624 = vld [vmem:[#allocation14] sm:$0x1]
    %v1626 = vlaneseq
    %v1627 = vshrl.u32 %v1626, 7
    %v1628 = vsub.s32 0, %v1627
    %v1629 = vrot.slane %v1624, %v1628
    %v1631 = vadd.f32 %v1622, %v1629
    %v1632 = vadd.f32 %v1623, %v1629
    %v1633 = vpack.c.bf16 %v1632, %v1631
    %v1634 = vld [vmem:[#allocation16] sm:$0xf]
    %v1635 = vld [vmem:[#allocation16 + $0x4] sm:$0xf]
    %v1636 = vld [vmem:[#allocation16 + $0x8] sm:$0xf]
    %v1637 = vld [vmem:[#allocation16 + $0xc] sm:$0xf]
    %v1638 = vld [vmem:[#allocation17] sm:$0x1]
    %v1640 = vlaneseq
    %v1641 = vshrl.u32 %v1640, 7
    %v1642 = vsub.s32 0, %v1641
    %v1643 = vrot.slane %v1638, %v1642
    %v1649 = vunpack.c.l.b16 %v1634
    %v1650 = vunpack.c.l.b16 %v1635
    %v1651 = vunpack.c.l.b16 %v1636
    %v1652 = vunpack.c.l.b16 %v1637
    %v1653 = vpack.c.b16 %v1650, %v1649
    %v1654 = vpack.c.b16 %v1652, %v1651
    %v1658 = vsel %vm255, %v1633, 0
    %1660 = vmatprep.subr.bf16.mxu0 0
    %1661 = vmatpush1.bf16.msra.mxu0 %v1653
    %1662 = vmatprep.subr.bf16.mxu0 0
    %1663 = vmatpush1.bf16.msra.mxu0 %v1654
    %1664 = vmatprep.subr.bf16.mxu0 0
    %1665 = vmatpush1.bf16.msra.mxu0 0
    %1666 = vmatprep.subr.bf16.mxu0 0
    %1667 = vmatpush1.bf16.msra.mxu0 0
    %1668 = vmatprep.subr.bf16.mxu0 0
    %1669 = vmatpush1.bf16.msra.mxu0 0
    %1670 = vmatprep.subr.bf16.mxu0 0
    %1671 = vmatpush1.bf16.msra.mxu0 0
    %1672 = vmatprep.subr.bf16.mxu0 0
    %1673 = vmatpush1.bf16.msra.mxu0 0
    %1674 = vmatprep.subr.bf16.mxu0 0
    %1675 = vmatpush1.bf16.msra.mxu0 0
    %1676 = vmatprep.subr.bf16.mxu0 0
    %1677 = vmatpush1.bf16.msra.mxu0 0
    %1678 = vmatprep.subr.bf16.mxu0 0
    %1679 = vmatpush1.bf16.msra.mxu0 0
    %1680 = vmatprep.subr.bf16.mxu0 0
    %1681 = vmatpush1.bf16.msra.mxu0 0
    %1682 = vmatprep.subr.bf16.mxu0 0
    %1683 = vmatpush1.bf16.msra.mxu0 0
    %1684 = vmatprep.subr.bf16.mxu0 0
    %1685 = vmatpush1.bf16.msra.mxu0 0
    %1686 = vmatprep.subr.bf16.mxu0 0
    %1687 = vmatpush1.bf16.msra.mxu0 0
    %1688 = vmatprep.subr.bf16.mxu0 0
    %1689 = vmatpush1.bf16.msra.mxu0 0
    %1690 = vmatprep.subr.bf16.mxu0 0
    %1691 = vmatpush1.bf16.msra.mxu0 0
    %1692 = vmatprep.mubr.bf16.mxu0 0
    %1693 = vmatmul.mubr.bf16.gmra.mrb[0].mxu0 %v1658
    %v1694 = vpop.f32.mrb[0].mxu0
    %v1695 = vadd.f32 %v1643, %v1694
    %v1696 = vpop.f32.mrb[0].mxu0
    %v1697 = vpop.f32.mrb[0].mxu0
    %v1698 = vadd.f32 %v1643, %v1697
    %v1699 = vpop.f32.mrb[0].mxu0
    %1700 = vdwg.mxu0
    %v1701 = vmax.f32 %v1695, 0.0
    %v1702 = vmax.f32 %v1698, 0.0
    %v1703 = vpack.c.bf16 %v1702, %v1701
    %v1704 = vld [vmem:[#allocation19] sm:$0xf]
    %v1705 = vld [vmem:[#allocation19 + $0x4] sm:$0xf]
    %v1706 = vld [vmem:[#allocation19 + $0x8] sm:$0xf]
    %v1707 = vld [vmem:[#allocation19 + $0xc] sm:$0xf]
    %v1708 = vld [vmem:[#allocation19 + $0x10] sm:$0xf]
    %v1709 = vld [vmem:[#allocation19 + $0x14] sm:$0xf]
    %v1710 = vld [vmem:[#allocation19 + $0x18] sm:$0xf]
    %v1711 = vld [vmem:[#allocation19 + $0x1c] sm:$0xf]
    %v1712 = vld [vmem:[#allocation20] sm:$0x1]
    %v1714 = vlaneseq
    %v1715 = vshrl.u32 %v1714, 7
    %v1716 = vsub.s32 0, %v1715
    %v1717 = vrot.slane %v1712, %v1716
    %v1727 = vunpack.c.l.b16 %v1704
    %v1728 = vunpack.c.l.b16 %v1705
    %v1729 = vunpack.c.l.b16 %v1706
    %v1730 = vunpack.c.l.b16 %v1707
    %v1731 = vunpack.c.l.b16 %v1708
    %v1732 = vunpack.c.l.b16 %v1709
    %v1733 = vunpack.c.l.b16 %v1710
    %v1734 = vunpack.c.l.b16 %v1711
    %v1735 = vpack.c.b16 %v1728, %v1727
    %v1736 = vpack.c.b16 %v1730, %v1729
    %v1737 = vpack.c.b16 %v1732, %v1731
    %v1738 = vpack.c.b16 %v1734, %v1733
    %vm1743 = vcmask 523264
    %v1745 = vsel %vm1743, %v1703, 0
    %1747 = vmatprep.subr.bf16.mxu0 0
    %1748 = vmatpush1.bf16.msra.mxu0 %v1735
    %1749 = vmatprep.subr.bf16.mxu0 0
    %1750 = vmatpush1.bf16.msra.mxu0 %v1736
    %1751 = vmatprep.subr.bf16.mxu0 0
    %1752 = vmatpush1.bf16.msra.mxu0 %v1737
    %1753 = vmatprep.subr.bf16.mxu0 0
    %1754 = vmatpush1.bf16.msra.mxu0 %v1738
    %1755 = vmatprep.subr.bf16.mxu0 0
    %1756 = vmatpush1.bf16.msra.mxu0 0
    %1757 = vmatprep.subr.bf16.mxu0 0
    %1758 = vmatpush1.bf16.msra.mxu0 0
    %1759 = vmatprep.subr.bf16.mxu0 0
    %1760 = vmatpush1.bf16.msra.mxu0 0
    %1761 = vmatprep.subr.bf16.mxu0 0
    %1762 = vmatpush1.bf16.msra.mxu0 0
    %1763 = vmatprep.subr.bf16.mxu0 0
    %1764 = vmatpush1.bf16.msra.mxu0 0
    %1765 = vmatprep.subr.bf16.mxu0 0
    %1766 = vmatpush1.bf16.msra.mxu0 0
    %1767 = vmatprep.subr.bf16.mxu0 0
    %1768 = vmatpush1.bf16.msra.mxu0 0
    %1769 = vmatprep.subr.bf16.mxu0 0
    %1770 = vmatpush1.bf16.msra.mxu0 0
    %1771 = vmatprep.subr.bf16.mxu0 0
    %1772 = vmatpush1.bf16.msra.mxu0 0
    %1773 = vmatprep.subr.bf16.mxu0 0
    %1774 = vmatpush1.bf16.msra.mxu0 0
    %1775 = vmatprep.subr.bf16.mxu0 0
    %1776 = vmatpush1.bf16.msra.mxu0 0
    %1777 = vmatprep.subr.bf16.mxu0 0
    %1778 = vmatpush1.bf16.msra.mxu0 0
    %1779 = vmatprep.mubr.bf16.mxu0 0
    %1780 = vmatmul.mubr.bf16.gmra.mrb[0].mxu0 %v1745
    %v1781 = vpop.f32.mrb[0].mxu0
    %v1782 = vadd.f32 %v1717, %v1781
    %v1783 = vpop.f32.mrb[0].mxu0
    %v1784 = vpop.f32.mrb[0].mxu0
    %v1785 = vadd.f32 %v1717, %v1784
    %v1786 = vpop.f32.mrb[0].mxu0
    %1787 = vdwg.mxu0
    %v1788 = vadd.f32 %v1631, %v1782
    %v1789 = vadd.f32 %v1632, %v1785
    %v1790 = vsel %vm255, %v1788, 0.0
    %1791 = vadd.xlane.f32.xlu0 %v1790
    %v1792 = vpop.xlane.xlu0 %1791
    %v1793 = vsel %vm255, %v1789, 0.0
    %1794 = vadd.xlane.f32.xlu0 %v1793
    %v1795 = vpop.xlane.xlu0 %1794
    %v1796 = vmul.f32 %v1792, %v1594
    %v1797 = vmul.f32 %v1795, %v1594
    %v1798 = vsub.f32 %v1788, %v1796
    %v1799 = vsub.f32 %v1789, %v1797
    %v1800 = vmul.f32 %v1798, %v1798
    %v1801 = vmul.f32 %v1799, %v1799
    %v1802 = vsel %vm255, %v1800, 0.0
    %1803 = vadd.xlane.f32.xlu0 %v1802
    %v1804 = vpop.xlane.xlu0 %1803
    %v1805 = vsel %vm255, %v1801, 0.0
    %1806 = vadd.xlane.f32.xlu0 %v1805
    %v1807 = vpop.xlane.xlu0 %1806
    %v1808 = vmul.f32 %v1804, %v1594
    %v1809 = vmul.f32 %v1807, %v1594
    %v1810 = vadd.f32 %v1808, 1e-05
    %v1811 = vadd.f32 %v1809, 1e-05
    %v1812 = vrsqrt.pop %v1810
    %v1813 = vrsqrt.pop %v1811
    %v1814 = vmul.f32 %v1798, %v1812
    %v1815 = vmul.f32 %v1799, %v1813
    %v1816 = vld [vmem:[#allocation22] sm:$0x1]
    %v1818 = vlaneseq
    %v1819 = vshrl.u32 %v1818, 7
    %v1820 = vsub.s32 0, %v1819
    %v1821 = vrot.slane %v1816, %v1820
    %v1823 = vmul.f32 %v1814, %v1821
    %v1824 = vmul.f32 %v1815, %v1821
    %v1825 = vld [vmem:[#allocation23] sm:$0x1]
    %v1827 = vlaneseq
    %v1828 = vshrl.u32 %v1827, 7
    %v1829 = vsub.s32 0, %v1828
    %v1830 = vrot.slane %v1825, %v1829
    %v1832 = vadd.f32 %v1823, %v1830
    %v1833 = vadd.f32 %v1824, %v1830
    %v1834 = vpack.c.bf16 %v1832, %v1832
    %v1835 = vpack.c.bf16 %v1833, %v1833
    %vm1836 = vcmask 257024
    %1837 = vst.msk [vmem:[#allocation25] sm:$0xf] %vm1836, %v1834
    %1838 = vst.msk [vmem:[#allocation25 + $0x4] sm:$0xf] %vm1836, %v1835
    // Predicated region
    $region114: #{tpu_custom_call.1} parent=1 // pred_check
      _
    $region115: #{tpu_custom_call.1} parent=1 // pred_check_branch
      %1840 = sbr.rel (0) target = $region117
    $region116: #{tpu_custom_call.1} parent=1 // pred_region
      %s1842 = ssub.s32 128, 128
      %1843 = vsyncadd [#allocation4], %s1842
      %s1844 = sshll.u32 [#allocation25], 4
      %s1845 = int_to_ptr.vmem [resolvable:$true] %s1844
      %1850 = dma.vmem_to_hbm [thread:$0]  %s1845, 128, %s14, [#allocation4], 64, 64, 4
    $region117: #{tpu_custom_call.1} parent=1 // pred_fallthru
      _
    // Predicated region
    $region118: #{tpu_custom_call.1} parent=1 // pred_check
      _
    $region119: #{tpu_custom_call.1} parent=1 // pred_check_branch
      %1852 = sbr.rel (0) target = $region121
    $region120: #{tpu_custom_call.1} parent=1 // pred_region
      %1853 = dma.done [#allocation4], 128
    $region121: #{tpu_custom_call.1} parent=1 // pred_fallthru
      _
    %1854 = vsyncpa [#allocation3], 1
    %1855 = vsyncpa [#allocation6], 1
    %1856 = vsyncpa [#allocation9], 1
    %1857 = vsyncpa [#allocation12], 1
    %1858 = vsyncpa [#allocation15], 1
    %1859 = vsyncpa [#allocation18], 1
    %1860 = vsyncpa [#allocation21], 1
    %1861 = vsyncpa [#allocation24], 1
    %1862 = vsyncpa [#allocation4], 1

// kernel: tpu_custom_call.1
$region0: #{tpu_custom_call.1}
  #allocation0 [shape = 'u32[]', space=smem, size = 0x4, offset = 0x4, fixed_abs, tag = 'smem constant byte address 0x4 - core index']
  #allocation1 [shape = 'u32[144,128]{1,0:T(1,128)}', space=vmem, size = 0x12000, scoped, tag = 'internal scratch']
  %s0 = inlined_call_operand.hbm [shape: bf16[2,8,32], index: 0, kind: input, shape index: {}]
  %s1 = inlined_call_operand.hbm [shape: bf16[4,8,8], index: 1, kind: input, shape index: {}]
  %s2 = inlined_call_operand.hbm [shape: bf16[32,96], index: 2, kind: input, shape index: {}]
  %s3 = inlined_call_operand.hbm [shape: f32[1,96], index: 3, kind: input, shape index: {}]
  %s4 = inlined_call_operand.hbm [shape: bf16[4,8,32], index: 4, kind: input, shape index: {}]
  %s5 = inlined_call_operand.hbm [shape: f32[1,32], index: 5, kind: input, shape index: {}]
  %s6 = inlined_call_operand.hbm [shape: f32[1,32], index: 6, kind: input, shape index: {}]
  %s7 = inlined_call_operand.hbm [shape: f32[1,32], index: 7, kind: input, shape index: {}]
  %s8 = inlined_call_operand.hbm [shape: bf16[32,64], index: 8, kind: input, shape index: {}]
  %s9 = inlined_call_operand.hbm [shape: f32[1,64], index: 9, kind: input, shape index: {}]
  %s10 = inlined_call_operand.hbm [shape: bf16[64,32], index: 10, kind: input, shape index: {}]
  %s11 = inlined_call_operand.hbm [shape: f32[1,32], index: 11, kind: input, shape index: {}]
  %s12 = inlined_call_operand.hbm [shape: f32[1,32], index: 12, kind: input, shape index: {}]
  %s13 = inlined_call_operand.hbm [shape: f32[1,32], index: 13, kind: input, shape index: {}]
  %s14 = inlined_call_operand.hbm [shape: bf16[2,8,32], index: 14, kind: output, shape index: {}]
  %s15 = sld [smem:[#allocation0]]
  $region122: #{tpu_custom_call.1} parent=0
    _
  %s17 = ssub.s32 1, %s15
  %s18 = scalar_select 0, %s17, %s15
  $region1: #{tpu_custom_call.1} parent=0
    #allocation2 [shape = 'u8[4096]{0}', space=vmem, size = 0x1000, scoped, tag = 'input window, operand 0, single buffered']
    #allocation3 [shape = 's32[1]{0}', space=sflag, size = 0x4, scoped, tag = 'scoped memory for tpu_custom_call.1']
    #allocation4 [shape = 's32[1]{0}', space=sflag, size = 0x4, scoped, tag = 'scoped memory for tpu_custom_call.1']
    #allocation5 [shape = 'u8[8192]{0}', space=vmem, size = 0x2000, scoped, tag = 'input window, operand 1, single buffered']
    #allocation6 [shape = 's32[1]{0}', space=sflag, size = 0x4, scoped, tag = 'scoped memory for tpu_custom_call.1']
    #allocation7 [shape = 'u8[8192]{0}', space=vmem, size = 0x2000, scoped, tag = 'input window, operand 2, single buffered']
    #allocation8 [shape = 'u8[512]{0}', space=vmem, size = 0x400, scoped, tag = 'input window, operand 3, single buffered']
    #allocation9 [shape = 's32[1]{0}', space=sflag, size = 0x4, scoped, tag = 'scoped memory for tpu_custom_call.1']
    #allocation10 [shape = 'u8[8192]{0}', space=vmem, size = 0x2000, scoped, tag = 'input window, operand 4, single buffered']
    #allocation11 [shape = 'u8[512]{0}', space=vmem, size = 0x400, scoped, tag = 'input window, operand 5, single buffered']
    #allocation12 [shape = 's32[1]{0}', space=sflag, size = 0x4, scoped, tag = 'scoped memory for tpu_custom_call.1']
    #allocation13 [shape = 'u8[512]{0}', space=vmem, size = 0x400, scoped, tag = 'input window, operand 6, single buffered']
    #allocation14 [shape = 'u8[512]{0}', space=vmem, size = 0x400, scoped, tag = 'input window, operand 7, single buffered']
    #allocation15 [shape = 's32[1]{0}', space=sflag, size = 0x4, scoped, tag = 'scoped memory for tpu_custom_call.1']
    #allocation16 [shape = 'u8[8192]{0}', space=vmem, size = 0x2000, scoped, tag = 'input window, operand 8, single buffered']
    #allocation17 [shape = 'u8[512]{0}', space=vmem, size = 0x400, scoped, tag = 'input window, operand 9, single buffered']
    #allocation18 [shape = 's32[1]{0}', space=sflag, size = 0x4, scoped, tag = 'scoped memory for tpu_custom_call.1']
    #allocation19 [shape = 'u8[16384]{0}', space=vmem, size = 0x4000, scoped, tag = 'input window, operand 10, single buffered']
    #allocation20 [shape = 'u8[512]{0}', space=vmem, size = 0x400, scoped, tag = 'input window, operand 11, single buffered']
    #allocation21 [shape = 's32[1]{0}', space=sflag, size = 0x4, scoped, tag = 'scoped memory for tpu_custom_call.1']
    #allocation22 [shape = 'u8[512]{0}', space=vmem, size = 0x400, scoped, tag = 'input window, operand 12, single buffered']
    #allocation23 [shape = 'u8[512]{0}', space=vmem, size = 0x400, scoped, tag = 'input window, operand 13, single buffered']
    #allocation24 [shape = 's32[1]{0}', space=sflag, size = 0x4, scoped, tag = 'scoped memory for tpu_custom_call.1']
    #allocation25 [shape = 'u8[4096]{0}', space=vmem, size = 0x1000, scoped, tag = 'output window, operand 0, single buffered']
    %19 = vsyncpa [#allocation3], 0
    %20 = vsyncpa [#allocation6], 0
    %21 = vsyncpa [#allocation9], 0
    %22 = vsyncpa [#allocation12], 0
    %23 = vsyncpa [#allocation15], 0
    %24 = vsyncpa [#allocation18], 0
    %25 = vsyncpa [#allocation21], 0
    %26 = vsyncpa [#allocation24], 0
    %27 = vsyncpa [#allocation4], 0
    // Predicated region
    $region2: #{tpu_custom_call.1} parent=1 // pred_check
      _
    $region3: #{tpu_custom_call.1} parent=1 // pred_check_branch
      %29 = sbr.rel (0) target = $region5
    $region4: #{tpu_custom_call.1} parent=1 // pred_region
      %s31 = ssub.s32 128, 128
      %32 = vsyncadd [#allocation3], %s31
      %s33 = sshll.u32 [#allocation2], 4
      %s34 = int_to_ptr.vmem [resolvable:$true] %s33
      %39 = dma.hbm_to_vmem [thread:$0]  %s0, 128, %s34, [#allocation3], 64, 64, 4
    $region5: #{tpu_custom_call.1} parent=1 // pred_fallthru
      _
    // Predicated region
    $region6: #{tpu_custom_call.1} parent=1 // pred_check
      _
    $region7: #{tpu_custom_call.1} parent=1 // pred_check_branch
      %41 = sbr.rel (0) target = $region9
    $region8: #{tpu_custom_call.1} parent=1 // pred_region
      %s43 = ssub.s32 256, 256
      %44 = vsyncadd [#allocation6], %s43
      %s45 = sshll.u32 [#allocation5], 4
      %s46 = int_to_ptr.vmem [resolvable:$true] %s45
      %51 = dma.hbm_to_vmem [thread:$0]  %s1, 256, %s46, [#allocation6], 64, 64, 4
    $region9: #{tpu_custom_call.1} parent=1 // pred_fallthru
      _
    // Predicated region
    $region10: #{tpu_custom_call.1} parent=1 // pred_check
      _
    $region11: #{tpu_custom_call.1} parent=1 // pred_check_branch
      %53 = sbr.rel (0) target = $region13
    $region12: #{tpu_custom_call.1} parent=1 // pred_region
      %s55 = ssub.s32 256, 256
      %56 = vsyncadd [#allocation6], %s55
      %s57 = sshll.u32 [#allocation7], 4
      %s58 = int_to_ptr.vmem [resolvable:$true] %s57
      %63 = dma.hbm_to_vmem [thread:$0]  %s2, 256, %s58, [#allocation6], 64, 64, 4
    $region13: #{tpu_custom_call.1} parent=1 // pred_fallthru
      _
    // Predicated region
    $region14: #{tpu_custom_call.1} parent=1 // pred_check
      _
    $region15: #{tpu_custom_call.1} parent=1 // pred_check_branch
      %65 = sbr.rel (0) target = $region17
    $region16: #{tpu_custom_call.1} parent=1 // pred_region
      %s67 = ssub.s32 16, 16
      %68 = vsyncadd [#allocation9], %s67
      %s70 = sshll.u32 [#allocation8], 4
      %s71 = int_to_ptr.vmem [resolvable:$true] %s70
      %73 = dma.hbm_to_vmem [thread:$0]  %s3, 16, %s71, [#allocation9]
    $region17: #{tpu_custom_call.1} parent=1 // pred_fallthru
      _
    // Predicated region
    $region18: #{tpu_custom_call.1} parent=1 // pred_check
      _
    $region19: #{tpu_custom_call.1} parent=1 // pred_check_branch
      %75 = sbr.rel (0) target = $region21
    $region20: #{tpu_custom_call.1} parent=1 // pred_region
      %s77 = ssub.s32 256, 256
      %78 = vsyncadd [#allocation9], %s77
      %s79 = sshll.u32 [#allocation10], 4
      %s80 = int_to_ptr.vmem [resolvable:$true] %s79
      %85 = dma.hbm_to_vmem [thread:$0]  %s4, 256, %s80, [#allocation9], 64, 64, 4
    $region21: #{tpu_custom_call.1} parent=1 // pred_fallthru
      _
    // Predicated region
    $region22: #{tpu_custom_call.1} parent=1 // pred_check
      _
    $region23: #{tpu_custom_call.1} parent=1 // pred_check_branch
      %87 = sbr.rel (0) target = $region25
    $region24: #{tpu_custom_call.1} parent=1 // pred_region
      %s89 = ssub.s32 16, 16
      %90 = vsyncadd [#allocation12], %s89
      %s92 = sshll.u32 [#allocation11], 4
      %s93 = int_to_ptr.vmem [resolvable:$true] %s92
      %95 = dma.hbm_to_vmem [thread:$0]  %s5, 16, %s93, [#allocation12]
    $region25: #{tpu_custom_call.1} parent=1 // pred_fallthru
      _
    // Predicated region
    $region26: #{tpu_custom_call.1} parent=1 // pred_check
      _
    $region27: #{tpu_custom_call.1} parent=1 // pred_check_branch
      %97 = sbr.rel (0) target = $region29
    $region28: #{tpu_custom_call.1} parent=1 // pred_region
      %s99 = ssub.s32 16, 16
      %100 = vsyncadd [#allocation12], %s99
      %s102 = sshll.u32 [#allocation13], 4
      %s103 = int_to_ptr.vmem [resolvable:$true] %s102
      %105 = dma.hbm_to_vmem [thread:$0]  %s6, 16, %s103, [#allocation12]
    $region29: #{tpu_custom_call.1} parent=1 // pred_fallthru
      _
    // Predicated region
    $region30: #{tpu_custom_call.1} parent=1 // pred_check
      _
    $region31: #{tpu_custom_call.1} parent=1 // pred_check_branch
      %107 = sbr.rel (0) target = $region33
    $region32: #{tpu_custom_call.1} parent=1 // pred_region
      %s109 = ssub.s32 16, 16
      %110 = vsyncadd [#allocation15], %s109
      %s112 = sshll.u32 [#allocation14], 4
      %s113 = int_to_ptr.vmem [resolvable:$true] %s112
      %115 = dma.hbm_to_vmem [thread:$0]  %s7, 16, %s113, [#allocation15]
    $region33: #{tpu_custom_call.1} parent=1 // pred_fallthru
      _
    // Predicated region
    $region34: #{tpu_custom_call.1} parent=1 // pred_check
      _
    $region35: #{tpu_custom_call.1} parent=1 // pred_check_branch
      %117 = sbr.rel (0) target = $region37
    $region36: #{tpu_custom_call.1} parent=1 // pred_region
      %s119 = ssub.s32 256, 256
      %120 = vsyncadd [#allocation15], %s119
      %s121 = sshll.u32 [#allocation16], 4
      %s122 = int_to_ptr.vmem [resolvable:$true] %s121
      %127 = dma.hbm_to_vmem [thread:$0]  %s8, 256, %s122, [#allocation15], 64, 64, 4
    $region37: #{tpu_custom_call.1} parent=1 // pred_fallthru
      _
    // Predicated region
    $region38: #{tpu_custom_call.1} parent=1 // pred_check
      _
    $region39: #{tpu_custom_call.1} parent=1 // pred_check_branch
      %129 = sbr.rel (0) target = $region41
    $region40: #{tpu_custom_call.1} parent=1 // pred_region
      %s131 = ssub.s32 16, 16
      %132 = vsyncadd [#allocation18], %s131
      %s134 = sshll.u32 [#allocation17], 4
      %s135 = int_to_ptr.vmem [resolvable:$true] %s134
      %137 = dma.hbm_to_vmem [thread:$0]  %s9, 16, %s135, [#allocation18]
    $region41: #{tpu_custom_call.1} parent=1 // pred_fallthru
      _
    // Predicated region
    $region42: #{tpu_custom_call.1} parent=1 // pred_check
      _
    $region43: #{tpu_custom_call.1} parent=1 // pred_check_branch
      %139 = sbr.rel (0) target = $region45
    $region44: #{tpu_custom_call.1} parent=1 // pred_region
      %s141 = ssub.s32 512, 512
      %142 = vsyncadd [#allocation18], %s141
      %s143 = sshll.u32 [#allocation19], 4
      %s144 = int_to_ptr.vmem [resolvable:$true] %s143
      %149 = dma.hbm_to_vmem [thread:$0]  %s10, 512, %s144, [#allocation18], 64, 64, 4
    $region45: #{tpu_custom_call.1} parent=1 // pred_fallthru
      _
    // Predicated region
    $region46: #{tpu_custom_call.1} parent=1 // pred_check
      _
    $region47: #{tpu_custom_call.1} parent=1 // pred_check_branch
      %151 = sbr.rel (0) target = $region49
    $region48: #{tpu_custom_call.1} parent=1 // pred_region
      %s153 = ssub.s32 16, 16
      %154 = vsyncadd [#allocation21], %s153
      %s156 = sshll.u32 [#allocation20], 4
      %s157 = int_to_ptr.vmem [resolvable:$true] %s156
      %159 = dma.hbm_to_vmem [thread:$0]  %s11, 16, %s157, [#allocation21]
    $region49: #{tpu_custom_call.1} parent=1 // pred_fallthru
      _
    // Predicated region
    $region50: #{tpu_custom_call.1} parent=1 // pred_check
      _
    $region51: #{tpu_custom_call.1} parent=1 // pred_check_branch
      %161 = sbr.rel (0) target = $region53
    $region52: #{tpu_custom_call.1} parent=1 // pred_region
      %s163 = ssub.s32 16, 16
      %164 = vsyncadd [#allocation21], %s163
      %s166 = sshll.u32 [#allocation22], 4
      %s167 = int_to_ptr.vmem [resolvable:$true] %s166
      %169 = dma.hbm_to_vmem [thread:$0]  %s12, 16, %s167, [#allocation21]
    $region53: #{tpu_custom_call.1} parent=1 // pred_fallthru
      _
    // Predicated region
    $region54: #{tpu_custom_call.1} parent=1 // pred_check
      _
    $region55: #{tpu_custom_call.1} parent=1 // pred_check_branch
      %171 = sbr.rel (0) target = $region57
    $region56: #{tpu_custom_call.1} parent=1 // pred_region
      %s173 = ssub.s32 16, 16
      %174 = vsyncadd [#allocation24], %s173
      %s176 = sshll.u32 [#allocation23], 4
      %s177 = int_to_ptr.vmem [resolvable:$true] %s176
      %179 = dma.hbm_to_vmem [thread:$0]  %s13, 16, %s177, [#allocation24]
    $region57: #{tpu_custom_call.1} parent=1 // pred_fallthru
      _
    // Predicated region
    $region58: #{tpu_custom_call.1} parent=1 // pred_check
      _
    $region59: #{tpu_custom_call.1} parent=1 // pred_check_branch
      %181 = sbr.rel (0) target = $region61
    $region60: #{tpu_custom_call.1} parent=1 // pred_region
      %182 = dma.done [#allocation3], 128
    $region61: #{tpu_custom_call.1} parent=1 // pred_fallthru
      _
    // Predicated region
    $region62: #{tpu_custom_call.1} parent=1 // pred_check
      _
    $region63: #{tpu_custom_call.1} parent=1 // pred_check_branch
      %184 = sbr.rel (0) target = $region65
    $region64: #{tpu_custom_call.1} parent=1 // pred_region
      %185 = dma.done [#allocation6], 256
    $region65: #{tpu_custom_call.1} parent=1 // pred_fallthru
      _
    // Predicated region
    $region66: #{tpu_custom_call.1} parent=1 // pred_check
      _
    $region67: #{tpu_custom_call.1} parent=1 // pred_check_branch
      %187 = sbr.rel (0) target = $region69
    $region68: #{tpu_custom_call.1} parent=1 // pred_region
      %188 = dma.done [#allocation6], 256
    $region69: #{tpu_custom_call.1} parent=1 // pred_fallthru
      _
    // Predicated region
    $region70: #{tpu_custom_call.1} parent=1 // pred_check
      _
    $region71: #{tpu_custom_call.1} parent=1 // pred_check_branch
      %190 = sbr.rel (0) target = $region73
    $region72: #{tpu_custom_call.1} parent=1 // pred_region
      %191 = dma.done [#allocation9], 16
    $region73: #{tpu_custom_call.1} parent=1 // pred_fallthru
      _
    // Predicated region
    $region74: #{tpu_custom_call.1} parent=1 // pred_check
      _
    $region75: #{tpu_custom_call.1} parent=1 // pred_check_branch
      %193 = sbr.rel (0) target = $region77
    $region76: #{tpu_custom_call.1} parent=1 // pred_region
      %194 = dma.done [#allocation9], 256
    $region77: #{tpu_custom_call.1} parent=1 // pred_fallthru
      _
    // Predicated region
    $region78: #{tpu_custom_call.1} parent=1 // pred_check
      _
    $region79: #{tpu_custom_call.1} parent=1 // pred_check_branch
      %196 = sbr.rel (0) target = $region81
    $region80: #{tpu_custom_call.1} parent=1 // pred_region
      %197 = dma.done [#allocation12], 16
    $region81: #{tpu_custom_call.1} parent=1 // pred_fallthru
      _
    // Predicated region
    $region82: #{tpu_custom_call.1} parent=1 // pred_check
      _
    $region83: #{tpu_custom_call.1} parent=1 // pred_check_branch
      %199 = sbr.rel (0) target = $region85
    $region84: #{tpu_custom_call.1} parent=1 // pred_region
      %200 = dma.done [#allocation12], 16
    $region85: #{tpu_custom_call.1} parent=1 // pred_fallthru
      _
    // Predicated region
    $region86: #{tpu_custom_call.1} parent=1 // pred_check
      _
    $region87: #{tpu_custom_call.1} parent=1 // pred_check_branch
      %202 = sbr.rel (0) target = $region89
    $region88: #{tpu_custom_call.1} parent=1 // pred_region
      %203 = dma.done [#allocation15], 16
    $region89: #{tpu_custom_call.1} parent=1 // pred_fallthru
      _
    // Predicated region
    $region90: #{tpu_custom_call.1} parent=1 // pred_check
      _
    $region91: #{tpu_custom_call.1} parent=1 // pred_check_branch
      %205 = sbr.rel (0) target = $region93
    $region92: #{tpu_custom_call.1} parent=1 // pred_region
      %206 = dma.done [#allocation15], 256
    $region93: #{tpu_custom_call.1} parent=1 // pred_fallthru
      _
    // Predicated region
    $region94: #{tpu_custom_call.1} parent=1 // pred_check
      _
    $region95: #{tpu_custom_call.1} parent=1 // pred_check_branch
      %208 = sbr.rel (0) target = $region97
    $region96: #{tpu_custom_call.1} parent=1 // pred_region
      %209 = dma.done [#allocation18], 16
    $region97: #{tpu_custom_call.1} parent=1 // pred_fallthru
      _
    // Predicated region
    $region98: #{tpu_custom_call.1} parent=1 // pred_check
      _
    $region99: #{tpu_custom_call.1} parent=1 // pred_check_branch
      %211 = sbr.rel (0) target = $region101
    $region100: #{tpu_custom_call.1} parent=1 // pred_region
      %212 = dma.done [#allocation18], 512
    $region101: #{tpu_custom_call.1} parent=1 // pred_fallthru
      _
    // Predicated region
    $region102: #{tpu_custom_call.1} parent=1 // pred_check
      _
    $region103: #{tpu_custom_call.1} parent=1 // pred_check_branch
      %214 = sbr.rel (0) target = $region105
    $region104: #{tpu_custom_call.1} parent=1 // pred_region
      %215 = dma.done [#allocation21], 16
    $region105: #{tpu_custom_call.1} parent=1 // pred_fallthru
      _
    // Predicated region
    $region106: #{tpu_custom_call.1} parent=1 // pred_check
      _
    $region107: #{tpu_custom_call.1} parent=1 // pred_check_branch
      %217 = sbr.rel (0) target = $region109
    $region108: #{tpu_custom_call.1} parent=1 // pred_region
      %218 = dma.done [#allocation21], 16
    $region109: #{tpu_custom_call.1} parent=1 // pred_fallthru
      _
    // Predicated region
    $region110: #{tpu_custom_call.1} parent=1 // pred_check
      _
    $region111: #{tpu_custom_call.1} parent=1 // pred_check_branch
      %220 = sbr.rel (0) target = $region113
    $region112: #{tpu_custom_call.1} parent=1 // pred_region
      %221 = dma.done [#allocation24], 16
    $region113: #{tpu_custom_call.1} parent=1 // pred_fallthru
      _
    %v223 = vld [vmem:[#allocation2] sm:$0xf]
    %v224 = vld [vmem:[#allocation2 + $0x4] sm:$0xf]
    %v225 = vunpack.c.l.bf16 %v223
    %v226 = vunpack.c.l.bf16 %v224
    %v227 = vld [vmem:[#allocation7] sm:$0xf]
    %v228 = vld [vmem:[#allocation7 + $0x4] sm:$0xf]
    %v229 = vld [vmem:[#allocation7 + $0x8] sm:$0xf]
    %v230 = vld [vmem:[#allocation7 + $0xc] sm:$0xf]
    %v231 = vld [vmem:[#allocation8] sm:$0x1]
    %v233 = vlaneseq
    %v234 = vshrl.u32 %v233, 7
    %v235 = vsub.s32 0, %v234
    %v236 = vrot.slane %v231, %v235
    %v240 = vunpack.c.l.b16 %v223
    %v241 = vunpack.c.l.b16 %v224
    %v242 = vpack.c.b16 %v241, %v240
    %v247 = vunpack.c.l.b16 %v227
    %v248 = vunpack.c.l.b16 %v228
    %v249 = vunpack.c.l.b16 %v229
    %v250 = vunpack.c.l.b16 %v230
    %v251 = vpack.c.b16 %v248, %v247
    %v252 = vpack.c.b16 %v250, %v249
    %vm255 = vcmask 261120
    %v257 = vsel %vm255, %v242, 0
    %259 = vmatprep.subr.bf16.mxu0 0
    %260 = vmatpush1.bf16.msra.mxu0 %v251
    %261 = vmatprep.subr.bf16.mxu0 0
    %262 = vmatpush1.bf16.msra.mxu0 %v252
    %263 = vmatprep.subr.bf16.mxu0 0
    %264 = vmatpush1.bf16.msra.mxu0 0
    %265 = vmatprep.subr.bf16.mxu0 0
    %266 = vmatpush1.bf16.msra.mxu0 0
    %267 = vmatprep.subr.bf16.mxu0 0
    %268 = vmatpush1.bf16.msra.mxu0 0
    %269 = vmatprep.subr.bf16.mxu0 0
    %270 = vmatpush1.bf16.msra.mxu0 0
    %271 = vmatprep.subr.bf16.mxu0 0
    %272 = vmatpush1.bf16.msra.mxu0 0
    %273 = vmatprep.subr.bf16.mxu0 0
    %274 = vmatpush1.bf16.msra.mxu0 0
    %275 = vmatprep.subr.bf16.mxu0 0
    %276 = vmatpush1.bf16.msra.mxu0 0
    %277 = vmatprep.subr.bf16.mxu0 0
    %278 = vmatpush1.bf16.msra.mxu0 0
    %279 = vmatprep.subr.bf16.mxu0 0
    %280 = vmatpush1.bf16.msra.mxu0 0
    %281 = vmatprep.subr.bf16.mxu0 0
    %282 = vmatpush1.bf16.msra.mxu0 0
    %283 = vmatprep.subr.bf16.mxu0 0
    %284 = vmatpush1.bf16.msra.mxu0 0
    %285 = vmatprep.subr.bf16.mxu0 0
    %286 = vmatpush1.bf16.msra.mxu0 0
    %287 = vmatprep.subr.bf16.mxu0 0
    %288 = vmatpush1.bf16.msra.mxu0 0
    %289 = vmatprep.subr.bf16.mxu0 0
    %290 = vmatpush1.bf16.msra.mxu0 0
    %291 = vmatprep.mubr.bf16.mxu0 0
    %292 = vmatmul.mubr.bf16.gmra.mrb[0].mxu0 %v257
    %v293 = vpop.f32.mrb[0].mxu0
    %v294 = vadd.f32 %v236, %v293
    %v295 = vpop.f32.mrb[0].mxu0
    %v296 = vpop.f32.mrb[0].mxu0
    %v297 = vadd.f32 %v236, %v296
    %v298 = vpop.f32.mrb[0].mxu0
    %299 = vdwg.mxu0
    %v300 = vpack.c.bf16 %v297, %v294
    %302 = vrot.lane.b32.xlu0 %v300, 120
    %v303 = vpop.permute.xlu0 %302
    %304 = vrot.lane.b32.xlu0 %v300, 112
    %v305 = vpop.permute.xlu0 %304
    %306 = vrot.lane.b32.xlu0 %v300, 104
    %v307 = vpop.permute.xlu0 %306
    %v308 = vld [vmem:[#allocation5] sm:$0xf]
    %v309 = vld [vmem:[#allocation5 + $0x4] sm:$0xf]
    %v310 = vld [vmem:[#allocation5 + $0x8] sm:$0xf]
    %v311 = vld [vmem:[#allocation5 + $0xc] sm:$0xf]
    %v312 = vunpack.c.l.bf16 %v308
    %v313 = vunpack.c.l.bf16 %v309
    %v314 = vunpack.c.l.bf16 %v310
    %v315 = vunpack.c.l.bf16 %v311
    %316 = vrot.lane.b32.xlu0 %v300, 96
    %v317 = vpop.permute.xlu0 %316
    %vm318 = vcmask 64512
    %v320 = vsel %vm318, %v300, 0
    %v323 = vsel %vm318, %v317, 0
    %325 = vmatprep.subr.bf16.mxu0 0
    %326 = vmatpush1.bf16.xpose.msra.mxu0 %v323
    %327 = vmatprep.subr.bf16.mxu0 0
    %328 = vmatpush1.bf16.xpose.msra.mxu0 0
    %329 = vmatprep.subr.bf16.mxu0 0
    %330 = vmatpush1.bf16.xpose.msra.mxu0 0
    %331 = vmatprep.subr.bf16.mxu0 0
    %332 = vmatpush1.bf16.xpose.msra.mxu0 0
    %333 = vmatprep.subr.bf16.mxu0 0
    %334 = vmatpush1.bf16.xpose.msra.mxu0 0
    %335 = vmatprep.subr.bf16.mxu0 0
    %336 = vmatpush1.bf16.xpose.msra.mxu0 0
    %337 = vmatprep.subr.bf16.mxu0 0
    %338 = vmatpush1.bf16.xpose.msra.mxu0 0
    %339 = vmatprep.subr.bf16.mxu0 0
    %340 = vmatpush1.bf16.xpose.msra.mxu0 0
    %341 = vmatprep.subr.bf16.mxu0 0
    %342 = vmatpush1.bf16.xpose.msra.mxu0 0
    %343 = vmatprep.subr.bf16.mxu0 0
    %344 = vmatpush1.bf16.xpose.msra.mxu0 0
    %345 = vmatprep.subr.bf16.mxu0 0
    %346 = vmatpush1.bf16.xpose.msra.mxu0 0
    %347 = vmatprep.subr.bf16.mxu0 0
    %348 = vmatpush1.bf16.xpose.msra.mxu0 0
    %349 = vmatprep.subr.bf16.mxu0 0
    %350 = vmatpush1.bf16.xpose.msra.mxu0 0
    %351 = vmatprep.subr.bf16.mxu0 0
    %352 = vmatpush1.bf16.xpose.msra.mxu0 0
    %353 = vmatprep.subr.bf16.mxu0 0
    %354 = vmatpush1.bf16.xpose.msra.mxu0 0
    %355 = vmatprep.subr.bf16.mxu0 0
    %356 = vmatpush1.bf16.xpose.msra.mxu0 0
    %357 = vmatprep.mubr.bf16.mxu0 0
    %358 = vmatmul.mubr.bf16.gmra.mrb[0].mxu0 %v320
    %v359 = vpop.f32.mrb[0].mxu0
    %v360 = vadd.f32 %v312, %v359
    %v361 = vpop.f32.mrb[0].mxu0
    %v362 = vpop.f32.mrb[0].mxu0
    %v363 = vpop.f32.mrb[0].mxu0
    %364 = vdwg.mxu0
    %365 = vrot.lane.b32.xlu0 %v303, 96
    %v366 = vpop.permute.xlu0 %365
    %v368 = vsel %vm318, %v303, 0
    %v371 = vsel %vm318, %v366, 0
    %373 = vmatprep.subr.bf16.mxu0 0
    %374 = vmatpush1.bf16.xpose.msra.mxu0 %v371
    %375 = vmatprep.subr.bf16.mxu0 0
    %376 = vmatpush1.bf16.xpose.msra.mxu0 0
    %377 = vmatprep.subr.bf16.mxu0 0
    %378 = vmatpush1.bf16.xpose.msra.mxu0 0
    %379 = vmatprep.subr.bf16.mxu0 0
    %380 = vmatpush1.bf16.xpose.msra.mxu0 0
    %381 = vmatprep.subr.bf16.mxu0 0
    %382 = vmatpush1.bf16.xpose.msra.mxu0 0
    %383 = vmatprep.subr.bf16.mxu0 0
    %384 = vmatpush1.bf16.xpose.msra.mxu0 0
    %385 = vmatprep.subr.bf16.mxu0 0
    %386 = vmatpush1.bf16.xpose.msra.mxu0 0
    %387 = vmatprep.subr.bf16.mxu0 0
    %388 = vmatpush1.bf16.xpose.msra.mxu0 0
    %389 = vmatprep.subr.bf16.mxu0 0
    %390 = vmatpush1.bf16.xpose.msra.mxu0 0
    %391 = vmatprep.subr.bf16.mxu0 0
    %392 = vmatpush1.bf16.xpose.msra.mxu0 0
    %393 = vmatprep.subr.bf16.mxu0 0
    %394 = vmatpush1.bf16.xpose.msra.mxu0 0
    %395 = vmatprep.subr.bf16.mxu0 0
    %396 = vmatpush1.bf16.xpose.msra.mxu0 0
    %397 = vmatprep.subr.bf16.mxu0 0
    %398 = vmatpush1.bf16.xpose.msra.mxu0 0
    %399 = vmatprep.subr.bf16.mxu0 0
    %400 = vmatpush1.bf16.xpose.msra.mxu0 0
    %401 = vmatprep.subr.bf16.mxu0 0
    %402 = vmatpush1.bf16.xpose.msra.mxu0 0
    %403 = vmatprep.subr.bf16.mxu0 0
    %404 = vmatpush1.bf16.xpose.msra.mxu0 0
    %405 = vmatprep.mubr.bf16.mxu0 0
    %406 = vmatmul.mubr.bf16.gmra.mrb[0].mxu0 %v368
    %v407 = vpop.f32.mrb[0].mxu0
    %v408 = vadd.f32 %v313, %v407
    %v409 = vpop.f32.mrb[0].mxu0
    %v410 = vpop.f32.mrb[0].mxu0
    %v411 = vpop.f32.mrb[0].mxu0
    %412 = vdwg.mxu0
    %413 = vrot.lane.b32.xlu0 %v305, 96
    %v414 = vpop.permute.xlu0 %413
    %v416 = vsel %vm318, %v305, 0
    %v419 = vsel %vm318, %v414, 0
    %421 = vmatprep.subr.bf16.mxu0 0
    %422 = vmatpush1.bf16.xpose.msra.mxu0 %v419
    %423 = vmatprep.subr.bf16.mxu0 0
    %424 = vmatpush1.bf16.xpose.msra.mxu0 0
    %425 = vmatprep.subr.bf16.mxu0 0
    %426 = vmatpush1.bf16.xpose.msra.mxu0 0
    %427 = vmatprep.subr.bf16.mxu0 0
    %428 = vmatpush1.bf16.xpose.msra.mxu0 0
    %429 = vmatprep.subr.bf16.mxu0 0
    %430 = vmatpush1.bf16.xpose.msra.mxu0 0
    %431 = vmatprep.subr.bf16.mxu0 0
    %432 = vmatpush1.bf16.xpose.msra.mxu0 0
    %433 = vmatprep.subr.bf16.mxu0 0
    %434 = vmatpush1.bf16.xpose.msra.mxu0 0
    %435 = vmatprep.subr.bf16.mxu0 0
    %436 = vmatpush1.bf16.xpose.msra.mxu0 0
    %437 = vmatprep.subr.bf16.mxu0 0
    %438 = vmatpush1.bf16.xpose.msra.mxu0 0
    %439 = vmatprep.subr.bf16.mxu0 0
    %440 = vmatpush1.bf16.xpose.msra.mxu0 0
    %441 = vmatprep.subr.bf16.mxu0 0
    %442 = vmatpush1.bf16.xpose.msra.mxu0 0
    %443 = vmatprep.subr.bf16.mxu0 0
    %444 = vmatpush1.bf16.xpose.msra.mxu0 0
    %445 = vmatprep.subr.bf16.mxu0 0
    %446 = vmatpush1.bf16.xpose.msra.mxu0 0
    %447 = vmatprep.subr.bf16.mxu0 0
    %448 = vmatpush1.bf16.xpose.msra.mxu0 0
    %449 = vmatprep.subr.bf16.mxu0 0
    %450 = vmatpush1.bf16.xpose.msra.mxu0 0
    %451 = vmatprep.subr.bf16.mxu0 0
    %452 = vmatpush1.bf16.xpose.msra.mxu0 0
    %453 = vmatprep.mubr.bf16.mxu0 0
    %454 = vmatmul.mubr.bf16.gmra.mrb[0].mxu0 %v416
    %v455 = vpop.f32.mrb[0].mxu0
    %v456 = vadd.f32 %v314, %v455
    %v457 = vpop.f32.mrb[0].mxu0
    %v458 = vpop.f32.mrb[0].mxu0
    %v459 = vpop.f32.mrb[0].mxu0
    %460 = vdwg.mxu0
    %461 = vrot.lane.b32.xlu0 %v307, 96
    %v462 = vpop.permute.xlu0 %461
    %v464 = vsel %vm318, %v307, 0
    %v467 = vsel %vm318, %v462, 0
    %469 = vmatprep.subr.bf16.mxu0 0
    %470 = vmatpush1.bf16.xpose.msra.mxu0 %v467
    %471 = vmatprep.subr.bf16.mxu0 0
    %472 = vmatpush1.bf16.xpose.msra.mxu0 0
    %473 = vmatprep.subr.bf16.mxu0 0
    %474 = vmatpush1.bf16.xpose.msra.mxu0 0
    %475 = vmatprep.subr.bf16.mxu0 0
    %476 = vmatpush1.bf16.xpose.msra.mxu0 0
    %477 = vmatprep.subr.bf16.mxu0 0
    %478 = vmatpush1.bf16.xpose.msra.mxu0 0
    %479 = vmatprep.subr.bf16.mxu0 0
    %480 = vmatpush1.bf16.xpose.msra.mxu0 0
    %481 = vmatprep.subr.bf16.mxu0 0
    %482 = vmatpush1.bf16.xpose.msra.mxu0 0
    %483 = vmatprep.subr.bf16.mxu0 0
    %484 = vmatpush1.bf16.xpose.msra.mxu0 0
    %485 = vmatprep.subr.bf16.mxu0 0
    %486 = vmatpush1.bf16.xpose.msra.mxu0 0
    %487 = vmatprep.subr.bf16.mxu0 0
    %488 = vmatpush1.bf16.xpose.msra.mxu0 0
    %489 = vmatprep.subr.bf16.mxu0 0
    %490 = vmatpush1.bf16.xpose.msra.mxu0 0
    %491 = vmatprep.subr.bf16.mxu0 0
    %492 = vmatpush1.bf16.xpose.msra.mxu0 0
    %493 = vmatprep.subr.bf16.mxu0 0
    %494 = vmatpush1.bf16.xpose.msra.mxu0 0
    %495 = vmatprep.subr.bf16.mxu0 0
    %496 = vmatpush1.bf16.xpose.msra.mxu0 0
    %497 = vmatprep.subr.bf16.mxu0 0
    %498 = vmatpush1.bf16.xpose.msra.mxu0 0
    %499 = vmatprep.subr.bf16.mxu0 0
    %500 = vmatpush1.bf16.xpose.msra.mxu0 0
    %501 = vmatprep.mubr.bf16.mxu0 0
    %502 = vmatmul.mubr.bf16.gmra.mrb[0].mxu0 %v464
    %v503 = vpop.f32.mrb[0].mxu0
    %v504 = vadd.f32 %v315, %v503
    %v505 = vpop.f32.mrb[0].mxu0
    %v506 = vpop.f32.mrb[0].mxu0
    %v507 = vpop.f32.mrb[0].mxu0
    %508 = vdwg.mxu0
    %v509 = vsel %vm318, %v360, -inf
    %510 = vmax.xlane.f32.xlu0 %v509
    %v511 = vpop.xlane.xlu0 %510
    %v512 = vsel %vm318, %v408, -inf
    %513 = vmax.xlane.f32.xlu0 %v512
    %v514 = vpop.xlane.xlu0 %513
    %v515 = vsel %vm318, %v456, -inf
    %516 = vmax.xlane.f32.xlu0 %v515
    %v517 = vpop.xlane.xlu0 %516
    %v518 = vsel %vm318, %v504, -inf
    %519 = vmax.xlane.f32.xlu0 %v518
    %v520 = vpop.xlane.xlu0 %519
    %v521 = vsub.f32 %v360, %v511
    %v522 = vsub.f32 %v408, %v514
    %v523 = vsub.f32 %v456, %v517
    %v524 = vsub.f32 %v504, %v520
    %v525 = vmul.f32 %v521, 1.442695
    %v526 = vpow.pop %v525
    %v527 = vmul.f32 %v522, 1.442695
    %v528 = vpow.pop %v527
    %v529 = vmul.f32 %v523, 1.442695
    %v530 = vpow.pop %v529
    %v531 = vmul.f32 %v524, 1.442695
    %v532 = vpow.pop %v531
    %v533 = vsel %vm318, %v526, 0.0
    %534 = vadd.xlane.f32.xlu0 %v533
    %v535 = vpop.xlane.xlu0 %534
    %v536 = vsel %vm318, %v528, 0.0
    %537 = vadd.xlane.f32.xlu0 %v536
    %v538 = vpop.xlane.xlu0 %537
    %v539 = vsel %vm318, %v530, 0.0
    %540 = vadd.xlane.f32.xlu0 %v539
    %v541 = vpop.xlane.xlu0 %540
    %v542 = vsel %vm318, %v532, 0.0
    %543 = vadd.xlane.f32.xlu0 %v542
    %v544 = vpop.xlane.xlu0 %543
    %v545 = vrcp.pop %v535
    %v546 = vrcp.pop %v538
    %v547 = vrcp.pop %v541
    %v548 = vrcp.pop %v544
    %v549 = vmul.f32 %v526, %v545
    %v550 = vmul.f32 %v528, %v546
    %v551 = vmul.f32 %v530, %v547
    %v552 = vmul.f32 %v532, %v548
    %v553 = vpack.c.bf16 %v549, %v549
    %v554 = vpack.c.bf16 %v550, %v550
    %v555 = vpack.c.bf16 %v551, %v551
    %v556 = vpack.c.bf16 %v552, %v552
    %557 = vrot.lane.b32.xlu0 %v300, 64
    %v558 = vpop.permute.xlu0 %557
    %v560 = vsel %vm318, %v553, 0
    %vm562 = vcmask 1043456
    %v564 = vsel %vm562, %v558, 0
    %566 = vmatprep.subr.bf16.mxu0 0
    %567 = vmatpush1.bf16.msra.mxu0 %v564
    %568 = vmatprep.subr.bf16.mxu0 0
    %569 = vmatpush1.bf16.msra.mxu0 0
    %570 = vmatprep.subr.bf16.mxu0 0
    %571 = vmatpush1.bf16.msra.mxu0 0
    %572 = vmatprep.subr.bf16.mxu0 0
    %573 = vmatpush1.bf16.msra.mxu0 0
    %574 = vmatprep.subr.bf16.mxu0 0
    %575 = vmatpush1.bf16.msra.mxu0 0
    %576 = vmatprep.subr.bf16.mxu0 0
    %577 = vmatpush1.bf16.msra.mxu0 0
    %578 = vmatprep.subr.bf16.mxu0 0
    %579 = vmatpush1.bf16.msra.mxu0 0
    %580 = vmatprep.subr.bf16.mxu0 0
    %581 = vmatpush1.bf16.msra.mxu0 0
    %582 = vmatprep.subr.bf16.mxu0 0
    %583 = vmatpush1.bf16.msra.mxu0 0
    %584 = vmatprep.subr.bf16.mxu0 0
    %585 = vmatpush1.bf16.msra.mxu0 0
    %586 = vmatprep.subr.bf16.mxu0 0
    %587 = vmatpush1.bf16.msra.mxu0 0
    %588 = vmatprep.subr.bf16.mxu0 0
    %589 = vmatpush1.bf16.msra.mxu0 0
    %590 = vmatprep.subr.bf16.mxu0 0
    %591 = vmatpush1.bf16.msra.mxu0 0
    %592 = vmatprep.subr.bf16.mxu0 0
    %593 = vmatpush1.bf16.msra.mxu0 0
    %594 = vmatprep.subr.bf16.mxu0 0
    %595 = vmatpush1.bf16.msra.mxu0 0
    %596 = vmatprep.subr.bf16.mxu0 0
    %597 = vmatpush1.bf16.msra.mxu0 0
    %598 = vmatprep.mubr.bf16.mxu0 0
    %599 = vmatmul.mubr.bf16.gmra.mrb[0].mxu0 %v560
    %v600 = vpop.f32.mrb[0].mxu0
    %v601 = vadd.f32 0.0, %v600
    %v602 = vpop.f32.mrb[0].mxu0
    %v603 = vpop.f32.mrb[0].mxu0
    %v604 = vpop.f32.mrb[0].mxu0
    %605 = vdwg.mxu0
    %606 = vrot.lane.b32.xlu0 %v303, 64
    %v607 = vpop.permute.xlu0 %606
    %v609 = vsel %vm318, %v554, 0
    %v612 = vsel %vm562, %v607, 0
    %614 = vmatprep.subr.bf16.mxu0 0
    %615 = vmatpush1.bf16.msra.mxu0 %v612
    %616 = vmatprep.subr.bf16.mxu0 0
    %617 = vmatpush1.bf16.msra.mxu0 0
    %618 = vmatprep.subr.bf16.mxu0 0
    %619 = vmatpush1.bf16.msra.mxu0 0
    %620 = vmatprep.subr.bf16.mxu0 0
    %621 = vmatpush1.bf16.msra.mxu0 0
    %622 = vmatprep.subr.bf16.mxu0 0
    %623 = vmatpush1.bf16.msra.mxu0 0
    %624 = vmatprep.subr.bf16.mxu0 0
    %625 = vmatpush1.bf16.msra.mxu0 0
    %626 = vmatprep.subr.bf16.mxu0 0
    %627 = vmatpush1.bf16.msra.mxu0 0
    %628 = vmatprep.subr.bf16.mxu0 0
    %629 = vmatpush1.bf16.msra.mxu0 0
    %630 = vmatprep.subr.bf16.mxu0 0
    %631 = vmatpush1.bf16.msra.mxu0 0
    %632 = vmatprep.subr.bf16.mxu0 0
    %633 = vmatpush1.bf16.msra.mxu0 0
    %634 = vmatprep.subr.bf16.mxu0 0
    %635 = vmatpush1.bf16.msra.mxu0 0
    %636 = vmatprep.subr.bf16.mxu0 0
    %637 = vmatpush1.bf16.msra.mxu0 0
    %638 = vmatprep.subr.bf16.mxu0 0
    %639 = vmatpush1.bf16.msra.mxu0 0
    %640 = vmatprep.subr.bf16.mxu0 0
    %641 = vmatpush1.bf16.msra.mxu0 0
    %642 = vmatprep.subr.bf16.mxu0 0
    %643 = vmatpush1.bf16.msra.mxu0 0
    %644 = vmatprep.subr.bf16.mxu0 0
    %645 = vmatpush1.bf16.msra.mxu0 0
    %646 = vmatprep.mubr.bf16.mxu0 0
    %647 = vmatmul.mubr.bf16.gmra.mrb[0].mxu0 %v609
    %v648 = vpop.f32.mrb[0].mxu0
    %v649 = vadd.f32 0.0, %v648
    %v650 = vpop.f32.mrb[0].mxu0
    %v651 = vpop.f32.mrb[0].mxu0
    %v652 = vpop.f32.mrb[0].mxu0
    %653 = vdwg.mxu0
    %654 = vrot.lane.b32.xlu0 %v305, 64
    %v655 = vpop.permute.xlu0 %654
    %v657 = vsel %vm318, %v555, 0
    %v660 = vsel %vm562, %v655, 0
    %662 = vmatprep.subr.bf16.mxu0 0
    %663 = vmatpush1.bf16.msra.mxu0 %v660
    %664 = vmatprep.subr.bf16.mxu0 0
    %665 = vmatpush1.bf16.msra.mxu0 0
    %666 = vmatprep.subr.bf16.mxu0 0
    %667 = vmatpush1.bf16.msra.mxu0 0
    %668 = vmatprep.subr.bf16.mxu0 0
    %669 = vmatpush1.bf16.msra.mxu0 0
    %670 = vmatprep.subr.bf16.mxu0 0
    %671 = vmatpush1.bf16.msra.mxu0 0
    %672 = vmatprep.subr.bf16.mxu0 0
    %673 = vmatpush1.bf16.msra.mxu0 0
    %674 = vmatprep.subr.bf16.mxu0 0
    %675 = vmatpush1.bf16.msra.mxu0 0
    %676 = vmatprep.subr.bf16.mxu0 0
    %677 = vmatpush1.bf16.msra.mxu0 0
    %678 = vmatprep.subr.bf16.mxu0 0
    %679 = vmatpush1.bf16.msra.mxu0 0
    %680 = vmatprep.subr.bf16.mxu0 0
    %681 = vmatpush1.bf16.msra.mxu0 0
    %682 = vmatprep.subr.bf16.mxu0 0
    %683 = vmatpush1.bf16.msra.mxu0 0
    %684 = vmatprep.subr.bf16.mxu0 0
    %685 = vmatpush1.bf16.msra.mxu0 0
    %686 = vmatprep.subr.bf16.mxu0 0
    %687 = vmatpush1.bf16.msra.mxu0 0
    %688 = vmatprep.subr.bf16.mxu0 0
    %689 = vmatpush1.bf16.msra.mxu0 0
    %690 = vmatprep.subr.bf16.mxu0 0
    %691 = vmatpush1.bf16.msra.mxu0 0
    %692 = vmatprep.subr.bf16.mxu0 0
    %693 = vmatpush1.bf16.msra.mxu0 0
    %694 = vmatprep.mubr.bf16.mxu0 0
    %695 = vmatmul.mubr.bf16.gmra.mrb[0].mxu0 %v657
    %v696 = vpop.f32.mrb[0].mxu0
    %v697 = vadd.f32 0.0, %v696
    %v698 = vpop.f32.mrb[0].mxu0
    %v699 = vpop.f32.mrb[0].mxu0
    %v700 = vpop.f32.mrb[0].mxu0
    %701 = vdwg.mxu0
    %702 = vrot.lane.b32.xlu0 %v307, 64
    %v703 = vpop.permute.xlu0 %702
    %v705 = vsel %vm318, %v556, 0
    %v708 = vsel %vm562, %v703, 0
    %710 = vmatprep.subr.bf16.mxu0 0
    %711 = vmatpush1.bf16.msra.mxu0 %v708
    %712 = vmatprep.subr.bf16.mxu0 0
    %713 = vmatpush1.bf16.msra.mxu0 0
    %714 = vmatprep.subr.bf16.mxu0 0
    %715 = vmatpush1.bf16.msra.mxu0 0
    %716 = vmatprep.subr.bf16.mxu0 0
    %717 = vmatpush1.bf16.msra.mxu0 0
    %718 = vmatprep.subr.bf16.mxu0 0
    %719 = vmatpush1.bf16.msra.mxu0 0
    %720 = vmatprep.subr.bf16.mxu0 0
    %721 = vmatpush1.bf16.msra.mxu0 0
    %722 = vmatprep.subr.bf16.mxu0 0
    %723 = vmatpush1.bf16.msra.mxu0 0
    %724 = vmatprep.subr.bf16.mxu0 0
    %725 = vmatpush1.bf16.msra.mxu0 0
    %726 = vmatprep.subr.bf16.mxu0 0
    %727 = vmatpush1.bf16.msra.mxu0 0
    %728 = vmatprep.subr.bf16.mxu0 0
    %729 = vmatpush1.bf16.msra.mxu0 0
    %730 = vmatprep.subr.bf16.mxu0 0
    %731 = vmatpush1.bf16.msra.mxu0 0
    %732 = vmatprep.subr.bf16.mxu0 0
    %733 = vmatpush1.bf16.msra.mxu0 0
    %734 = vmatprep.subr.bf16.mxu0 0
    %735 = vmatpush1.bf16.msra.mxu0 0
    %736 = vmatprep.subr.bf16.mxu0 0
    %737 = vmatpush1.bf16.msra.mxu0 0
    %738 = vmatprep.subr.bf16.mxu0 0
    %739 = vmatpush1.bf16.msra.mxu0 0
    %740 = vmatprep.subr.bf16.mxu0 0
    %741 = vmatpush1.bf16.msra.mxu0 0
    %742 = vmatprep.mubr.bf16.mxu0 0
    %743 = vmatmul.mubr.bf16.gmra.mrb[0].mxu0 %v705
    %v744 = vpop.f32.mrb[0].mxu0
    %v745 = vadd.f32 0.0, %v744
    %v746 = vpop.f32.mrb[0].mxu0
    %v747 = vpop.f32.mrb[0].mxu0
    %v748 = vpop.f32.mrb[0].mxu0
    %749 = vdwg.mxu0
    %v750 = vpack.c.bf16 %v601, %v601
    %v751 = vpack.c.bf16 %v649, %v649
    %v752 = vpack.c.bf16 %v697, %v697
    %v753 = vpack.c.bf16 %v745, %v745
    %v754 = vld [vmem:[#allocation10] sm:$0xf]
    %s755 = scalar_lea.vmem [#allocation10], 4
    %v756 = vld [vmem:[%s755] sm:$0xf]
    %v758 = vsel %vm318, %v751, 0
    %v761 = vsel %vm562, %v756, 0
    %763 = vmatprep.subr.bf16.mxu0 0
    %764 = vmatpush1.bf16.msra.mxu0 %v761
    %765 = vmatprep.subr.bf16.mxu0 0
    %766 = vmatpush1.bf16.msra.mxu0 0
    %767 = vmatprep.subr.bf16.mxu0 0
    %768 = vmatpush1.bf16.msra.mxu0 0
    %769 = vmatprep.subr.bf16.mxu0 0
    %770 = vmatpush1.bf16.msra.mxu0 0
    %771 = vmatprep.subr.bf16.mxu0 0
    %772 = vmatpush1.bf16.msra.mxu0 0
    %773 = vmatprep.subr.bf16.mxu0 0
    %774 = vmatpush1.bf16.msra.mxu0 0
    %775 = vmatprep.subr.bf16.mxu0 0
    %776 = vmatpush1.bf16.msra.mxu0 0
    %777 = vmatprep.subr.bf16.mxu0 0
    %778 = vmatpush1.bf16.msra.mxu0 0
    %779 = vmatprep.subr.bf16.mxu0 0
    %780 = vmatpush1.bf16.msra.mxu0 0
    %781 = vmatprep.subr.bf16.mxu0 0
    %782 = vmatpush1.bf16.msra.mxu0 0
    %783 = vmatprep.subr.bf16.mxu0 0
    %784 = vmatpush1.bf16.msra.mxu0 0
    %785 = vmatprep.subr.bf16.mxu0 0
    %786 = vmatpush1.bf16.msra.mxu0 0
    %787 = vmatprep.subr.bf16.mxu0 0
    %788 = vmatpush1.bf16.msra.mxu0 0
    %789 = vmatprep.subr.bf16.mxu0 0
    %790 = vmatpush1.bf16.msra.mxu0 0
    %791 = vmatprep.subr.bf16.mxu0 0
    %792 = vmatpush1.bf16.msra.mxu0 0
    %793 = vmatprep.subr.bf16.mxu0 0
    %794 = vmatpush1.bf16.msra.mxu0 0
    %795 = vmatprep.mubr.bf16.mxu0 0
    %796 = vmatmul.mubr.bf16.gmra.mrb[0].mxu0 %v758
    %v797 = vpop.f32.mrb[0].mxu0
    %v798 = vadd.f32 0.0, %v797
    %v799 = vpop.f32.mrb[0].mxu0
    %v800 = vpop.f32.mrb[0].mxu0
    %v801 = vpop.f32.mrb[0].mxu0
    %802 = vdwg.mxu0
    %v804 = vsel %vm318, %v750, 0
    %v807 = vsel %vm562, %v754, 0
    %809 = vmatprep.subr.bf16.mxu0 0
    %810 = vmatpush1.bf16.msra.mxu0 %v807
    %811 = vmatprep.subr.bf16.mxu0 0
    %812 = vmatpush1.bf16.msra.mxu0 0
    %813 = vmatprep.subr.bf16.mxu0 0
    %814 = vmatpush1.bf16.msra.mxu0 0
    %815 = vmatprep.subr.bf16.mxu0 0
    %816 = vmatpush1.bf16.msra.mxu0 0
    %817 = vmatprep.subr.bf16.mxu0 0
    %818 = vmatpush1.bf16.msra.mxu0 0
    %819 = vmatprep.subr.bf16.mxu0 0
    %820 = vmatpush1.bf16.msra.mxu0 0
    %821 = vmatprep.subr.bf16.mxu0 0
    %822 = vmatpush1.bf16.msra.mxu0 0
    %823 = vmatprep.subr.bf16.mxu0 0
    %824 = vmatpush1.bf16.msra.mxu0 0
    %825 = vmatprep.subr.bf16.mxu0 0
    %826 = vmatpush1.bf16.msra.mxu0 0
    %827 = vmatprep.subr.bf16.mxu0 0
    %828 = vmatpush1.bf16.msra.mxu0 0
    %829 = vmatprep.subr.bf16.mxu0 0
    %830 = vmatpush1.bf16.msra.mxu0 0
    %831 = vmatprep.subr.bf16.mxu0 0
    %832 = vmatpush1.bf16.msra.mxu0 0
    %833 = vmatprep.subr.bf16.mxu0 0
    %834 = vmatpush1.bf16.msra.mxu0 0
    %835 = vmatprep.subr.bf16.mxu0 0
    %836 = vmatpush1.bf16.msra.mxu0 0
    %837 = vmatprep.subr.bf16.mxu0 0
    %838 = vmatpush1.bf16.msra.mxu0 0
    %839 = vmatprep.subr.bf16.mxu0 0
    %840 = vmatpush1.bf16.msra.mxu0 0
    %841 = vmatprep.mubr.bf16.mxu0 0
    %842 = vmatmul.mubr.bf16.gmra.mrb[0].mxu0 %v804
    %v843 = vpop.f32.mrb[0].mxu0
    %v844 = vadd.f32 %v798, %v843
    %v845 = vpop.f32.mrb[0].mxu0
    %v846 = vpop.f32.mrb[0].mxu0
    %v847 = vpop.f32.mrb[0].mxu0
    %848 = vdwg.mxu0
    %s849 = scalar_lea.vmem [#allocation10], 8
    %v850 = vld [vmem:[%s849] sm:$0xf]
    %v852 = vsel %vm318, %v752, 0
    %v855 = vsel %vm562, %v850, 0
    %857 = vmatprep.subr.bf16.mxu0 0
    %858 = vmatpush1.bf16.msra.mxu0 %v855
    %859 = vmatprep.subr.bf16.mxu0 0
    %860 = vmatpush1.bf16.msra.mxu0 0
    %861 = vmatprep.subr.bf16.mxu0 0
    %862 = vmatpush1.bf16.msra.mxu0 0
    %863 = vmatprep.subr.bf16.mxu0 0
    %864 = vmatpush1.bf16.msra.mxu0 0
    %865 = vmatprep.subr.bf16.mxu0 0
    %866 = vmatpush1.bf16.msra.mxu0 0
    %867 = vmatprep.subr.bf16.mxu0 0
    %868 = vmatpush1.bf16.msra.mxu0 0
    %869 = vmatprep.subr.bf16.mxu0 0
    %870 = vmatpush1.bf16.msra.mxu0 0
    %871 = vmatprep.subr.bf16.mxu0 0
    %872 = vmatpush1.bf16.msra.mxu0 0
    %873 = vmatprep.subr.bf16.mxu0 0
    %874 = vmatpush1.bf16.msra.mxu0 0
    %875 = vmatprep.subr.bf16.mxu0 0
    %876 = vmatpush1.bf16.msra.mxu0 0
    %877 = vmatprep.subr.bf16.mxu0 0
    %878 = vmatpush1.bf16.msra.mxu0 0
    %879 = vmatprep.subr.bf16.mxu0 0
    %880 = vmatpush1.bf16.msra.mxu0 0
    %881 = vmatprep.subr.bf16.mxu0 0
    %882 = vmatpush1.bf16.msra.mxu0 0
    %883 = vmatprep.subr.bf16.mxu0 0
    %884 = vmatpush1.bf16.msra.mxu0 0
    %885 = vmatprep.subr.bf16.mxu0 0
    %886 = vmatpush1.bf16.msra.mxu0 0
    %887 = vmatprep.subr.bf16.mxu0 0
    %888 = vmatpush1.bf16.msra.mxu0 0
    %889 = vmatprep.mubr.bf16.mxu0 0
    %890 = vmatmul.mubr.bf16.gmra.mrb[0].mxu0 %v852
    %v891 = vpop.f32.mrb[0].mxu0
    %v892 = vadd.f32 0.0, %v891
    %v893 = vpop.f32.mrb[0].mxu0
    %v894 = vpop.f32.mrb[0].mxu0
    %v895 = vpop.f32.mrb[0].mxu0
    %896 = vdwg.mxu0
    %v897 = vadd.f32 %v844, %v892
    %s898 = scalar_lea.vmem [#allocation10], 12
    %v899 = vld [vmem:[%s898] sm:$0xf]
    %v901 = vsel %vm318, %v753, 0
    %v904 = vsel %vm562, %v899, 0
    %906 = vmatprep.subr.bf16.mxu0 0
    %907 = vmatpush1.bf16.msra.mxu0 %v904
    %908 = vmatprep.subr.bf16.mxu0 0
    %909 = vmatpush1.bf16.msra.mxu0 0
    %910 = vmatprep.subr.bf16.mxu0 0
    %911 = vmatpush1.bf16.msra.mxu0 0
    %912 = vmatprep.subr.bf16.mxu0 0
    %913 = vmatpush1.bf16.msra.mxu0 0
    %914 = vmatprep.subr.bf16.mxu0 0
    %915 = vmatpush1.bf16.msra.mxu0 0
    %916 = vmatprep.subr.bf16.mxu0 0
    %917 = vmatpush1.bf16.msra.mxu0 0
    %918 = vmatprep.subr.bf16.mxu0 0
    %919 = vmatpush1.bf16.msra.mxu0 0
    %920 = vmatprep.subr.bf16.mxu0 0
    %921 = vmatpush1.bf16.msra.mxu0 0
    %922 = vmatprep.subr.bf16.mxu0 0
    %923 = vmatpush1.bf16.msra.mxu0 0
    %924 = vmatprep.subr.bf16.mxu0 0
    %925 = vmatpush1.bf16.msra.mxu0 0
    %926 = vmatprep.subr.bf16.mxu0 0
    %927 = vmatpush1.bf16.msra.mxu0 0
    %928 = vmatprep.subr.bf16.mxu0 0
    %929 = vmatpush1.bf16.msra.mxu0 0
    %930 = vmatprep.subr.bf16.mxu0 0
    %931 = vmatpush1.bf16.msra.mxu0 0
    %932 = vmatprep.subr.bf16.mxu0 0
    %933 = vmatpush1.bf16.msra.mxu0 0
    %934 = vmatprep.subr.bf16.mxu0 0
    %935 = vmatpush1.bf16.msra.mxu0 0
    %936 = vmatprep.subr.bf16.mxu0 0
    %937 = vmatpush1.bf16.msra.mxu0 0
    %938 = vmatprep.mubr.bf16.mxu0 0
    %939 = vmatmul.mubr.bf16.gmra.mrb[0].mxu0 %v901
    %v940 = vpop.f32.mrb[0].mxu0
    %v941 = vadd.f32 0.0, %v940
    %v942 = vpop.f32.mrb[0].mxu0
    %v943 = vpop.f32.mrb[0].mxu0
    %v944 = vpop.f32.mrb[0].mxu0
    %945 = vdwg.mxu0
    %v946 = vadd.f32 %v897, %v941
    %v947 = vrot.slane %v300, 4
    %948 = vrot.lane.b32.xlu0 %v947, 96
    %v949 = vpop.permute.xlu0 %948
    %v951 = vsel %vm318, %v947, 0
    %v954 = vsel %vm318, %v949, 0
    %956 = vmatprep.subr.bf16.mxu0 0
    %957 = vmatpush1.bf16.xpose.msra.mxu0 %v954
    %958 = vmatprep.subr.bf16.mxu0 0
    %959 = vmatpush1.bf16.xpose.msra.mxu0 0
    %960 = vmatprep.subr.bf16.mxu0 0
    %961 = vmatpush1.bf16.xpose.msra.mxu0 0
    %962 = vmatprep.subr.bf16.mxu0 0
    %963 = vmatpush1.bf16.xpose.msra.mxu0 0
    %964 = vmatprep.subr.bf16.mxu0 0
    %965 = vmatpush1.bf16.xpose.msra.mxu0 0
    %966 = vmatprep.subr.bf16.mxu0 0
    %967 = vmatpush1.bf16.xpose.msra.mxu0 0
    %968 = vmatprep.subr.bf16.mxu0 0
    %969 = vmatpush1.bf16.xpose.msra.mxu0 0
    %970 = vmatprep.subr.bf16.mxu0 0
    %971 = vmatpush1.bf16.xpose.msra.mxu0 0
    %972 = vmatprep.subr.bf16.mxu0 0
    %973 = vmatpush1.bf16.xpose.msra.mxu0 0
    %974 = vmatprep.subr.bf16.mxu0 0
    %975 = vmatpush1.bf16.xpose.msra.mxu0 0
    %976 = vmatprep.subr.bf16.mxu0 0
    %977 = vmatpush1.bf16.xpose.msra.mxu0 0
    %978 = vmatprep.subr.bf16.mxu0 0
    %979 = vmatpush1.bf16.xpose.msra.mxu0 0
    %980 = vmatprep.subr.bf16.mxu0 0
    %981 = vmatpush1.bf16.xpose.msra.mxu0 0
    %982 = vmatprep.subr.bf16.mxu0 0
    %983 = vmatpush1.bf16.xpose.msra.mxu0 0
    %984 = vmatprep.subr.bf16.mxu0 0
    %985 = vmatpush1.bf16.xpose.msra.mxu0 0
    %986 = vmatprep.subr.bf16.mxu0 0
    %987 = vmatpush1.bf16.xpose.msra.mxu0 0
    %988 = vmatprep.mubr.bf16.mxu0 0
    %989 = vmatmul.mubr.bf16.gmra.mrb[0].mxu0 %v951
    %v990 = vpop.f32.mrb[0].mxu0
    %v991 = vadd.f32 %v312, %v990
    %v992 = vpop.f32.mrb[0].mxu0
    %v993 = vpop.f32.mrb[0].mxu0
    %v994 = vpop.f32.mrb[0].mxu0
    %995 = vdwg.mxu0
    %v996 = vrot.slane %v303, 4
    %997 = vrot.lane.b32.xlu0 %v996, 96
    %v998 = vpop.permute.xlu0 %997
    %v1000 = vsel %vm318, %v996, 0
    %v1003 = vsel %vm318, %v998, 0
    %1005 = vmatprep.subr.bf16.mxu0 0
    %1006 = vmatpush1.bf16.xpose.msra.mxu0 %v1003
    %1007 = vmatprep.subr.bf16.mxu0 0
    %1008 = vmatpush1.bf16.xpose.msra.mxu0 0
    %1009 = vmatprep.subr.bf16.mxu0 0
    %1010 = vmatpush1.bf16.xpose.msra.mxu0 0
    %1011 = vmatprep.subr.bf16.mxu0 0
    %1012 = vmatpush1.bf16.xpose.msra.mxu0 0
    %1013 = vmatprep.subr.bf16.mxu0 0
    %1014 = vmatpush1.bf16.xpose.msra.mxu0 0
    %1015 = vmatprep.subr.bf16.mxu0 0
    %1016 = vmatpush1.bf16.xpose.msra.mxu0 0
    %1017 = vmatprep.subr.bf16.mxu0 0
    %1018 = vmatpush1.bf16.xpose.msra.mxu0 0
    %1019 = vmatprep.subr.bf16.mxu0 0
    %1020 = vmatpush1.bf16.xpose.msra.mxu0 0
    %1021 = vmatprep.subr.bf16.mxu0 0
    %1022 = vmatpush1.bf16.xpose.msra.mxu0 0
    %1023 = vmatprep.subr.bf16.mxu0 0
    %1024 = vmatpush1.bf16.xpose.msra.mxu0 0
    %1025 = vmatprep.subr.bf16.mxu0 0
    %1026 = vmatpush1.bf16.xpose.msra.mxu0 0
    %1027 = vmatprep.subr.bf16.mxu0 0
    %1028 = vmatpush1.bf16.xpose.msra.mxu0 0
    %1029 = vmatprep.subr.bf16.mxu0 0
    %1030 = vmatpush1.bf16.xpose.msra.mxu0 0
    %1031 = vmatprep.subr.bf16.mxu0 0
    %1032 = vmatpush1.bf16.xpose.msra.mxu0 0
    %1033 = vmatprep.subr.bf16.mxu0 0
    %1034 = vmatpush1.bf16.xpose.msra.mxu0 0
    %1035 = vmatprep.subr.bf16.mxu0 0
    %1036 = vmatpush1.bf16.xpose.msra.mxu0 0
    %1037 = vmatprep.mubr.bf16.mxu0 0
    %1038 = vmatmul.mubr.bf16.gmra.mrb[0].mxu0 %v1000
    %v1039 = vpop.f32.mrb[0].mxu0
    %v1040 = vadd.f32 %v313, %v1039
    %v1041 = vpop.f32.mrb[0].mxu0
    %v1042 = vpop.f32.mrb[0].mxu0
    %v1043 = vpop.f32.mrb[0].mxu0
    %1044 = vdwg.mxu0
    %v1045 = vrot.slane %v305, 4
    %1046 = vrot.lane.b32.xlu0 %v1045, 96
    %v1047 = vpop.permute.xlu0 %1046
    %v1049 = vsel %vm318, %v1045, 0
    %v1052 = vsel %vm318, %v1047, 0
    %1054 = vmatprep.subr.bf16.mxu0 0
    %1055 = vmatpush1.bf16.xpose.msra.mxu0 %v1052
    %1056 = vmatprep.subr.bf16.mxu0 0
    %1057 = vmatpush1.bf16.xpose.msra.mxu0 0
    %1058 = vmatprep.subr.bf16.mxu0 0
    %1059 = vmatpush1.bf16.xpose.msra.mxu0 0
    %1060 = vmatprep.subr.bf16.mxu0 0
    %1061 = vmatpush1.bf16.xpose.msra.mxu0 0
    %1062 = vmatprep.subr.bf16.mxu0 0
    %1063 = vmatpush1.bf16.xpose.msra.mxu0 0
    %1064 = vmatprep.subr.bf16.mxu0 0
    %1065 = vmatpush1.bf16.xpose.msra.mxu0 0
    %1066 = vmatprep.subr.bf16.mxu0 0
    %1067 = vmatpush1.bf16.xpose.msra.mxu0 0
    %1068 = vmatprep.subr.bf16.mxu0 0
    %1069 = vmatpush1.bf16.xpose.msra.mxu0 0
    %1070 = vmatprep.subr.bf16.mxu0 0
    %1071 = vmatpush1.bf16.xpose.msra.mxu0 0
    %1072 = vmatprep.subr.bf16.mxu0 0
    %1073 = vmatpush1.bf16.xpose.msra.mxu0 0
    %1074 = vmatprep.subr.bf16.mxu0 0
    %1075 = vmatpush1.bf16.xpose.msra.mxu0 0
    %1076 = vmatprep.subr.bf16.mxu0 0
    %1077 = vmatpush1.bf16.xpose.msra.mxu0 0
    %1078 = vmatprep.subr.bf16.mxu0 0
    %1079 = vmatpush1.bf16.xpose.msra.mxu0 0
    %1080 = vmatprep.subr.bf16.mxu0 0
    %1081 = vmatpush1.bf16.xpose.msra.mxu0 0
    %1082 = vmatprep.subr.bf16.mxu0 0
    %1083 = vmatpush1.bf16.xpose.msra.mxu0 0
    %1084 = vmatprep.subr.bf16.mxu0 0
    %1085 = vmatpush1.bf16.xpose.msra.mxu0 0
    %1086 = vmatprep.mubr.bf16.mxu0 0
    %1087 = vmatmul.mubr.bf16.gmra.mrb[0].mxu0 %v1049
    %v1088 = vpop.f32.mrb[0].mxu0
    %v1089 = vadd.f32 %v314, %v1088
    %v1090 = vpop.f32.mrb[0].mxu0
    %v1091 = vpop.f32.mrb[0].mxu0
    %v1092 = vpop.f32.mrb[0].mxu0
    %1093 = vdwg.mxu0
    %v1094 = vrot.slane %v307, 4
    %1095 = vrot.lane.b32.xlu0 %v1094, 96
    %v1096 = vpop.permute.xlu0 %1095
    %v1098 = vsel %vm318, %v1094, 0
    %v1101 = vsel %vm318, %v1096, 0
    %1103 = vmatprep.subr.bf16.mxu0 0
    %1104 = vmatpush1.bf16.xpose.msra.mxu0 %v1101
    %1105 = vmatprep.subr.bf16.mxu0 0
    %1106 = vmatpush1.bf16.xpose.msra.mxu0 0
    %1107 = vmatprep.subr.bf16.mxu0 0
    %1108 = vmatpush1.bf16.xpose.msra.mxu0 0
    %1109 = vmatprep.subr.bf16.mxu0 0
    %1110 = vmatpush1.bf16.xpose.msra.mxu0 0
    %1111 = vmatprep.subr.bf16.mxu0 0
    %1112 = vmatpush1.bf16.xpose.msra.mxu0 0
    %1113 = vmatprep.subr.bf16.mxu0 0
    %1114 = vmatpush1.bf16.xpose.msra.mxu0 0
    %1115 = vmatprep.subr.bf16.mxu0 0
    %1116 = vmatpush1.bf16.xpose.msra.mxu0 0
    %1117 = vmatprep.subr.bf16.mxu0 0
    %1118 = vmatpush1.bf16.xpose.msra.mxu0 0
    %1119 = vmatprep.subr.bf16.mxu0 0
    %1120 = vmatpush1.bf16.xpose.msra.mxu0 0
    %1121 = vmatprep.subr.bf16.mxu0 0
    %1122 = vmatpush1.bf16.xpose.msra.mxu0 0
    %1123 = vmatprep.subr.bf16.mxu0 0
    %1124 = vmatpush1.bf16.xpose.msra.mxu0 0
    %1125 = vmatprep.subr.bf16.mxu0 0
    %1126 = vmatpush1.bf16.xpose.msra.mxu0 0
    %1127 = vmatprep.subr.bf16.mxu0 0
    %1128 = vmatpush1.bf16.xpose.msra.mxu0 0
    %1129 = vmatprep.subr.bf16.mxu0 0
    %1130 = vmatpush1.bf16.xpose.msra.mxu0 0
    %1131 = vmatprep.subr.bf16.mxu0 0
    %1132 = vmatpush1.bf16.xpose.msra.mxu0 0
    %1133 = vmatprep.subr.bf16.mxu0 0
    %1134 = vmatpush1.bf16.xpose.msra.mxu0 0
    %1135 = vmatprep.mubr.bf16.mxu0 0
    %1136 = vmatmul.mubr.bf16.gmra.mrb[0].mxu0 %v1098
    %v1137 = vpop.f32.mrb[0].mxu0
    %v1138 = vadd.f32 %v315, %v1137
    %v1139 = vpop.f32.mrb[0].mxu0
    %v1140 = vpop.f32.mrb[0].mxu0
    %v1141 = vpop.f32.mrb[0].mxu0
    %1142 = vdwg.mxu0
    %v1143 = vsel %vm318, %v991, -inf
    %1144 = vmax.xlane.f32.xlu0 %v1143
    %v1145 = vpop.xlane.xlu0 %1144
    %v1146 = vsel %vm318, %v1040, -inf
    %1147 = vmax.xlane.f32.xlu0 %v1146
    %v1148 = vpop.xlane.xlu0 %1147
    %v1149 = vsel %vm318, %v1089, -inf
    %1150 = vmax.xlane.f32.xlu0 %v1149
    %v1151 = vpop.xlane.xlu0 %1150
    %v1152 = vsel %vm318, %v1138, -inf
    %1153 = vmax.xlane.f32.xlu0 %v1152
    %v1154 = vpop.xlane.xlu0 %1153
    %v1155 = vsub.f32 %v991, %v1145
    %v1156 = vsub.f32 %v1040, %v1148
    %v1157 = vsub.f32 %v1089, %v1151
    %v1158 = vsub.f32 %v1138, %v1154
    %v1159 = vmul.f32 %v1155, 1.442695
    %v1160 = vpow.pop %v1159
    %v1161 = vmul.f32 %v1156, 1.442695
    %v1162 = vpow.pop %v1161
    %v1163 = vmul.f32 %v1157, 1.442695
    %v1164 = vpow.pop %v1163
    %v1165 = vmul.f32 %v1158, 1.442695
    %v1166 = vpow.pop %v1165
    %v1167 = vsel %vm318, %v1160, 0.0
    %1168 = vadd.xlane.f32.xlu0 %v1167
    %v1169 = vpop.xlane.xlu0 %1168
    %v1170 = vsel %vm318, %v1162, 0.0
    %1171 = vadd.xlane.f32.xlu0 %v1170
    %v1172 = vpop.xlane.xlu0 %1171
    %v1173 = vsel %vm318, %v1164, 0.0
    %1174 = vadd.xlane.f32.xlu0 %v1173
    %v1175 = vpop.xlane.xlu0 %1174
    %v1176 = vsel %vm318, %v1166, 0.0
    %1177 = vadd.xlane.f32.xlu0 %v1176
    %v1178 = vpop.xlane.xlu0 %1177
    %v1179 = vrcp.pop %v1169
    %v1180 = vrcp.pop %v1172
    %v1181 = vrcp.pop %v1175
    %v1182 = vrcp.pop %v1178
    %v1183 = vmul.f32 %v1160, %v1179
    %v1184 = vmul.f32 %v1162, %v1180
    %v1185 = vmul.f32 %v1164, %v1181
    %v1186 = vmul.f32 %v1166, %v1182
    %v1187 = vpack.c.bf16 %v1183, %v1183
    %v1188 = vpack.c.bf16 %v1184, %v1184
    %v1189 = vpack.c.bf16 %v1185, %v1185
    %v1190 = vpack.c.bf16 %v1186, %v1186
    %1191 = vrot.lane.b32.xlu0 %v947, 64
    %v1192 = vpop.permute.xlu0 %1191
    %v1194 = vsel %vm318, %v1187, 0
    %v1197 = vsel %vm562, %v1192, 0
    %1199 = vmatprep.subr.bf16.mxu0 0
    %1200 = vmatpush1.bf16.msra.mxu0 %v1197
    %1201 = vmatprep.subr.bf16.mxu0 0
    %1202 = vmatpush1.bf16.msra.mxu0 0
    %1203 = vmatprep.subr.bf16.mxu0 0
    %1204 = vmatpush1.bf16.msra.mxu0 0
    %1205 = vmatprep.subr.bf16.mxu0 0
    %1206 = vmatpush1.bf16.msra.mxu0 0
    %1207 = vmatprep.subr.bf16.mxu0 0
    %1208 = vmatpush1.bf16.msra.mxu0 0
    %1209 = vmatprep.subr.bf16.mxu0 0
    %1210 = vmatpush1.bf16.msra.mxu0 0
    %1211 = vmatprep.subr.bf16.mxu0 0
    %1212 = vmatpush1.bf16.msra.mxu0 0
    %1213 = vmatprep.subr.bf16.mxu0 0
    %1214 = vmatpush1.bf16.msra.mxu0 0
    %1215 = vmatprep.subr.bf16.mxu0 0
    %1216 = vmatpush1.bf16.msra.mxu0 0
    %1217 = vmatprep.subr.bf16.mxu0 0
    %1218 = vmatpush1.bf16.msra.mxu0 0
    %1219 = vmatprep.subr.bf16.mxu0 0
    %1220 = vmatpush1.bf16.msra.mxu0 0
    %1221 = vmatprep.subr.bf16.mxu0 0
    %1222 = vmatpush1.bf16.msra.mxu0 0
    %1223 = vmatprep.subr.bf16.mxu0 0
    %1224 = vmatpush1.bf16.msra.mxu0 0
    %1225 = vmatprep.subr.bf16.mxu0 0
    %1226 = vmatpush1.bf16.msra.mxu0 0
    %1227 = vmatprep.subr.bf16.mxu0 0
    %1228 = vmatpush1.bf16.msra.mxu0 0
    %1229 = vmatprep.subr.bf16.mxu0 0
    %1230 = vmatpush1.bf16.msra.mxu0 0
    %1231 = vmatprep.mubr.bf16.mxu0 0
    %1232 = vmatmul.mubr.bf16.gmra.mrb[0].mxu0 %v1194
    %v1233 = vpop.f32.mrb[0].mxu0
    %v1234 = vadd.f32 0.0, %v1233
    %v1235 = vpop.f32.mrb[0].mxu0
    %v1236 = vpop.f32.mrb[0].mxu0
    %v1237 = vpop.f32.mrb[0].mxu0
    %1238 = vdwg.mxu0
    %1239 = vrot.lane.b32.xlu0 %v996, 64
    %v1240 = vpop.permute.xlu0 %1239
    %v1242 = vsel %vm318, %v1188, 0
    %v1245 = vsel %vm562, %v1240, 0
    %1247 = vmatprep.subr.bf16.mxu0 0
    %1248 = vmatpush1.bf16.msra.mxu0 %v1245
    %1249 = vmatprep.subr.bf16.mxu0 0
    %1250 = vmatpush1.bf16.msra.mxu0 0
    %1251 = vmatprep.subr.bf16.mxu0 0
    %1252 = vmatpush1.bf16.msra.mxu0 0
    %1253 = vmatprep.subr.bf16.mxu0 0
    %1254 = vmatpush1.bf16.msra.mxu0 0
    %1255 = vmatprep.subr.bf16.mxu0 0
    %1256 = vmatpush1.bf16.msra.mxu0 0
    %1257 = vmatprep.subr.bf16.mxu0 0
    %1258 = vmatpush1.bf16.msra.mxu0 0
    %1259 = vmatprep.subr.bf16.mxu0 0
    %1260 = vmatpush1.bf16.msra.mxu0 0
    %1261 = vmatprep.subr.bf16.mxu0 0
    %1262 = vmatpush1.bf16.msra.mxu0 0
    %1263 = vmatprep.subr.bf16.mxu0 0
    %1264 = vmatpush1.bf16.msra.mxu0 0
    %1265 = vmatprep.subr.bf16.mxu0 0
    %1266 = vmatpush1.bf16.msra.mxu0 0
    %1267 = vmatprep.subr.bf16.mxu0 0
    %1268 = vmatpush1.bf16.msra.mxu0 0
    %1269 = vmatprep.subr.bf16.mxu0 0
    %1270 = vmatpush1.bf16.msra.mxu0 0
    %1271 = vmatprep.subr.bf16.mxu0 0
    %1272 = vmatpush1.bf16.msra.mxu0 0
    %1273 = vmatprep.subr.bf16.mxu0 0
    %1274 = vmatpush1.bf16.msra.mxu0 0
    %1275 = vmatprep.subr.bf16.mxu0 0
    %1276 = vmatpush1.bf16.msra.mxu0 0
    %1277 = vmatprep.subr.bf16.mxu0 0
    %1278 = vmatpush1.bf16.msra.mxu0 0
    %1279 = vmatprep.mubr.bf16.mxu0 0
    %1280 = vmatmul.mubr.bf16.gmra.mrb[0].mxu0 %v1242
    %v1281 = vpop.f32.mrb[0].mxu0
    %v1282 = vadd.f32 0.0, %v1281
    %v1283 = vpop.f32.mrb[0].mxu0
    %v1284 = vpop.f32.mrb[0].mxu0
    %v1285 = vpop.f32.mrb[0].mxu0
    %1286 = vdwg.mxu0
    %1287 = vrot.lane.b32.xlu0 %v1045, 64
    %v1288 = vpop.permute.xlu0 %1287
    %v1290 = vsel %vm318, %v1189, 0
    %v1293 = vsel %vm562, %v1288, 0
    %1295 = vmatprep.subr.bf16.mxu0 0
    %1296 = vmatpush1.bf16.msra.mxu0 %v1293
    %1297 = vmatprep.subr.bf16.mxu0 0
    %1298 = vmatpush1.bf16.msra.mxu0 0
    %1299 = vmatprep.subr.bf16.mxu0 0
    %1300 = vmatpush1.bf16.msra.mxu0 0
    %1301 = vmatprep.subr.bf16.mxu0 0
    %1302 = vmatpush1.bf16.msra.mxu0 0
    %1303 = vmatprep.subr.bf16.mxu0 0
    %1304 = vmatpush1.bf16.msra.mxu0 0
    %1305 = vmatprep.subr.bf16.mxu0 0
    %1306 = vmatpush1.bf16.msra.mxu0 0
    %1307 = vmatprep.subr.bf16.mxu0 0
    %1308 = vmatpush1.bf16.msra.mxu0 0
    %1309 = vmatprep.subr.bf16.mxu0 0
    %1310 = vmatpush1.bf16.msra.mxu0 0
    %1311 = vmatprep.subr.bf16.mxu0 0
    %1312 = vmatpush1.bf16.msra.mxu0 0
    %1313 = vmatprep.subr.bf16.mxu0 0
    %1314 = vmatpush1.bf16.msra.mxu0 0
    %1315 = vmatprep.subr.bf16.mxu0 0
    %1316 = vmatpush1.bf16.msra.mxu0 0
    %1317 = vmatprep.subr.bf16.mxu0 0
    %1318 = vmatpush1.bf16.msra.mxu0 0
    %1319 = vmatprep.subr.bf16.mxu0 0
    %1320 = vmatpush1.bf16.msra.mxu0 0
    %1321 = vmatprep.subr.bf16.mxu0 0
    %1322 = vmatpush1.bf16.msra.mxu0 0
    %1323 = vmatprep.subr.bf16.mxu0 0
    %1324 = vmatpush1.bf16.msra.mxu0 0
    %1325 = vmatprep.subr.bf16.mxu0 0
    %1326 = vmatpush1.bf16.msra.mxu0 0
    %1327 = vmatprep.mubr.bf16.mxu0 0
    %1328 = vmatmul.mubr.bf16.gmra.mrb[0].mxu0 %v1290
    %v1329 = vpop.f32.mrb[0].mxu0
    %v1330 = vadd.f32 0.0, %v1329
    %v1331 = vpop.f32.mrb[0].mxu0
    %v1332 = vpop.f32.mrb[0].mxu0
    %v1333 = vpop.f32.mrb[0].mxu0
    %1334 = vdwg.mxu0
    %1335 = vrot.lane.b32.xlu0 %v1094, 64
    %v1336 = vpop.permute.xlu0 %1335
    %v1338 = vsel %vm318, %v1190, 0
    %v1341 = vsel %vm562, %v1336, 0
    %1343 = vmatprep.subr.bf16.mxu0 0
    %1344 = vmatpush1.bf16.msra.mxu0 %v1341
    %1345 = vmatprep.subr.bf16.mxu0 0
    %1346 = vmatpush1.bf16.msra.mxu0 0
    %1347 = vmatprep.subr.bf16.mxu0 0
    %1348 = vmatpush1.bf16.msra.mxu0 0
    %1349 = vmatprep.subr.bf16.mxu0 0
    %1350 = vmatpush1.bf16.msra.mxu0 0
    %1351 = vmatprep.subr.bf16.mxu0 0
    %1352 = vmatpush1.bf16.msra.mxu0 0
    %1353 = vmatprep.subr.bf16.mxu0 0
    %1354 = vmatpush1.bf16.msra.mxu0 0
    %1355 = vmatprep.subr.bf16.mxu0 0
    %1356 = vmatpush1.bf16.msra.mxu0 0
    %1357 = vmatprep.subr.bf16.mxu0 0
    %1358 = vmatpush1.bf16.msra.mxu0 0
    %1359 = vmatprep.subr.bf16.mxu0 0
    %1360 = vmatpush1.bf16.msra.mxu0 0
    %1361 = vmatprep.subr.bf16.mxu0 0
    %1362 = vmatpush1.bf16.msra.mxu0 0
    %1363 = vmatprep.subr.bf16.mxu0 0
    %1364 = vmatpush1.bf16.msra.mxu0 0
    %1365 = vmatprep.subr.bf16.mxu0 0
    %1366 = vmatpush1.bf16.msra.mxu0 0
    %1367 = vmatprep.subr.bf16.mxu0 0
    %1368 = vmatpush1.bf16.msra.mxu0 0
    %1369 = vmatprep.subr.bf16.mxu0 0
    %1370 = vmatpush1.bf16.msra.mxu0 0
    %1371 = vmatprep.subr.bf16.mxu0 0
    %1372 = vmatpush1.bf16.msra.mxu0 0
    %1373 = vmatprep.subr.bf16.mxu0 0
    %1374 = vmatpush1.bf16.msra.mxu0 0
    %1375 = vmatprep.mubr.bf16.mxu0 0
    %1376 = vmatmul.mubr.bf16.gmra.mrb[0].mxu0 %v1338
    %v1377 = vpop.f32.mrb[0].mxu0
    %v1378 = vadd.f32 0.0, %v1377
    %v1379 = vpop.f32.mrb[0].mxu0
    %v1380 = vpop.f32.mrb[0].mxu0
    %v1381 = vpop.f32.mrb[0].mxu0
    %1382 = vdwg.mxu0
    %v1383 = vpack.c.bf16 %v1234, %v1234
    %v1384 = vpack.c.bf16 %v1282, %v1282
    %v1385 = vpack.c.bf16 %v1330, %v1330
    %v1386 = vpack.c.bf16 %v1378, %v1378
    %v1387 = vld [vmem:[#allocation10] sm:$0xf]
    %v1388 = vld [vmem:[%s755] sm:$0xf]
    %v1390 = vsel %vm318, %v1384, 0
    %v1393 = vsel %vm562, %v1388, 0
    %1395 = vmatprep.subr.bf16.mxu0 0
    %1396 = vmatpush1.bf16.msra.mxu0 %v1393
    %1397 = vmatprep.subr.bf16.mxu0 0
    %1398 = vmatpush1.bf16.msra.mxu0 0
    %1399 = vmatprep.subr.bf16.mxu0 0
    %1400 = vmatpush1.bf16.msra.mxu0 0
    %1401 = vmatprep.subr.bf16.mxu0 0
    %1402 = vmatpush1.bf16.msra.mxu0 0
    %1403 = vmatprep.subr.bf16.mxu0 0
    %1404 = vmatpush1.bf16.msra.mxu0 0
    %1405 = vmatprep.subr.bf16.mxu0 0
    %1406 = vmatpush1.bf16.msra.mxu0 0
    %1407 = vmatprep.subr.bf16.mxu0 0
    %1408 = vmatpush1.bf16.msra.mxu0 0
    %1409 = vmatprep.subr.bf16.mxu0 0
    %1410 = vmatpush1.bf16.msra.mxu0 0
    %1411 = vmatprep.subr.bf16.mxu0 0
    %1412 = vmatpush1.bf16.msra.mxu0 0
    %1413 = vmatprep.subr.bf16.mxu0 0
    %1414 = vmatpush1.bf16.msra.mxu0 0
    %1415 = vmatprep.subr.bf16.mxu0 0
    %1416 = vmatpush1.bf16.msra.mxu0 0
    %1417 = vmatprep.subr.bf16.mxu0 0
    %1418 = vmatpush1.bf16.msra.mxu0 0
    %1419 = vmatprep.subr.bf16.mxu0 0
    %1420 = vmatpush1.bf16.msra.mxu0 0
    %1421 = vmatprep.subr.bf16.mxu0 0
    %1422 = vmatpush1.bf16.msra.mxu0 0
    %1423 = vmatprep.subr.bf16.mxu0 0
    %1424 = vmatpush1.bf16.msra.mxu0 0
    %1425 = vmatprep.subr.bf16.mxu0 0
    %1426 = vmatpush1.bf16.msra.mxu0 0
    %1427 = vmatprep.mubr.bf16.mxu0 0
    %1428 = vmatmul.mubr.bf16.gmra.mrb[0].mxu0 %v1390
    %v1429 = vpop.f32.mrb[0].mxu0
    %v1430 = vadd.f32 0.0, %v1429
    %v1431 = vpop.f32.mrb[0].mxu0
    %v1432 = vpop.f32.mrb[0].mxu0
    %v1433 = vpop.f32.mrb[0].mxu0
    %1434 = vdwg.mxu0
    %v1436 = vsel %vm318, %v1383, 0
    %v1439 = vsel %vm562, %v1387, 0
    %1441 = vmatprep.subr.bf16.mxu0 0
    %1442 = vmatpush1.bf16.msra.mxu0 %v1439
    %1443 = vmatprep.subr.bf16.mxu0 0
    %1444 = vmatpush1.bf16.msra.mxu0 0
    %1445 = vmatprep.subr.bf16.mxu0 0
    %1446 = vmatpush1.bf16.msra.mxu0 0
    %1447 = vmatprep.subr.bf16.mxu0 0
    %1448 = vmatpush1.bf16.msra.mxu0 0
    %1449 = vmatprep.subr.bf16.mxu0 0
    %1450 = vmatpush1.bf16.msra.mxu0 0
    %1451 = vmatprep.subr.bf16.mxu0 0
    %1452 = vmatpush1.bf16.msra.mxu0 0
    %1453 = vmatprep.subr.bf16.mxu0 0
    %1454 = vmatpush1.bf16.msra.mxu0 0
    %1455 = vmatprep.subr.bf16.mxu0 0
    %1456 = vmatpush1.bf16.msra.mxu0 0
    %1457 = vmatprep.subr.bf16.mxu0 0
    %1458 = vmatpush1.bf16.msra.mxu0 0
    %1459 = vmatprep.subr.bf16.mxu0 0
    %1460 = vmatpush1.bf16.msra.mxu0 0
    %1461 = vmatprep.subr.bf16.mxu0 0
    %1462 = vmatpush1.bf16.msra.mxu0 0
    %1463 = vmatprep.subr.bf16.mxu0 0
    %1464 = vmatpush1.bf16.msra.mxu0 0
    %1465 = vmatprep.subr.bf16.mxu0 0
    %1466 = vmatpush1.bf16.msra.mxu0 0
    %1467 = vmatprep.subr.bf16.mxu0 0
    %1468 = vmatpush1.bf16.msra.mxu0 0
    %1469 = vmatprep.subr.bf16.mxu0 0
    %1470 = vmatpush1.bf16.msra.mxu0 0
    %1471 = vmatprep.subr.bf16.mxu0 0
    %1472 = vmatpush1.bf16.msra.mxu0 0
    %1473 = vmatprep.mubr.bf16.mxu0 0
    %1474 = vmatmul.mubr.bf16.gmra.mrb[0].mxu0 %v1436
    %v1475 = vpop.f32.mrb[0].mxu0
    %v1476 = vadd.f32 %v1430, %v1475
    %v1477 = vpop.f32.mrb[0].mxu0
    %v1478 = vpop.f32.mrb[0].mxu0
    %v1479 = vpop.f32.mrb[0].mxu0
    %1480 = vdwg.mxu0
    %v1481 = vld [vmem:[%s849] sm:$0xf]
    %v1483 = vsel %vm318, %v1385, 0
    %v1486 = vsel %vm562, %v1481, 0
    %1488 = vmatprep.subr.bf16.mxu0 0
    %1489 = vmatpush1.bf16.msra.mxu0 %v1486
    %1490 = vmatprep.subr.bf16.mxu0 0
    %1491 = vmatpush1.bf16.msra.mxu0 0
    %1492 = vmatprep.subr.bf16.mxu0 0
    %1493 = vmatpush1.bf16.msra.mxu0 0
    %1494 = vmatprep.subr.bf16.mxu0 0
    %1495 = vmatpush1.bf16.msra.mxu0 0
    %1496 = vmatprep.subr.bf16.mxu0 0
    %1497 = vmatpush1.bf16.msra.mxu0 0
    %1498 = vmatprep.subr.bf16.mxu0 0
    %1499 = vmatpush1.bf16.msra.mxu0 0
    %1500 = vmatprep.subr.bf16.mxu0 0
    %1501 = vmatpush1.bf16.msra.mxu0 0
    %1502 = vmatprep.subr.bf16.mxu0 0
    %1503 = vmatpush1.bf16.msra.mxu0 0
    %1504 = vmatprep.subr.bf16.mxu0 0
    %1505 = vmatpush1.bf16.msra.mxu0 0
    %1506 = vmatprep.subr.bf16.mxu0 0
    %1507 = vmatpush1.bf16.msra.mxu0 0
    %1508 = vmatprep.subr.bf16.mxu0 0
    %1509 = vmatpush1.bf16.msra.mxu0 0
    %1510 = vmatprep.subr.bf16.mxu0 0
    %1511 = vmatpush1.bf16.msra.mxu0 0
    %1512 = vmatprep.subr.bf16.mxu0 0
    %1513 = vmatpush1.bf16.msra.mxu0 0
    %1514 = vmatprep.subr.bf16.mxu0 0
    %1515 = vmatpush1.bf16.msra.mxu0 0
    %1516 = vmatprep.subr.bf16.mxu0 0
    %1517 = vmatpush1.bf16.msra.mxu0 0
    %1518 = vmatprep.subr.bf16.mxu0 0
    %1519 = vmatpush1.bf16.msra.mxu0 0
    %1520 = vmatprep.mubr.bf16.mxu0 0
    %1521 = vmatmul.mubr.bf16.gmra.mrb[0].mxu0 %v1483
    %v1522 = vpop.f32.mrb[0].mxu0
    %v1523 = vadd.f32 0.0, %v1522
    %v1524 = vpop.f32.mrb[0].mxu0
    %v1525 = vpop.f32.mrb[0].mxu0
    %v1526 = vpop.f32.mrb[0].mxu0
    %1527 = vdwg.mxu0
    %v1528 = vadd.f32 %v1476, %v1523
    %v1529 = vld [vmem:[%s898] sm:$0xf]
    %v1531 = vsel %vm318, %v1386, 0
    %v1534 = vsel %vm562, %v1529, 0
    %1536 = vmatprep.subr.bf16.mxu0 0
    %1537 = vmatpush1.bf16.msra.mxu0 %v1534
    %1538 = vmatprep.subr.bf16.mxu0 0
    %1539 = vmatpush1.bf16.msra.mxu0 0
    %1540 = vmatprep.subr.bf16.mxu0 0
    %1541 = vmatpush1.bf16.msra.mxu0 0
    %1542 = vmatprep.subr.bf16.mxu0 0
    %1543 = vmatpush1.bf16.msra.mxu0 0
    %1544 = vmatprep.subr.bf16.mxu0 0
    %1545 = vmatpush1.bf16.msra.mxu0 0
    %1546 = vmatprep.subr.bf16.mxu0 0
    %1547 = vmatpush1.bf16.msra.mxu0 0
    %1548 = vmatprep.subr.bf16.mxu0 0
    %1549 = vmatpush1.bf16.msra.mxu0 0
    %1550 = vmatprep.subr.bf16.mxu0 0
    %1551 = vmatpush1.bf16.msra.mxu0 0
    %1552 = vmatprep.subr.bf16.mxu0 0
    %1553 = vmatpush1.bf16.msra.mxu0 0
    %1554 = vmatprep.subr.bf16.mxu0 0
    %1555 = vmatpush1.bf16.msra.mxu0 0
    %1556 = vmatprep.subr.bf16.mxu0 0
    %1557 = vmatpush1.bf16.msra.mxu0 0
    %1558 = vmatprep.subr.bf16.mxu0 0
    %1559 = vmatpush1.bf16.msra.mxu0 0
    %1560 = vmatprep.subr.bf16.mxu0 0
    %1561 = vmatpush1.bf16.msra.mxu0 0
    %1562 = vmatprep.subr.bf16.mxu0 0
    %1563 = vmatpush1.bf16.msra.mxu0 0
    %1564 = vmatprep.subr.bf16.mxu0 0
    %1565 = vmatpush1.bf16.msra.mxu0 0
    %1566 = vmatprep.subr.bf16.mxu0 0
    %1567 = vmatpush1.bf16.msra.mxu0 0
    %1568 = vmatprep.mubr.bf16.mxu0 0
    %1569 = vmatmul.mubr.bf16.gmra.mrb[0].mxu0 %v1531
    %v1570 = vpop.f32.mrb[0].mxu0
    %v1571 = vadd.f32 0.0, %v1570
    %v1572 = vpop.f32.mrb[0].mxu0
    %v1573 = vpop.f32.mrb[0].mxu0
    %v1574 = vpop.f32.mrb[0].mxu0
    %1575 = vdwg.mxu0
    %v1576 = vadd.f32 %v1528, %v1571
    %v1577 = vld [vmem:[#allocation11] sm:$0x1]
    %v1579 = vlaneseq
    %v1580 = vshrl.u32 %v1579, 7
    %v1581 = vsub.s32 0, %v1580
    %v1582 = vrot.slane %v1577, %v1581
    %v1584 = vadd.f32 %v946, %v1582
    %v1585 = vadd.f32 %v1576, %v1582
    %v1586 = vadd.f32 %v225, %v1584
    %v1587 = vadd.f32 %v226, %v1585
    %v1588 = vsel %vm255, %v1586, 0.0
    %1589 = vadd.xlane.f32.xlu0 %v1588
    %v1590 = vpop.xlane.xlu0 %1589
    %v1591 = vsel %vm255, %v1587, 0.0
    %1592 = vadd.xlane.f32.xlu0 %v1591
    %v1593 = vpop.xlane.xlu0 %1592
    %v1594 = vrcp.pop 32.0
    %v1595 = vmul.f32 %v1590, %v1594
    %v1596 = vmul.f32 %v1593, %v1594
    %v1597 = vsub.f32 %v1586, %v1595
    %v1598 = vsub.f32 %v1587, %v1596
    %v1599 = vmul.f32 %v1597, %v1597
    %v1600 = vmul.f32 %v1598, %v1598
    %v1601 = vsel %vm255, %v1599, 0.0
    %1602 = vadd.xlane.f32.xlu0 %v1601
    %v1603 = vpop.xlane.xlu0 %1602
    %v1604 = vsel %vm255, %v1600, 0.0
    %1605 = vadd.xlane.f32.xlu0 %v1604
    %v1606 = vpop.xlane.xlu0 %1605
    %v1607 = vmul.f32 %v1603, %v1594
    %v1608 = vmul.f32 %v1606, %v1594
    %v1609 = vadd.f32 %v1607, 1e-05
    %v1610 = vadd.f32 %v1608, 1e-05
    %v1611 = vrsqrt.pop %v1609
    %v1612 = vrsqrt.pop %v1610
    %v1613 = vmul.f32 %v1597, %v1611
    %v1614 = vmul.f32 %v1598, %v1612
    %v1615 = vld [vmem:[#allocation13] sm:$0x1]
    %v1617 = vlaneseq
    %v1618 = vshrl.u32 %v1617, 7
    %v1619 = vsub.s32 0, %v1618
    %v1620 = vrot.slane %v1615, %v1619
    %v1622 = vmul.f32 %v1613, %v1620
    %v1623 = vmul.f32 %v1614, %v1620
    %v1624 = vld [vmem:[#allocation14] sm:$0x1]
    %v1626 = vlaneseq
    %v1627 = vshrl.u32 %v1626, 7
    %v1628 = vsub.s32 0, %v1627
    %v1629 = vrot.slane %v1624, %v1628
    %v1631 = vadd.f32 %v1622, %v1629
    %v1632 = vadd.f32 %v1623, %v1629
    %v1633 = vpack.c.bf16 %v1632, %v1631
    %v1634 = vld [vmem:[#allocation16] sm:$0xf]
    %v1635 = vld [vmem:[#allocation16 + $0x4] sm:$0xf]
    %v1636 = vld [vmem:[#allocation16 + $0x8] sm:$0xf]
    %v1637 = vld [vmem:[#allocation16 + $0xc] sm:$0xf]
    %v1638 = vld [vmem:[#allocation17] sm:$0x1]
    %v1640 = vlaneseq
    %v1641 = vshrl.u32 %v1640, 7
    %v1642 = vsub.s32 0, %v1641
    %v1643 = vrot.slane %v1638, %v1642
    %v1649 = vunpack.c.l.b16 %v1634
    %v1650 = vunpack.c.l.b16 %v1635
    %v1651 = vunpack.c.l.b16 %v1636
    %v1652 = vunpack.c.l.b16 %v1637
    %v1653 = vpack.c.b16 %v1650, %v1649
    %v1654 = vpack.c.b16 %v1652, %v1651
    %v1658 = vsel %vm255, %v1633, 0
    %1660 = vmatprep.subr.bf16.mxu0 0
    %1661 = vmatpush1.bf16.msra.mxu0 %v1653
    %1662 = vmatprep.subr.bf16.mxu0 0
    %1663 = vmatpush1.bf16.msra.mxu0 %v1654
    %1664 = vmatprep.subr.bf16.mxu0 0
    %1665 = vmatpush1.bf16.msra.mxu0 0
    %1666 = vmatprep.subr.bf16.mxu0 0
    %1667 = vmatpush1.bf16.msra.mxu0 0
    %1668 = vmatprep.subr.bf16.mxu0 0
    %1669 = vmatpush1.bf16.msra.mxu0 0
    %1670 = vmatprep.subr.bf16.mxu0 0
    %1671 = vmatpush1.bf16.msra.mxu0 0
    %1672 = vmatprep.subr.bf16.mxu0 0
    %1673 = vmatpush1.bf16.msra.mxu0 0
    %1674 = vmatprep.subr.bf16.mxu0 0
    %1675 = vmatpush1.bf16.msra.mxu0 0
    %1676 = vmatprep.subr.bf16.mxu0 0
    %1677 = vmatpush1.bf16.msra.mxu0 0
    %1678 = vmatprep.subr.bf16.mxu0 0
    %1679 = vmatpush1.bf16.msra.mxu0 0
    %1680 = vmatprep.subr.bf16.mxu0 0
    %1681 = vmatpush1.bf16.msra.mxu0 0
    %1682 = vmatprep.subr.bf16.mxu0 0
    %1683 = vmatpush1.bf16.msra.mxu0 0
    %1684 = vmatprep.subr.bf16.mxu0 0
    %1685 = vmatpush1.bf16.msra.mxu0 0
    %1686 = vmatprep.subr.bf16.mxu0 0
    %1687 = vmatpush1.bf16.msra.mxu0 0
    %1688 = vmatprep.subr.bf16.mxu0 0
    %1689 = vmatpush1.bf16.msra.mxu0 0
    %1690 = vmatprep.subr.bf16.mxu0 0
    %1691 = vmatpush1.bf16.msra.mxu0 0
    %1692 = vmatprep.mubr.bf16.mxu0 0
    %1693 = vmatmul.mubr.bf16.gmra.mrb[0].mxu0 %v1658
    %v1694 = vpop.f32.mrb[0].mxu0
    %v1695 = vadd.f32 %v1643, %v1694
    %v1696 = vpop.f32.mrb[0].mxu0
    %v1697 = vpop.f32.mrb[0].mxu0
    %v1698 = vadd.f32 %v1643, %v1697
    %v1699 = vpop.f32.mrb[0].mxu0
    %1700 = vdwg.mxu0
    %v1701 = vmax.f32 %v1695, 0.0
    %v1702 = vmax.f32 %v1698, 0.0
    %v1703 = vpack.c.bf16 %v1702, %v1701
    %v1704 = vld [vmem:[#allocation19] sm:$0xf]
    %v1705 = vld [vmem:[#allocation19 + $0x4] sm:$0xf]
    %v1706 = vld [vmem:[#allocation19 + $0x8] sm:$0xf]
    %v1707 = vld [vmem:[#allocation19 + $0xc] sm:$0xf]
    %v1708 = vld [vmem:[#allocation19 + $0x10] sm:$0xf]
    %v1709 = vld [vmem:[#allocation19 + $0x14] sm:$0xf]
    %v1710 = vld [vmem:[#allocation19 + $0x18] sm:$0xf]
    %v1711 = vld [vmem:[#allocation19 + $0x1c] sm:$0xf]
    %v1712 = vld [vmem:[#allocation20] sm:$0x1]
    %v1714 = vlaneseq
    %v1715 = vshrl.u32 %v1714, 7
    %v1716 = vsub.s32 0, %v1715
    %v1717 = vrot.slane %v1712, %v1716
    %v1727 = vunpack.c.l.b16 %v1704
    %v1728 = vunpack.c.l.b16 %v1705
    %v1729 = vunpack.c.l.b16 %v1706
    %v1730 = vunpack.c.l.b16 %v1707
    %v1731 = vunpack.c.l.b16 %v1708
    %v1732 = vunpack.c.l.b16 %v1709
    %v1733 = vunpack.c.l.b16 %v1710
    %v1734 = vunpack.c.l.b16 %v1711
    %v1735 = vpack.c.b16 %v1728, %v1727
    %v1736 = vpack.c.b16 %v1730, %v1729
    %v1737 = vpack.c.b16 %v1732, %v1731
    %v1738 = vpack.c.b16 %v1734, %v1733
    %vm1743 = vcmask 523264
    %v1745 = vsel %vm1743, %v1703, 0
    %1747 = vmatprep.subr.bf16.mxu0 0
    %1748 = vmatpush1.bf16.msra.mxu0 %v1735
    %1749 = vmatprep.subr.bf16.mxu0 0
    %1750 = vmatpush1.bf16.msra.mxu0 %v1736
    %1751 = vmatprep.subr.bf16.mxu0 0
    %1752 = vmatpush1.bf16.msra.mxu0 %v1737
    %1753 = vmatprep.subr.bf16.mxu0 0
    %1754 = vmatpush1.bf16.msra.mxu0 %v1738
    %1755 = vmatprep.subr.bf16.mxu0 0
    %1756 = vmatpush1.bf16.msra.mxu0 0
    %1757 = vmatprep.subr.bf16.mxu0 0
    %1758 = vmatpush1.bf16.msra.mxu0 0
    %1759 = vmatprep.subr.bf16.mxu0 0
    %1760 = vmatpush1.bf16.msra.mxu0 0
    %1761 = vmatprep.subr.bf16.mxu0 0
    %1762 = vmatpush1.bf16.msra.mxu0 0
    %1763 = vmatprep.subr.bf16.mxu0 0
    %1764 = vmatpush1.bf16.msra.mxu0 0
    %1765 = vmatprep.subr.bf16.mxu0 0
    %1766 = vmatpush1.bf16.msra.mxu0 0
    %1767 = vmatprep.subr.bf16.mxu0 0
    %1768 = vmatpush1.bf16.msra.mxu0 0
    %1769 = vmatprep.subr.bf16.mxu0 0
    %1770 = vmatpush1.bf16.msra.mxu0 0
    %1771 = vmatprep.subr.bf16.mxu0 0
    %1772 = vmatpush1.bf16.msra.mxu0 0
    %1773 = vmatprep.subr.bf16.mxu0 0
    %1774 = vmatpush1.bf16.msra.mxu0 0
    %1775 = vmatprep.subr.bf16.mxu0 0
    %1776 = vmatpush1.bf16.msra.mxu0 0
    %1777 = vmatprep.subr.bf16.mxu0 0
    %1778 = vmatpush1.bf16.msra.mxu0 0
    %1779 = vmatprep.mubr.bf16.mxu0 0
    %1780 = vmatmul.mubr.bf16.gmra.mrb[0].mxu0 %v1745
    %v1781 = vpop.f32.mrb[0].mxu0
    %v1782 = vadd.f32 %v1717, %v1781
    %v1783 = vpop.f32.mrb[0].mxu0
    %v1784 = vpop.f32.mrb[0].mxu0
    %v1785 = vadd.f32 %v1717, %v1784
    %v1786 = vpop.f32.mrb[0].mxu0
    %1787 = vdwg.mxu0
    %v1788 = vadd.f32 %v1631, %v1782
    %v1789 = vadd.f32 %v1632, %v1785
    %v1790 = vsel %vm255, %v1788, 0.0
    %1791 = vadd.xlane.f32.xlu0 %v1790
    %v1792 = vpop.xlane.xlu0 %1791
    %v1793 = vsel %vm255, %v1789, 0.0
    %1794 = vadd.xlane.f32.xlu0 %v1793
    %v1795 = vpop.xlane.xlu0 %1794
    %v1796 = vmul.f32 %v1792, %v1594
    %v1797 = vmul.f32 %v1795, %v1594
    %v1798 = vsub.f32 %v1788, %v1796
    %v1799 = vsub.f32 %v1789, %v1797
    %v1800 = vmul.f32 %v1798, %v1798
    %v1801 = vmul.f32 %v1799, %v1799
    %v1802 = vsel %vm255, %v1800, 0.0
    %1803 = vadd.xlane.f32.xlu0 %v1802
    %v1804 = vpop.xlane.xlu0 %1803
    %v1805 = vsel %vm255, %v1801, 0.0
    %1806 = vadd.xlane.f32.xlu0 %v1805
    %v1807 = vpop.xlane.xlu0 %1806
    %v1808 = vmul.f32 %v1804, %v1594
    %v1809 = vmul.f32 %v1807, %v1594
    %v1810 = vadd.f32 %v1808, 1e-05
    %v1811 = vadd.f32 %v1809, 1e-05
    %v1812 = vrsqrt.pop %v1810
    %v1813 = vrsqrt.pop %v1811
    %v1814 = vmul.f32 %v1798, %v1812
    %v1815 = vmul.f32 %v1799, %v1813
    %v1816 = vld [vmem:[#allocation22] sm:$0x1]
    %v1818 = vlaneseq
    %v1819 = vshrl.u32 %v1818, 7
    %v1820 = vsub.s32 0, %v1819
    %v1821 = vrot.slane %v1816, %v1820
    %v1823 = vmul.f32 %v1814, %v1821
    %v1824 = vmul.f32 %v1815, %v1821
    %v1825 = vld [vmem:[#allocation23] sm:$0x1]
    %v1827 = vlaneseq
    %v1828 = vshrl.u32 %v1827, 7
    %v1829 = vsub.s32 0, %v1828
    %v1830 = vrot.slane %v1825, %v1829
    %v1832 = vadd.f32 %v1823, %v1830
    %v1833 = vadd.f32 %v1824, %v1830
    %v1834 = vpack.c.bf16 %v1832, %v1832
    %v1835 = vpack.c.bf16 %v1833, %v1833
    %vm1836 = vcmask 257024
    %1837 = vst.msk [vmem:[#allocation25] sm:$0xf] %vm1836, %v1834
    %1838 = vst.msk [vmem:[#allocation25 + $0x4] sm:$0xf] %vm1836, %v1835
    // Predicated region
    $region114: #{tpu_custom_call.1} parent=1 // pred_check
      _
    $region115: #{tpu_custom_call.1} parent=1 // pred_check_branch
      %1840 = sbr.rel (0) target = $region117
    $region116: #{tpu_custom_call.1} parent=1 // pred_region
      %s1842 = ssub.s32 128, 128
      %1843 = vsyncadd [#allocation4], %s1842
      %s1844 = sshll.u32 [#allocation25], 4
      %s1845 = int_to_ptr.vmem [resolvable:$true] %s1844
      %1850 = dma.vmem_to_hbm [thread:$0]  %s1845, 128, %s14, [#allocation4], 64, 64, 4
    $region117: #{tpu_custom_call.1} parent=1 // pred_fallthru
      _
    // Predicated region
    $region118: #{tpu_custom_call.1} parent=1 // pred_check
      _
    $region119: #{tpu_custom_call.1} parent=1 // pred_check_branch
      %1852 = sbr.rel (0) target = $region121
    $region120: #{tpu_custom_call.1} parent=1 // pred_region
      %1853 = dma.done [#allocation4], 128
    $region121: #{tpu_custom_call.1} parent=1 // pred_fallthru
      _
    %1854 = vsyncpa [#allocation3], 1
    %1855 = vsyncpa [#allocation6], 1
    %1856 = vsyncpa [#allocation9], 1
    %1857 = vsyncpa [#allocation12], 1
    %1858 = vsyncpa [#allocation15], 1
    %1859 = vsyncpa [#allocation18], 1
    %1860 = vsyncpa [#allocation21], 1
    %1861 = vsyncpa [#allocation24], 1
    %1862 = vsyncpa [#allocation4], 1

</llo_original>
